<compile_context>
chip_gen: v7x
topology: tpu7x:2x2x1
jax: 0.10.0
libtpu: 0.0.40
codegen_flags: <defaults>
</compile_context>

<pallas_src>
import jax
import jax.numpy as jnp
from jax.experimental import pallas as pl
from jax.experimental.pallas import tpu as pltpu


def attention_kernel(hid_ref, enc_ref, mask_ref, w_hid_ref, w_enc_ref, b_ref, v_ref, out_ref):
    # hid_ref  : (Bt, dec_hid)            f32
    # enc_ref  : (S, Bt, enc2)            stream dtype (bf16 default), native [S, B, E] layout
    # mask_ref : (Bt, S)                  int32 (nonzero == keep)
    # w_hid_ref: (dec_hid, dec_hid)       stream dtype
    # w_enc_ref: (enc2, dec_hid)          stream dtype
    # b_ref    : (1, dec_hid)             f32
    # v_ref    : (1, dec_hid)             f32
    # out_ref  : (Bt, S)                  f32
    src_len, bt, enc2 = enc_ref.shape
    cdt = w_enc_ref.dtype  # streaming dtype for the MXU inputs (accumulation stays f32)

    # (1) hidden projection once per batch row (PyTorch recomputes it src_len times).
    hid_proj = jnp.dot(hid_ref[...].astype(cdt), w_hid_ref[...],
                       preferred_element_type=jnp.float32)              # (Bt, dec_hid) f32
    hid_proj = hid_proj + b_ref[...]                                     # fold in the bias

    # (2) encoder projection: one big 2-D MXU matmul over the flattened (S*Bt) rows.
    #     Bt is always a multiple of the sublane packing (or the full batch), so this
    #     flatten is a contiguous reinterpretation of the VMEM tile (no relayout copy).
    enc_flat = enc_ref[...].reshape(src_len * bt, enc2)
    enc_proj = jnp.dot(enc_flat, w_enc_ref[...],
                       preferred_element_type=jnp.float32)               # (S*Bt, dec_hid) f32
    enc_proj = enc_proj.reshape(src_len, bt, -1)

    # (3) energy = tanh(attn(cat(hidden, enc))) -- the concat is folded into split weights.
    energy = jnp.tanh(enc_proj + hid_proj[None, :, :])                   # (S, Bt, dec_hid) f32
    # TODO(synk): if dec_hid < 128, pack two batch rows per 128-lane row here to double
    # VPU/EUP lane utilization of the tanh / v-reduce stage.

    # (4) v-projection: VPU multiply + XLU lane reduce (no degenerate N=1 MXU matmul).
    score_sb = jnp.sum(energy * v_ref[...][None, :, :], axis=-1)         # (S, Bt) f32

    # (5) (S, Bt) -> (Bt, S): plain XLU transpose (vxpose) of the tiny score tile; keeps
    #     the MXU / MRF off the softmax critical path (replaces the identity-matmul trick).
    score = jnp.transpose(score_sb)                                      # (Bt, S) f32

    # (6) masked_fill(mask == 0, -1e10) and softmax over src_len, all f32.
    score = jnp.where(mask_ref[...] == 0, jnp.float32(-1e10), score)
    m = jnp.max(score, axis=-1, keepdims=True)
    e = jnp.exp(score - m)
    denom = jnp.sum(e, axis=-1, keepdims=True)
    # approx reciprocal (EUP slot): rows sum to 1 within ~2^-12 relative error.
    out_ref[...] = (e * pl.reciprocal(denom, approx=True)).astype(out_ref.dtype)


def _tpu_generation_info():
    """Return (vmem_bytes, tensorcores_per_chip) with conservative fallbacks."""
    kind = ""
    try:
        kind = jax.devices()[0].device_kind.lower()
    except Exception:
        pass
    is_v7 = "v7" in kind
    vmem = None
    try:
        vmem = int(pltpu.get_tpu_info().vmem_capacity_bytes)
    except Exception:
        vmem = None
    if vmem is None:
        vmem = (64 if is_v7 else 128) * 1024 * 1024
    cores = 2 if is_v7 else 1
    return vmem, cores


def _choose_block_batch(batch, src_len, enc2, dec_hid, enc_itemsize, vmem_bytes, cores):
    """Pick the batch tile Bt: divisor of batch, aligned to the stream dtype's sublane
    packing (or == batch), VMEM-budgeted INCLUDING the f32 intermediates, and -- only on
    multi-TensorCore chips -- preferring >= `cores` grid steps so every core gets work."""
    sublane = 16 if enc_itemsize < 4 else 8          # packed sublane rows: bf16=16, f32=8
    divisors = [d for d in range(1, batch + 1) if batch % d == 0]
    cands = [d for d in divisors if d % sublane == 0 or d == batch]

    budget = vmem_bytes // 3   # derated: leave room for Mosaic scratch + pipeline buffers

    def footprint(d):
        enc_tile = 2 * src_len * d * enc2 * enc_itemsize         # double-buffered enc stream
        interm = 2 * src_len * d * dec_hid * 4                   # f32 enc_proj + energy values
        small = 2 * d * (dec_hid + 2 * src_len) * 4              # hidden + mask + out (dbl-buf)
        weights = 2 * (dec_hid + enc2) * dec_hid * enc_itemsize  # resident w_hid / w_enc
        return enc_tile + interm + small + weights

    fitting = [d for d in cands if footprint(d) <= budget]
    if not fitting:
        # Nothing fits the derated budget: take the smallest aligned tile (minimal footprint).
        fitting = [min(cands)]
    if cores >= 2:
        multi = [d for d in fitting if batch // d >= cores]
        if multi:
            return max(multi)
        # TODO(synk): for small-batch bf16 on 2-TC parts (e.g. batch==16), pad the batch or
        # allow half-packed tiles so both TensorCores get a grid step.
    return max(fitting)


def attention_forward(hidden, encoder_outputs, mask, w_attn, b_attn, v_w, *,
                      stream_dtype=jnp.bfloat16):
    """
    hidden          : [batch, dec_hid]            float32
    encoder_outputs : [src_len, batch, enc_hid*2] float32
    mask            : [batch, src_len]            int-like (nonzero == keep)
    w_attn          : [dec_hid, dec_hid+enc2]     PyTorch Linear weight; cat order = (hidden, enc)
    b_attn          : [dec_hid]
    v_w             : [1, dec_hid]                PyTorch Linear weight, no bias
    stream_dtype    : dtype for streaming enc / weight slices through HBM + the MXU.
                      Default bf16 (perturbs pre-tanh logits at ~1e-2 relative level);
                      matmuls accumulate in f32 and mask/softmax math stays f32.
                      Pass jnp.float32 (or None) for the exact-f32 path.
    returns         : [batch, src_len]            float32 softmax over src_len
    """
    src_len, batch, enc2 = encoder_outputs.shape
    dec_hid = hidden.shape[1]
    assert w_attn.shape == (dec_hid, dec_hid + enc2)
    if stream_dtype is None:
        stream_dtype = jnp.float32

    # Lane-dense scores/output: pad src_len to a multiple of 128. Padded positions get
    # mask==0 (-> -1e10 logits) and are sliced away below.
    src_pad = ((src_len + 127) // 128) * 128
    if src_pad != src_len:
        encoder_outputs = jnp.pad(encoder_outputs,
                                  ((0, src_pad - src_len), (0, 0), (0, 0)))
        mask = jnp.pad(mask, ((0, 0), (0, src_pad - src_len)))

    # Split the concat matmul: cat order is (hidden, encoder_outputs), so the first
    # dec_hid input columns of w_attn act on hidden, the remaining enc2 act on enc.
    w_hid = jnp.transpose(w_attn[:, :dec_hid], (1, 0)).astype(stream_dtype)  # (dec_hid, dec_hid)
    w_enc = jnp.transpose(w_attn[:, dec_hid:], (1, 0)).astype(stream_dtype)  # (enc2, dec_hid)
    b_row = b_attn.reshape(1, dec_hid).astype(jnp.float32)
    v_row = v_w.reshape(1, dec_hid).astype(jnp.float32)

    # In a real model the encoder would already emit this dtype; the cast is for the demo.
    enc = encoder_outputs.astype(stream_dtype)
    mask_i = mask.astype(jnp.int32)
    hidden_f = hidden.astype(jnp.float32)

    vmem_bytes, cores = _tpu_generation_info()
    itemsize = jnp.dtype(stream_dtype).itemsize
    bt = _choose_block_batch(batch, src_pad, enc2, dec_hid, itemsize, vmem_bytes, cores)
    grid = (batch // bt,)

    enc_bytes = int(enc.size) * itemsize
    w_bytes = (int(w_hid.size) + int(w_enc.size)) * itemsize
    cost = pl.CostEstimate(
        flops=int(2 * batch * src_pad * enc2 * dec_hid
                  + 2 * batch * dec_hid * dec_hid
                  + 2 * batch * src_pad * dec_hid),
        transcendentals=int(batch * src_pad * (dec_hid + 1)),   # tanh + exp
        bytes_accessed=int(enc_bytes + w_bytes
                           + 4 * (hidden_f.size + mask_i.size + batch * src_pad)),
    )

    out = pl.pallas_call(
        attention_kernel,
        out_shape=jax.ShapeDtypeStruct((batch, src_pad), jnp.float32),
        grid_spec=pltpu.PrefetchScalarGridSpec(
            num_scalar_prefetch=0,
            grid=grid,
            in_specs=[
                pl.BlockSpec((bt, dec_hid), lambda i: (i, 0)),            # hidden
                pl.BlockSpec((src_pad, bt, enc2), lambda i: (0, i, 0)),   # enc, native layout
                pl.BlockSpec((bt, src_pad), lambda i: (i, 0)),            # mask
                pl.BlockSpec((dec_hid, dec_hid), lambda i: (0, 0)),       # w_hid (resident)
                pl.BlockSpec((enc2, dec_hid), lambda i: (0, 0)),          # w_enc (resident)
                pl.BlockSpec((1, dec_hid), lambda i: (0, 0)),             # bias
                pl.BlockSpec((1, dec_hid), lambda i: (0, 0)),             # v
            ],
            out_specs=pl.BlockSpec((bt, src_pad), lambda i: (i, 0)),
        ),
        compiler_params=pltpu.CompilerParams(
            dimension_semantics=("parallel",),                     # distinct output blocks
            vmem_limit_bytes=int(min(64 * 1024 * 1024, vmem_bytes // 2)),
        ),
        cost_estimate=cost,
    )(hidden_f, enc, mask_i, w_hid, w_enc, b_row, v_row)

    return out[:, :src_len] if src_pad != src_len else out


def attention_reference(hidden, encoder_outputs, mask, w_attn, b_attn, v_w):
    """Pure-JAX reference mirroring the PyTorch forward exactly (f32)."""
    src_len = encoder_outputs.shape[0]
    hid_rep = jnp.repeat(hidden[:, None, :], src_len, axis=1)       # [B, S, dec]
    enc = jnp.transpose(encoder_outputs, (1, 0, 2))                 # [B, S, enc2]
    cat = jnp.concatenate([hid_rep, enc], axis=2)                   # [B, S, dec+enc2]
    energy = jnp.tanh(jnp.einsum("bsc,dc->bsd", cat, w_attn) + b_attn)
    attn = jnp.einsum("bsd,od->bso", energy, v_w)[..., 0]           # [B, S]
    attn = jnp.where(mask == 0, -1e10, attn)
    attn = attn - jnp.max(attn, axis=1, keepdims=True)
    e = jnp.exp(attn)
    return e / jnp.sum(e, axis=1, keepdims=True)


if __name__ == "__main__":
    batch = 16
    src_len = 128
    enc_hid_dim = 32
    dec_hid_dim = 64
    enc2 = enc_hid_dim * 2
    concat_dim = dec_hid_dim + enc2

    key = jax.random.PRNGKey(0)
    k_hid, k_enc, k_w, k_b, k_v, k_mask = jax.random.split(key, 6)

    hidden = jax.random.normal(k_hid, (batch, dec_hid_dim), dtype=jnp.float32)
    encoder_outputs = jax.random.normal(k_enc, (src_len, batch, enc2), dtype=jnp.float32)

    # Deterministic synthetic parameters (PyTorch Linear weight layouts).
    w_attn = 0.1 * jax.random.normal(k_w, (dec_hid_dim, concat_dim), dtype=jnp.float32)
    b_attn = 0.1 * jax.random.normal(k_b, (dec_hid_dim,), dtype=jnp.float32)
    v_w = 0.1 * jax.random.normal(k_v, (1, dec_hid_dim), dtype=jnp.float32)

    # Mask with some padding positions; ensure at least one valid position per row.
    mask = (jax.random.uniform(k_mask, (batch, src_len)) > 0.25).astype(jnp.int32)
    mask = mask.at[:, 0].set(1)

    ref = attention_reference(hidden, encoder_outputs, mask, w_attn, b_attn, v_w)

    # Default path: bf16 streaming (f32 accumulation / mask / softmax).
    out = attention_forward(hidden, encoder_outputs, mask, w_attn, b_attn, v_w)
    out = jax.block_until_ready(out)
    assert out.shape == (batch, src_len)
    assert jnp.allclose(out, ref, atol=3e-2, rtol=3e-2), "bf16-stream mismatch vs reference"
    assert jnp.allclose(jnp.sum(out, axis=1), 1.0, atol=5e-3)

    # Exact-f32 streaming path.
    out_f32 = attention_forward(hidden, encoder_outputs, mask, w_attn, b_attn, v_w,
                                stream_dtype=jnp.float32)
    out_f32 = jax.block_until_ready(out_f32)
    # Tolerance slack is only for the approx-reciprocal softmax epilogue.
    assert jnp.allclose(out_f32, ref, atol=5e-3, rtol=5e-3), "f32 mismatch vs reference"
    assert jnp.allclose(jnp.sum(out_f32, axis=1), 1.0, atol=5e-3)

    print("KERNEL_OK")
</pallas_src>

<mosaic_0001>
module attributes {stable_mosaic.version = 11 : i64} {
  func.func @attention_kernel(%arg0: i32, %arg1: memref<16x64xf32, #tpu.memory_space<vmem>>, %arg2: memref<128x16x64xbf16, #tpu.memory_space<vmem>>, %arg3: memref<16x128xi32, #tpu.memory_space<vmem>>, %arg4: memref<64x64xbf16, #tpu.memory_space<vmem>>, %arg5: memref<64x64xbf16, #tpu.memory_space<vmem>>, %arg6: memref<1x64xf32, #tpu.memory_space<vmem>>, %arg7: memref<1x64xf32, #tpu.memory_space<vmem>>, %arg8: memref<16x128xf32, #tpu.memory_space<vmem>>) attributes {dimension_semantics = [#tpu.dimension_semantics<parallel>], iteration_bounds = array<i64: 1>, scalar_prefetch = 0 : i64, scratch_operands = 0 : i64, tpu.core_type = #tpu.core_type<tc>, window_params = [{transform_indices = @transform_0, window_bounds = array<i64: 16, 64>}, {transform_indices = @transform_1, window_bounds = array<i64: 128, 16, 64>}, {transform_indices = @transform_2, window_bounds = array<i64: 16, 128>}, {pipeline_mode = #tpu.pipeline_mode<synchronous>, transform_indices = @transform_3, window_bounds = array<i64: 64, 64>}, {pipeline_mode = #tpu.pipeline_mode<synchronous>, transform_indices = @transform_4, window_bounds = array<i64: 64, 64>}, {pipeline_mode = #tpu.pipeline_mode<synchronous>, transform_indices = @transform_5, window_bounds = array<i64: 1, 64>}, {pipeline_mode = #tpu.pipeline_mode<synchronous>, transform_indices = @transform_6, window_bounds = array<i64: 1, 64>}, {transform_indices = @transform_7, window_bounds = array<i64: 16, 128>}]} {
    %c0 = arith.constant 0 : index
    %c0_0 = arith.constant 0 : index
    %0 = vector.load %arg1[%c0, %c0_0] : memref<16x64xf32, #tpu.memory_space<vmem>>, vector<16x64xf32>
    %1 = arith.truncf %0 : vector<16x64xf32> to vector<16x64xbf16>
    %c0_1 = arith.constant 0 : index
    %c0_2 = arith.constant 0 : index
    %2 = vector.load %arg4[%c0_1, %c0_2] : memref<64x64xbf16, #tpu.memory_space<vmem>>, vector<64x64xbf16>
    %cst = arith.constant dense<0.000000e+00> : vector<16x64xf32>
    %3 = tpu.matmul %1, %2, %cst {dimension_numbers = #tpu.dot_dimension_numbers<[1], [0], [0], [1], [0, 0, 1, 1], [], []>} : vector<16x64xbf16>, vector<64x64xbf16>, vector<16x64xf32> -> vector<16x64xf32>
    %c0_3 = arith.constant 0 : index
    %c0_4 = arith.constant 0 : index
    %4 = vector.load %arg6[%c0_3, %c0_4] : memref<1x64xf32, #tpu.memory_space<vmem>>, vector<1x64xf32>
    %5 = vector.broadcast %4 : vector<1x64xf32> to vector<16x64xf32>
    %6 = arith.addf %3, %5 : vector<16x64xf32>
    %c0_5 = arith.constant 0 : index
    %c0_6 = arith.constant 0 : index
    %c0_7 = arith.constant 0 : index
    %7 = vector.load %arg2[%c0_5, %c0_6, %c0_7] : memref<128x16x64xbf16, #tpu.memory_space<vmem>>, vector<128x16x64xbf16>
    %8 = vector.shape_cast %7 : vector<128x16x64xbf16> to vector<2048x64xbf16>
    %c0_8 = arith.constant 0 : index
    %c0_9 = arith.constant 0 : index
    %9 = vector.load %arg5[%c0_8, %c0_9] : memref<64x64xbf16, #tpu.memory_space<vmem>>, vector<64x64xbf16>
    %cst_10 = arith.constant dense<0.000000e+00> : vector<2048x64xf32>
    %10 = tpu.matmul %8, %9, %cst_10 {dimension_numbers = #tpu.dot_dimension_numbers<[1], [0], [0], [1], [0, 0, 1, 1], [], []>} : vector<2048x64xbf16>, vector<64x64xbf16>, vector<2048x64xf32> -> vector<2048x64xf32>
    %11 = vector.shape_cast %10 : vector<2048x64xf32> to vector<128x16x64xf32>
    %12 = vector.shape_cast %6 : vector<16x64xf32> to vector<1x16x64xf32>
    %13 = vector.broadcast %12 : vector<1x16x64xf32> to vector<128x16x64xf32>
    %14 = arith.addf %11, %13 : vector<128x16x64xf32>
    %15 = math.tanh %14 : vector<128x16x64xf32>
    %c0_11 = arith.constant 0 : index
    %c0_12 = arith.constant 0 : index
    %16 = vector.load %arg7[%c0_11, %c0_12] : memref<1x64xf32, #tpu.memory_space<vmem>>, vector<1x64xf32>
    %17 = vector.shape_cast %16 : vector<1x64xf32> to vector<1x1x64xf32>
    %18 = vector.broadcast %17 : vector<1x1x64xf32> to vector<128x16x64xf32>
    %19 = arith.mulf %15, %18 : vector<128x16x64xf32>
    %cst_13 = arith.constant dense<0.000000e+00> : vector<128x16xf32>
    %20 = vector.multi_reduction <add>, %19, %cst_13 [2] : vector<128x16x64xf32> to vector<128x16xf32>
    %21 = tpu.transpose %20, [1, 0] : vector<128x16xf32> -> vector<16x128xf32>
    %c0_14 = arith.constant 0 : index
    %c0_15 = arith.constant 0 : index
    %22 = vector.load %arg3[%c0_14, %c0_15] : memref<16x128xi32, #tpu.memory_space<vmem>>, vector<16x128xi32>
    %c0_i32 = arith.constant 0 : i32
    %23 = vector.broadcast %c0_i32 : i32 to vector<16x128xi32>
    %24 = arith.cmpi eq, %22, %23 : vector<16x128xi32>
    %cst_16 = arith.constant -1.000000e+10 : f32
    %25 = vector.broadcast %cst_16 : f32 to vector<16x128xf32>
    %26 = arith.select %24, %25, %21 : vector<16x128xi1>, vector<16x128xf32>
    %cst_17 = arith.constant dense<0xFF800000> : vector<16xf32>
    %27 = vector.multi_reduction <maximumf>, %26, %cst_17 [1] : vector<16x128xf32> to vector<16xf32>
    %28 = vector.shape_cast %27 : vector<16xf32> to vector<16x1xf32>
    %29 = vector.broadcast %28 : vector<16x1xf32> to vector<16x128xf32>
    %30 = arith.subf %26, %29 : vector<16x128xf32>
    %31 = math.exp %30 : vector<16x128xf32>
    %cst_18 = arith.constant dense<0.000000e+00> : vector<16xf32>
    %32 = vector.multi_reduction <add>, %31, %cst_18 [1] : vector<16x128xf32> to vector<16xf32>
    %33 = vector.shape_cast %32 : vector<16xf32> to vector<16x1xf32>
    %34 = tpu.reciprocal %33 {approx = true} : vector<16x1xf32> -> vector<16x1xf32>
    %35 = vector.broadcast %34 : vector<16x1xf32> to vector<16x128xf32>
    %36 = arith.mulf %31, %35 : vector<16x128xf32>
    %c0_19 = arith.constant 0 : index
    %c0_20 = arith.constant 0 : index
    %37 = vector.load %arg8[%c0_19, %c0_20] : memref<16x128xf32, #tpu.memory_space<vmem>>, vector<16x128xf32>
    tpu.vector_store %arg8[%c0_19, %c0_20], %36 {strides = array<i32>} : memref<16x128xf32, #tpu.memory_space<vmem>>, vector<16x128xf32>,
    return
  }
  func.func @transform_0(%arg0: i32) -> (i32, i32) {
    %c0_i32 = arith.constant 0 : i32
    %c0_i32_0 = arith.constant 0 : i32
    return %arg0, %c0_i32 : i32, i32
  }
  func.func @transform_1(%arg0: i32) -> (i32, i32, i32) {
    %c0_i32 = arith.constant 0 : i32
    %c0_i32_0 = arith.constant 0 : i32
    %c0_i32_1 = arith.constant 0 : i32
    return %c0_i32, %arg0, %c0_i32_0 : i32, i32, i32
  }
  func.func @transform_2(%arg0: i32) -> (i32, i32) {
    %c0_i32 = arith.constant 0 : i32
    %c0_i32_0 = arith.constant 0 : i32
    return %arg0, %c0_i32 : i32, i32
  }
  func.func @transform_3(%arg0: i32) -> (i32, i32) {
    %c0_i32 = arith.constant 0 : i32
    %c0_i32_0 = arith.constant 0 : i32
    %c0_i32_1 = arith.constant 0 : i32
    return %c0_i32, %c0_i32_0 : i32, i32
  }
  func.func @transform_4(%arg0: i32) -> (i32, i32) {
    %c0_i32 = arith.constant 0 : i32
    %c0_i32_0 = arith.constant 0 : i32
    %c0_i32_1 = arith.constant 0 : i32
    return %c0_i32, %c0_i32_0 : i32, i32
  }
  func.func @transform_5(%arg0: i32) -> (i32, i32) {
    %c0_i32 = arith.constant 0 : i32
    %c0_i32_0 = arith.constant 0 : i32
    %c0_i32_1 = arith.constant 0 : i32
    return %c0_i32, %c0_i32_0 : i32, i32
  }
  func.func @transform_6(%arg0: i32) -> (i32, i32) {
    %c0_i32 = arith.constant 0 : i32
    %c0_i32_0 = arith.constant 0 : i32
    %c0_i32_1 = arith.constant 0 : i32
    return %c0_i32, %c0_i32_0 : i32, i32
  }
  func.func @transform_7(%arg0: i32) -> (i32, i32) {
    %c0_i32 = arith.constant 0 : i32
    %c0_i32_0 = arith.constant 0 : i32
    return %arg0, %c0_i32 : i32, i32
  }
}

</mosaic_0001>

<llo_original>
// kernel: tpu_custom_call.1
$region0: #{tpu_custom_call.1}
  #allocation0 [shape = 'u32[]', space=smem, size = 0x4, offset = 0x4, fixed_abs, tag = 'smem constant byte address 0x4 - core index']
  #allocation1 [shape = 'u32[144,128]{1,0:T(1,128)}', space=vmem, size = 0x12000, scoped, tag = 'internal scratch']
  %s0 = inlined_call_operand.hbm [shape: f32[16,64], index: 0, kind: input, shape index: {}]
  %s1 = inlined_call_operand.hbm [shape: bf16[128,16,64], index: 1, kind: input, shape index: {}]
  %s2 = inlined_call_operand.hbm [shape: s32[16,128], index: 2, kind: input, shape index: {}]
  %s3 = inlined_call_operand.hbm [shape: bf16[64,64], index: 3, kind: input, shape index: {}]
  %s4 = inlined_call_operand.hbm [shape: bf16[64,64], index: 4, kind: input, shape index: {}]
  %s5 = inlined_call_operand.hbm [shape: f32[1,64], index: 5, kind: input, shape index: {}]
  %s6 = inlined_call_operand.hbm [shape: f32[1,64], index: 6, kind: input, shape index: {}]
  %s7 = inlined_call_operand.hbm [shape: f32[16,128], index: 7, kind: output, shape index: {}]
  %s8 = sld [smem:[#allocation0]]
  $region66: #{tpu_custom_call.1} parent=0
    _
  %s10 = ssub.s32 1, %s8
  %s11 = scalar_select 0, %s10, %s8
  $region1: #{tpu_custom_call.1} parent=0
    #allocation2 [shape = 'u8[8192]{0}', space=vmem, size = 0x2000, scoped, tag = 'input window, operand 0, single buffered']
    #allocation3 [shape = 's32[1]{0}', space=sflag, size = 0x4, scoped, tag = 'scoped memory for tpu_custom_call.1']
    #allocation4 [shape = 's32[1]{0}', space=sflag, size = 0x4, scoped, tag = 'scoped memory for tpu_custom_call.1']
    #allocation5 [shape = 'u8[524288]{0}', space=vmem, size = 0x80000, scoped, tag = 'input window, operand 1, single buffered']
    #allocation6 [shape = 's32[1]{0}', space=sflag, size = 0x4, scoped, tag = 'scoped memory for tpu_custom_call.1']
    #allocation7 [shape = 'u8[8192]{0}', space=vmem, size = 0x2000, scoped, tag = 'input window, operand 2, single buffered']
    #allocation8 [shape = 'u8[16384]{0}', space=vmem, size = 0x4000, scoped, tag = 'input window, operand 3, single buffered']
    #allocation9 [shape = 's32[1]{0}', space=sflag, size = 0x4, scoped, tag = 'scoped memory for tpu_custom_call.1']
    #allocation10 [shape = 'u8[16384]{0}', space=vmem, size = 0x4000, scoped, tag = 'input window, operand 4, single buffered']
    #allocation11 [shape = 'u8[512]{0}', space=vmem, size = 0x400, scoped, tag = 'input window, operand 5, single buffered']
    #allocation12 [shape = 's32[1]{0}', space=sflag, size = 0x4, scoped, tag = 'scoped memory for tpu_custom_call.1']
    #allocation13 [shape = 'u8[512]{0}', space=vmem, size = 0x400, scoped, tag = 'input window, operand 6, single buffered']
    #allocation14 [shape = 'u8[8192]{0}', space=vmem, size = 0x2000, scoped, tag = 'output window, operand 0, single buffered']
    %12 = vsyncpa [#allocation3], 0
    %13 = vsyncpa [#allocation6], 0
    %14 = vsyncpa [#allocation9], 0
    %15 = vsyncpa [#allocation12], 0
    %16 = vsyncpa [#allocation4], 0
    // Predicated region
    $region2: #{tpu_custom_call.1} parent=1 // pred_check
      _
    $region3: #{tpu_custom_call.1} parent=1 // pred_check_branch
      %18 = sbr.rel (0) target = $region5
    $region4: #{tpu_custom_call.1} parent=1 // pred_region
      %s20 = ssub.s32 256, 256
      %21 = vsyncadd [#allocation3], %s20
      %s22 = sshll.u32 [#allocation2], 4
      %s23 = int_to_ptr.vmem [resolvable:$true] %s22
      %28 = dma.hbm_to_vmem [thread:$0]  %s0, 256, %s23, [#allocation3], 128, 128, 8
    $region5: #{tpu_custom_call.1} parent=1 // pred_fallthru
      _
    // Predicated region
    $region6: #{tpu_custom_call.1} parent=1 // pred_check
      _
    $region7: #{tpu_custom_call.1} parent=1 // pred_check_branch
      %30 = sbr.rel (0) target = $region9
    $region8: #{tpu_custom_call.1} parent=1 // pred_region
      %s32 = ssub.s32 16384, 16384
      %33 = vsyncadd [#allocation6], %s32
      %s34 = sshll.u32 [#allocation5], 4
      %s35 = int_to_ptr.vmem [resolvable:$true] %s34
      %40 = dma.hbm_to_vmem [thread:$0]  %s1, 16384, %s35, [#allocation6], 64, 64, 4
    $region9: #{tpu_custom_call.1} parent=1 // pred_fallthru
      _
    // Predicated region
    $region10: #{tpu_custom_call.1} parent=1 // pred_check
      _
    $region11: #{tpu_custom_call.1} parent=1 // pred_check_branch
      %42 = sbr.rel (0) target = $region13
    $region12: #{tpu_custom_call.1} parent=1 // pred_region
      %s44 = ssub.s32 256, 256
      %45 = vsyncadd [#allocation6], %s44
      %s46 = sshll.u32 [#allocation7], 4
      %s47 = int_to_ptr.vmem [resolvable:$true] %s46
      %52 = dma.hbm_to_vmem [thread:$0]  %s2, 256, %s47, [#allocation6], 128, 128, 8
    $region13: #{tpu_custom_call.1} parent=1 // pred_fallthru
      _
    // Predicated region
    $region14: #{tpu_custom_call.1} parent=1 // pred_check
      _
    $region15: #{tpu_custom_call.1} parent=1 // pred_check_branch
      %54 = sbr.rel (0) target = $region17
    $region16: #{tpu_custom_call.1} parent=1 // pred_region
      %s56 = ssub.s32 512, 512
      %57 = vsyncadd [#allocation9], %s56
      %s58 = sshll.u32 [#allocation8], 4
      %s59 = int_to_ptr.vmem [resolvable:$true] %s58
      %64 = dma.hbm_to_vmem [thread:$0]  %s3, 512, %s59, [#allocation9], 64, 64, 4
    $region17: #{tpu_custom_call.1} parent=1 // pred_fallthru
      _
    // Predicated region
    $region18: #{tpu_custom_call.1} parent=1 // pred_check
      _
    $region19: #{tpu_custom_call.1} parent=1 // pred_check_branch
      %66 = sbr.rel (0) target = $region21
    $region20: #{tpu_custom_call.1} parent=1 // pred_region
      %s68 = ssub.s32 512, 512
      %69 = vsyncadd [#allocation9], %s68
      %s70 = sshll.u32 [#allocation10], 4
      %s71 = int_to_ptr.vmem [resolvable:$true] %s70
      %76 = dma.hbm_to_vmem [thread:$0]  %s4, 512, %s71, [#allocation9], 64, 64, 4
    $region21: #{tpu_custom_call.1} parent=1 // pred_fallthru
      _
    // Predicated region
    $region22: #{tpu_custom_call.1} parent=1 // pred_check
      _
    $region23: #{tpu_custom_call.1} parent=1 // pred_check_branch
      %78 = sbr.rel (0) target = $region25
    $region24: #{tpu_custom_call.1} parent=1 // pred_region
      %s80 = ssub.s32 16, 16
      %81 = vsyncadd [#allocation12], %s80
      %s83 = sshll.u32 [#allocation11], 4
      %s84 = int_to_ptr.vmem [resolvable:$true] %s83
      %86 = dma.hbm_to_vmem [thread:$0]  %s5, 16, %s84, [#allocation12]
    $region25: #{tpu_custom_call.1} parent=1 // pred_fallthru
      _
    // Predicated region
    $region26: #{tpu_custom_call.1} parent=1 // pred_check
      _
    $region27: #{tpu_custom_call.1} parent=1 // pred_check_branch
      %88 = sbr.rel (0) target = $region29
    $region28: #{tpu_custom_call.1} parent=1 // pred_region
      %s90 = ssub.s32 16, 16
      %91 = vsyncadd [#allocation12], %s90
      %s93 = sshll.u32 [#allocation13], 4
      %s94 = int_to_ptr.vmem [resolvable:$true] %s93
      %96 = dma.hbm_to_vmem [thread:$0]  %s6, 16, %s94, [#allocation12]
    $region29: #{tpu_custom_call.1} parent=1 // pred_fallthru
      _
    // Predicated region
    $region30: #{tpu_custom_call.1} parent=1 // pred_check
      _
    $region31: #{tpu_custom_call.1} parent=1 // pred_check_branch
      %98 = sbr.rel (0) target = $region33
    $region32: #{tpu_custom_call.1} parent=1 // pred_region
      %99 = dma.done [#allocation3], 256
    $region33: #{tpu_custom_call.1} parent=1 // pred_fallthru
      _
    // Predicated region
    $region34: #{tpu_custom_call.1} parent=1 // pred_check
      _
    $region35: #{tpu_custom_call.1} parent=1 // pred_check_branch
      %101 = sbr.rel (0) target = $region37
    $region36: #{tpu_custom_call.1} parent=1 // pred_region
      %102 = dma.done [#allocation6], 16384
    $region37: #{tpu_custom_call.1} parent=1 // pred_fallthru
      _
    // Predicated region
    $region38: #{tpu_custom_call.1} parent=1 // pred_check
      _
    $region39: #{tpu_custom_call.1} parent=1 // pred_check_branch
      %104 = sbr.rel (0) target = $region41
    $region40: #{tpu_custom_call.1} parent=1 // pred_region
      %105 = dma.done [#allocation6], 256
    $region41: #{tpu_custom_call.1} parent=1 // pred_fallthru
      _
    // Predicated region
    $region42: #{tpu_custom_call.1} parent=1 // pred_check
      _
    $region43: #{tpu_custom_call.1} parent=1 // pred_check_branch
      %107 = sbr.rel (0) target = $region45
    $region44: #{tpu_custom_call.1} parent=1 // pred_region
      %108 = dma.done [#allocation9], 512
    $region45: #{tpu_custom_call.1} parent=1 // pred_fallthru
      _
    // Predicated region
    $region46: #{tpu_custom_call.1} parent=1 // pred_check
      _
    $region47: #{tpu_custom_call.1} parent=1 // pred_check_branch
      %110 = sbr.rel (0) target = $region49
    $region48: #{tpu_custom_call.1} parent=1 // pred_region
      %111 = dma.done [#allocation9], 512
    $region49: #{tpu_custom_call.1} parent=1 // pred_fallthru
      _
    // Predicated region
    $region50: #{tpu_custom_call.1} parent=1 // pred_check
      _
    $region51: #{tpu_custom_call.1} parent=1 // pred_check_branch
      %113 = sbr.rel (0) target = $region53
    $region52: #{tpu_custom_call.1} parent=1 // pred_region
      %114 = dma.done [#allocation12], 16
    $region53: #{tpu_custom_call.1} parent=1 // pred_fallthru
      _
    // Predicated region
    $region54: #{tpu_custom_call.1} parent=1 // pred_check
      _
    $region55: #{tpu_custom_call.1} parent=1 // pred_check_branch
      %116 = sbr.rel (0) target = $region57
    $region56: #{tpu_custom_call.1} parent=1 // pred_region
      %117 = dma.done [#allocation12], 16
    $region57: #{tpu_custom_call.1} parent=1 // pred_fallthru
      _
    %v119 = vld [vmem:[#allocation2] sm:$0xff]
    %v120 = vld [vmem:[#allocation2 + $0x8] sm:$0xff]
    %v121 = vpack.c.bf16 %v120, %v119
    %v122 = vld [vmem:[#allocation8] sm:$0xf]
    %v123 = vld [vmem:[#allocation8 + $0x4] sm:$0xf]
    %v124 = vld [vmem:[#allocation8 + $0x8] sm:$0xf]
    %v125 = vld [vmem:[#allocation8 + $0xc] sm:$0xf]
    %v126 = vld [vmem:[#allocation8 + $0x10] sm:$0xf]
    %v127 = vld [vmem:[#allocation8 + $0x14] sm:$0xf]
    %v128 = vld [vmem:[#allocation8 + $0x18] sm:$0xf]
    %v129 = vld [vmem:[#allocation8 + $0x1c] sm:$0xf]
    %v130 = vld [vmem:[#allocation11] sm:$0x1]
    %v132 = vlaneseq
    %v133 = vshrl.u32 %v132, 7
    %v134 = vsub.s32 0, %v133
    %v135 = vrot.slane %v130, %v134
    %v145 = vunpack.c.l.b16 %v122
    %v146 = vunpack.c.l.b16 %v123
    %v147 = vunpack.c.l.b16 %v124
    %v148 = vunpack.c.l.b16 %v125
    %v149 = vunpack.c.l.b16 %v126
    %v150 = vunpack.c.l.b16 %v127
    %v151 = vunpack.c.l.b16 %v128
    %v152 = vunpack.c.l.b16 %v129
    %v153 = vpack.c.b16 %v146, %v145
    %v154 = vpack.c.b16 %v148, %v147
    %v155 = vpack.c.b16 %v150, %v149
    %v156 = vpack.c.b16 %v152, %v151
    %vm161 = vcmask 523264
    %v163 = vsel %vm161, %v121, 0
    %165 = vmatprep.subr.bf16.mxu0 0
    %166 = vmatpush1.bf16.msra.mxu0 %v153
    %167 = vmatprep.subr.bf16.mxu0 0
    %168 = vmatpush1.bf16.msra.mxu0 %v154
    %169 = vmatprep.subr.bf16.mxu0 0
    %170 = vmatpush1.bf16.msra.mxu0 %v155
    %171 = vmatprep.subr.bf16.mxu0 0
    %172 = vmatpush1.bf16.msra.mxu0 %v156
    %173 = vmatprep.subr.bf16.mxu0 0
    %174 = vmatpush1.bf16.msra.mxu0 0
    %175 = vmatprep.subr.bf16.mxu0 0
    %176 = vmatpush1.bf16.msra.mxu0 0
    %177 = vmatprep.subr.bf16.mxu0 0
    %178 = vmatpush1.bf16.msra.mxu0 0
    %179 = vmatprep.subr.bf16.mxu0 0
    %180 = vmatpush1.bf16.msra.mxu0 0
    %181 = vmatprep.subr.bf16.mxu0 0
    %182 = vmatpush1.bf16.msra.mxu0 0
    %183 = vmatprep.subr.bf16.mxu0 0
    %184 = vmatpush1.bf16.msra.mxu0 0
    %185 = vmatprep.subr.bf16.mxu0 0
    %186 = vmatpush1.bf16.msra.mxu0 0
    %187 = vmatprep.subr.bf16.mxu0 0
    %188 = vmatpush1.bf16.msra.mxu0 0
    %189 = vmatprep.subr.bf16.mxu0 0
    %190 = vmatpush1.bf16.msra.mxu0 0
    %191 = vmatprep.subr.bf16.mxu0 0
    %192 = vmatpush1.bf16.msra.mxu0 0
    %193 = vmatprep.subr.bf16.mxu0 0
    %194 = vmatpush1.bf16.msra.mxu0 0
    %195 = vmatprep.subr.bf16.mxu0 0
    %196 = vmatpush1.bf16.msra.mxu0 0
    %197 = vmatprep.mubr.bf16.mxu0 0
    %198 = vmatmul.mubr.bf16.gmra.mrb[0].mxu0 %v163
    %v199 = vpop.f32.mrb[0].mxu0
    %v200 = vadd.f32 %v135, %v199
    %v201 = vpop.f32.mrb[0].mxu0
    %v202 = vpop.f32.mrb[0].mxu0
    %v203 = vadd.f32 %v135, %v202
    %v204 = vpop.f32.mrb[0].mxu0
    %205 = vdwg.mxu0
    %v206 = vld [vmem:[#allocation5] sm:$0xf]
    %v207 = vld [vmem:[#allocation5 + $0x4] sm:$0xf]
    %v208 = vld [vmem:[#allocation5 + $0x8] sm:$0xf]
    %v209 = vld [vmem:[#allocation5 + $0xc] sm:$0xf]
    %v210 = vld [vmem:[#allocation5 + $0x10] sm:$0xf]
    %v211 = vld [vmem:[#allocation5 + $0x14] sm:$0xf]
    %v212 = vld [vmem:[#allocation5 + $0x18] sm:$0xf]
    %v213 = vld [vmem:[#allocation5 + $0x1c] sm:$0xf]
    %v214 = vld [vmem:[#allocation5 + $0x20] sm:$0xf]
    %v215 = vld [vmem:[#allocation5 + $0x24] sm:$0xf]
    %v216 = vld [vmem:[#allocation5 + $0x28] sm:$0xf]
    %v217 = vld [vmem:[#allocation5 + $0x2c] sm:$0xf]
    %v218 = vld [vmem:[#allocation5 + $0x30] sm:$0xf]
    %v219 = vld [vmem:[#allocation5 + $0x34] sm:$0xf]
    %v220 = vld [vmem:[#allocation5 + $0x38] sm:$0xf]
    %v221 = vld [vmem:[#allocation5 + $0x3c] sm:$0xf]
    %v222 = vld [vmem:[#allocation5 + $0x40] sm:$0xf]
    %v223 = vld [vmem:[#allocation5 + $0x44] sm:$0xf]
    %v224 = vld [vmem:[#allocation5 + $0x48] sm:$0xf]
    %v225 = vld [vmem:[#allocation5 + $0x4c] sm:$0xf]
    %v226 = vld [vmem:[#allocation5 + $0x50] sm:$0xf]
    %v227 = vld [vmem:[#allocation5 + $0x54] sm:$0xf]
    %v228 = vld [vmem:[#allocation5 + $0x58] sm:$0xf]
    %v229 = vld [vmem:[#allocation5 + $0x5c] sm:$0xf]
    %v230 = vld [vmem:[#allocation5 + $0x60] sm:$0xf]
    %v231 = vld [vmem:[#allocation5 + $0x64] sm:$0xf]
    %v232 = vld [vmem:[#allocation5 + $0x68] sm:$0xf]
    %v233 = vld [vmem:[#allocation5 + $0x6c] sm:$0xf]
    %v234 = vld [vmem:[#allocation5 + $0x70] sm:$0xf]
    %v235 = vld [vmem:[#allocation5 + $0x74] sm:$0xf]
    %v236 = vld [vmem:[#allocation5 + $0x78] sm:$0xf]
    %v237 = vld [vmem:[#allocation5 + $0x7c] sm:$0xf]
    %v238 = vld [vmem:[#allocation5 + $0x80] sm:$0xf]
    %v239 = vld [vmem:[#allocation5 + $0x84] sm:$0xf]
    %v240 = vld [vmem:[#allocation5 + $0x88] sm:$0xf]
    %v241 = vld [vmem:[#allocation5 + $0x8c] sm:$0xf]
    %v242 = vld [vmem:[#allocation5 + $0x90] sm:$0xf]
    %v243 = vld [vmem:[#allocation5 + $0x94] sm:$0xf]
    %v244 = vld [vmem:[#allocation5 + $0x98] sm:$0xf]
    %v245 = vld [vmem:[#allocation5 + $0x9c] sm:$0xf]
    %v246 = vld [vmem:[#allocation5 + $0xa0] sm:$0xf]
    %v247 = vld [vmem:[#allocation5 + $0xa4] sm:$0xf]
    %v248 = vld [vmem:[#allocation5 + $0xa8] sm:$0xf]
    %v249 = vld [vmem:[#allocation5 + $0xac] sm:$0xf]
    %v250 = vld [vmem:[#allocation5 + $0xb0] sm:$0xf]
    %v251 = vld [vmem:[#allocation5 + $0xb4] sm:$0xf]
    %v252 = vld [vmem:[#allocation5 + $0xb8] sm:$0xf]
    %v253 = vld [vmem:[#allocation5 + $0xbc] sm:$0xf]
    %v254 = vld [vmem:[#allocation5 + $0xc0] sm:$0xf]
    %v255 = vld [vmem:[#allocation5 + $0xc4] sm:$0xf]
    %v256 = vld [vmem:[#allocation5 + $0xc8] sm:$0xf]
    %v257 = vld [vmem:[#allocation5 + $0xcc] sm:$0xf]
    %v258 = vld [vmem:[#allocation5 + $0xd0] sm:$0xf]
    %v259 = vld [vmem:[#allocation5 + $0xd4] sm:$0xf]
    %v260 = vld [vmem:[#allocation5 + $0xd8] sm:$0xf]
    %v261 = vld [vmem:[#allocation5 + $0xdc] sm:$0xf]
    %v262 = vld [vmem:[#allocation5 + $0xe0] sm:$0xf]
    %v263 = vld [vmem:[#allocation5 + $0xe4] sm:$0xf]
    %v264 = vld [vmem:[#allocation5 + $0xe8] sm:$0xf]
    %v265 = vld [vmem:[#allocation5 + $0xec] sm:$0xf]
    %v266 = vld [vmem:[#allocation5 + $0xf0] sm:$0xf]
    %v267 = vld [vmem:[#allocation5 + $0xf4] sm:$0xf]
    %v268 = vld [vmem:[#allocation5 + $0xf8] sm:$0xf]
    %v269 = vld [vmem:[#allocation5 + $0xfc] sm:$0xf]
    %v270 = vld [vmem:[#allocation5 + $0x100] sm:$0xf]
    %v271 = vld [vmem:[#allocation5 + $0x104] sm:$0xf]
    %v272 = vld [vmem:[#allocation5 + $0x108] sm:$0xf]
    %v273 = vld [vmem:[#allocation5 + $0x10c] sm:$0xf]
    %v274 = vld [vmem:[#allocation5 + $0x110] sm:$0xf]
    %v275 = vld [vmem:[#allocation5 + $0x114] sm:$0xf]
    %v276 = vld [vmem:[#allocation5 + $0x118] sm:$0xf]
    %v277 = vld [vmem:[#allocation5 + $0x11c] sm:$0xf]
    %v278 = vld [vmem:[#allocation5 + $0x120] sm:$0xf]
    %v279 = vld [vmem:[#allocation5 + $0x124] sm:$0xf]
    %v280 = vld [vmem:[#allocation5 + $0x128] sm:$0xf]
    %v281 = vld [vmem:[#allocation5 + $0x12c] sm:$0xf]
    %v282 = vld [vmem:[#allocation5 + $0x130] sm:$0xf]
    %v283 = vld [vmem:[#allocation5 + $0x134] sm:$0xf]
    %v284 = vld [vmem:[#allocation5 + $0x138] sm:$0xf]
    %v285 = vld [vmem:[#allocation5 + $0x13c] sm:$0xf]
    %v286 = vld [vmem:[#allocation5 + $0x140] sm:$0xf]
    %v287 = vld [vmem:[#allocation5 + $0x144] sm:$0xf]
    %v288 = vld [vmem:[#allocation5 + $0x148] sm:$0xf]
    %v289 = vld [vmem:[#allocation5 + $0x14c] sm:$0xf]
    %v290 = vld [vmem:[#allocation5 + $0x150] sm:$0xf]
    %v291 = vld [vmem:[#allocation5 + $0x154] sm:$0xf]
    %v292 = vld [vmem:[#allocation5 + $0x158] sm:$0xf]
    %v293 = vld [vmem:[#allocation5 + $0x15c] sm:$0xf]
    %v294 = vld [vmem:[#allocation5 + $0x160] sm:$0xf]
    %v295 = vld [vmem:[#allocation5 + $0x164] sm:$0xf]
    %v296 = vld [vmem:[#allocation5 + $0x168] sm:$0xf]
    %v297 = vld [vmem:[#allocation5 + $0x16c] sm:$0xf]
    %v298 = vld [vmem:[#allocation5 + $0x170] sm:$0xf]
    %v299 = vld [vmem:[#allocation5 + $0x174] sm:$0xf]
    %v300 = vld [vmem:[#allocation5 + $0x178] sm:$0xf]
    %v301 = vld [vmem:[#allocation5 + $0x17c] sm:$0xf]
    %v302 = vld [vmem:[#allocation5 + $0x180] sm:$0xf]
    %v303 = vld [vmem:[#allocation5 + $0x184] sm:$0xf]
    %v304 = vld [vmem:[#allocation5 + $0x188] sm:$0xf]
    %v305 = vld [vmem:[#allocation5 + $0x18c] sm:$0xf]
    %v306 = vld [vmem:[#allocation5 + $0x190] sm:$0xf]
    %v307 = vld [vmem:[#allocation5 + $0x194] sm:$0xf]
    %v308 = vld [vmem:[#allocation5 + $0x198] sm:$0xf]
    %v309 = vld [vmem:[#allocation5 + $0x19c] sm:$0xf]
    %v310 = vld [vmem:[#allocation5 + $0x1a0] sm:$0xf]
    %v311 = vld [vmem:[#allocation5 + $0x1a4] sm:$0xf]
    %v312 = vld [vmem:[#allocation5 + $0x1a8] sm:$0xf]
    %v313 = vld [vmem:[#allocation5 + $0x1ac] sm:$0xf]
    %v314 = vld [vmem:[#allocation5 + $0x1b0] sm:$0xf]
    %v315 = vld [vmem:[#allocation5 + $0x1b4] sm:$0xf]
    %v316 = vld [vmem:[#allocation5 + $0x1b8] sm:$0xf]
    %v317 = vld [vmem:[#allocation5 + $0x1bc] sm:$0xf]
    %v318 = vld [vmem:[#allocation5 + $0x1c0] sm:$0xf]
    %v319 = vld [vmem:[#allocation5 + $0x1c4] sm:$0xf]
    %v320 = vld [vmem:[#allocation5 + $0x1c8] sm:$0xf]
    %v321 = vld [vmem:[#allocation5 + $0x1cc] sm:$0xf]
    %v322 = vld [vmem:[#allocation5 + $0x1d0] sm:$0xf]
    %v323 = vld [vmem:[#allocation5 + $0x1d4] sm:$0xf]
    %v324 = vld [vmem:[#allocation5 + $0x1d8] sm:$0xf]
    %v325 = vld [vmem:[#allocation5 + $0x1dc] sm:$0xf]
    %v326 = vld [vmem:[#allocation5 + $0x1e0] sm:$0xf]
    %v327 = vld [vmem:[#allocation5 + $0x1e4] sm:$0xf]
    %v328 = vld [vmem:[#allocation5 + $0x1e8] sm:$0xf]
    %v329 = vld [vmem:[#allocation5 + $0x1ec] sm:$0xf]
    %v330 = vld [vmem:[#allocation5 + $0x1f0] sm:$0xf]
    %v331 = vld [vmem:[#allocation5 + $0x1f4] sm:$0xf]
    %v332 = vld [vmem:[#allocation5 + $0x1f8] sm:$0xf]
    %v333 = vld [vmem:[#allocation5 + $0x1fc] sm:$0xf]
    %v334 = vld [vmem:[#allocation5 + $0x200] sm:$0xf]
    %v335 = vld [vmem:[#allocation5 + $0x204] sm:$0xf]
    %v336 = vld [vmem:[#allocation5 + $0x208] sm:$0xf]
    %v337 = vld [vmem:[#allocation5 + $0x20c] sm:$0xf]
    %v338 = vld [vmem:[#allocation5 + $0x210] sm:$0xf]
    %v339 = vld [vmem:[#allocation5 + $0x214] sm:$0xf]
    %v340 = vld [vmem:[#allocation5 + $0x218] sm:$0xf]
    %v341 = vld [vmem:[#allocation5 + $0x21c] sm:$0xf]
    %v342 = vld [vmem:[#allocation5 + $0x220] sm:$0xf]
    %v343 = vld [vmem:[#allocation5 + $0x224] sm:$0xf]
    %v344 = vld [vmem:[#allocation5 + $0x228] sm:$0xf]
    %v345 = vld [vmem:[#allocation5 + $0x22c] sm:$0xf]
    %v346 = vld [vmem:[#allocation5 + $0x230] sm:$0xf]
    %v347 = vld [vmem:[#allocation5 + $0x234] sm:$0xf]
    %v348 = vld [vmem:[#allocation5 + $0x238] sm:$0xf]
    %v349 = vld [vmem:[#allocation5 + $0x23c] sm:$0xf]
    %v350 = vld [vmem:[#allocation5 + $0x240] sm:$0xf]
    %v351 = vld [vmem:[#allocation5 + $0x244] sm:$0xf]
    %v352 = vld [vmem:[#allocation5 + $0x248] sm:$0xf]
    %v353 = vld [vmem:[#allocation5 + $0x24c] sm:$0xf]
    %v354 = vld [vmem:[#allocation5 + $0x250] sm:$0xf]
    %v355 = vld [vmem:[#allocation5 + $0x254] sm:$0xf]
    %v356 = vld [vmem:[#allocation5 + $0x258] sm:$0xf]
    %v357 = vld [vmem:[#allocation5 + $0x25c] sm:$0xf]
    %v358 = vld [vmem:[#allocation5 + $0x260] sm:$0xf]
    %v359 = vld [vmem:[#allocation5 + $0x264] sm:$0xf]
    %v360 = vld [vmem:[#allocation5 + $0x268] sm:$0xf]
    %v361 = vld [vmem:[#allocation5 + $0x26c] sm:$0xf]
    %v362 = vld [vmem:[#allocation5 + $0x270] sm:$0xf]
    %v363 = vld [vmem:[#allocation5 + $0x274] sm:$0xf]
    %v364 = vld [vmem:[#allocation5 + $0x278] sm:$0xf]
    %v365 = vld [vmem:[#allocation5 + $0x27c] sm:$0xf]
    %v366 = vld [vmem:[#allocation5 + $0x280] sm:$0xf]
    %v367 = vld [vmem:[#allocation5 + $0x284] sm:$0xf]
    %v368 = vld [vmem:[#allocation5 + $0x288] sm:$0xf]
    %v369 = vld [vmem:[#allocation5 + $0x28c] sm:$0xf]
    %v370 = vld [vmem:[#allocation5 + $0x290] sm:$0xf]
    %v371 = vld [vmem:[#allocation5 + $0x294] sm:$0xf]
    %v372 = vld [vmem:[#allocation5 + $0x298] sm:$0xf]
    %v373 = vld [vmem:[#allocation5 + $0x29c] sm:$0xf]
    %v374 = vld [vmem:[#allocation5 + $0x2a0] sm:$0xf]
    %v375 = vld [vmem:[#allocation5 + $0x2a4] sm:$0xf]
    %v376 = vld [vmem:[#allocation5 + $0x2a8] sm:$0xf]
    %v377 = vld [vmem:[#allocation5 + $0x2ac] sm:$0xf]
    %v378 = vld [vmem:[#allocation5 + $0x2b0] sm:$0xf]
    %v379 = vld [vmem:[#allocation5 + $0x2b4] sm:$0xf]
    %v380 = vld [vmem:[#allocation5 + $0x2b8] sm:$0xf]
    %v381 = vld [vmem:[#allocation5 + $0x2bc] sm:$0xf]
    %v382 = vld [vmem:[#allocation5 + $0x2c0] sm:$0xf]
    %v383 = vld [vmem:[#allocation5 + $0x2c4] sm:$0xf]
    %v384 = vld [vmem:[#allocation5 + $0x2c8] sm:$0xf]
    %v385 = vld [vmem:[#allocation5 + $0x2cc] sm:$0xf]
    %v386 = vld [vmem:[#allocation5 + $0x2d0] sm:$0xf]
    %v387 = vld [vmem:[#allocation5 + $0x2d4] sm:$0xf]
    %v388 = vld [vmem:[#allocation5 + $0x2d8] sm:$0xf]
    %v389 = vld [vmem:[#allocation5 + $0x2dc] sm:$0xf]
    %v390 = vld [vmem:[#allocation5 + $0x2e0] sm:$0xf]
    %v391 = vld [vmem:[#allocation5 + $0x2e4] sm:$0xf]
    %v392 = vld [vmem:[#allocation5 + $0x2e8] sm:$0xf]
    %v393 = vld [vmem:[#allocation5 + $0x2ec] sm:$0xf]
    %v394 = vld [vmem:[#allocation5 + $0x2f0] sm:$0xf]
    %v395 = vld [vmem:[#allocation5 + $0x2f4] sm:$0xf]
    %v396 = vld [vmem:[#allocation5 + $0x2f8] sm:$0xf]
    %v397 = vld [vmem:[#allocation5 + $0x2fc] sm:$0xf]
    %v398 = vld [vmem:[#allocation5 + $0x300] sm:$0xf]
    %v399 = vld [vmem:[#allocation5 + $0x304] sm:$0xf]
    %v400 = vld [vmem:[#allocation5 + $0x308] sm:$0xf]
    %v401 = vld [vmem:[#allocation5 + $0x30c] sm:$0xf]
    %v402 = vld [vmem:[#allocation5 + $0x310] sm:$0xf]
    %v403 = vld [vmem:[#allocation5 + $0x314] sm:$0xf]
    %v404 = vld [vmem:[#allocation5 + $0x318] sm:$0xf]
    %v405 = vld [vmem:[#allocation5 + $0x31c] sm:$0xf]
    %v406 = vld [vmem:[#allocation5 + $0x320] sm:$0xf]
    %v407 = vld [vmem:[#allocation5 + $0x324] sm:$0xf]
    %v408 = vld [vmem:[#allocation5 + $0x328] sm:$0xf]
    %v409 = vld [vmem:[#allocation5 + $0x32c] sm:$0xf]
    %v410 = vld [vmem:[#allocation5 + $0x330] sm:$0xf]
    %v411 = vld [vmem:[#allocation5 + $0x334] sm:$0xf]
    %v412 = vld [vmem:[#allocation5 + $0x338] sm:$0xf]
    %v413 = vld [vmem:[#allocation5 + $0x33c] sm:$0xf]
    %v414 = vld [vmem:[#allocation5 + $0x340] sm:$0xf]
    %v415 = vld [vmem:[#allocation5 + $0x344] sm:$0xf]
    %v416 = vld [vmem:[#allocation5 + $0x348] sm:$0xf]
    %v417 = vld [vmem:[#allocation5 + $0x34c] sm:$0xf]
    %v418 = vld [vmem:[#allocation5 + $0x350] sm:$0xf]
    %v419 = vld [vmem:[#allocation5 + $0x354] sm:$0xf]
    %v420 = vld [vmem:[#allocation5 + $0x358] sm:$0xf]
    %v421 = vld [vmem:[#allocation5 + $0x35c] sm:$0xf]
    %v422 = vld [vmem:[#allocation5 + $0x360] sm:$0xf]
    %v423 = vld [vmem:[#allocation5 + $0x364] sm:$0xf]
    %v424 = vld [vmem:[#allocation5 + $0x368] sm:$0xf]
    %v425 = vld [vmem:[#allocation5 + $0x36c] sm:$0xf]
    %v426 = vld [vmem:[#allocation5 + $0x370] sm:$0xf]
    %v427 = vld [vmem:[#allocation5 + $0x374] sm:$0xf]
    %v428 = vld [vmem:[#allocation5 + $0x378] sm:$0xf]
    %v429 = vld [vmem:[#allocation5 + $0x37c] sm:$0xf]
    %v430 = vld [vmem:[#allocation5 + $0x380] sm:$0xf]
    %v431 = vld [vmem:[#allocation5 + $0x384] sm:$0xf]
    %v432 = vld [vmem:[#allocation5 + $0x388] sm:$0xf]
    %v433 = vld [vmem:[#allocation5 + $0x38c] sm:$0xf]
    %v434 = vld [vmem:[#allocation5 + $0x390] sm:$0xf]
    %v435 = vld [vmem:[#allocation5 + $0x394] sm:$0xf]
    %v436 = vld [vmem:[#allocation5 + $0x398] sm:$0xf]
    %v437 = vld [vmem:[#allocation5 + $0x39c] sm:$0xf]
    %v438 = vld [vmem:[#allocation5 + $0x3a0] sm:$0xf]
    %v439 = vld [vmem:[#allocation5 + $0x3a4] sm:$0xf]
    %v440 = vld [vmem:[#allocation5 + $0x3a8] sm:$0xf]
    %v441 = vld [vmem:[#allocation5 + $0x3ac] sm:$0xf]
    %v442 = vld [vmem:[#allocation5 + $0x3b0] sm:$0xf]
    %v443 = vld [vmem:[#allocation5 + $0x3b4] sm:$0xf]
    %v444 = vld [vmem:[#allocation5 + $0x3b8] sm:$0xf]
    %v445 = vld [vmem:[#allocation5 + $0x3bc] sm:$0xf]
    %v446 = vld [vmem:[#allocation5 + $0x3c0] sm:$0xf]
    %v447 = vld [vmem:[#allocation5 + $0x3c4] sm:$0xf]
    %v448 = vld [vmem:[#allocation5 + $0x3c8] sm:$0xf]
    %v449 = vld [vmem:[#allocation5 + $0x3cc] sm:$0xf]
    %v450 = vld [vmem:[#allocation5 + $0x3d0] sm:$0xf]
    %v451 = vld [vmem:[#allocation5 + $0x3d4] sm:$0xf]
    %v452 = vld [vmem:[#allocation5 + $0x3d8] sm:$0xf]
    %v453 = vld [vmem:[#allocation5 + $0x3dc] sm:$0xf]
    %v454 = vld [vmem:[#allocation5 + $0x3e0] sm:$0xf]
    %v455 = vld [vmem:[#allocation5 + $0x3e4] sm:$0xf]
    %v456 = vld [vmem:[#allocation5 + $0x3e8] sm:$0xf]
    %v457 = vld [vmem:[#allocation5 + $0x3ec] sm:$0xf]
    %v458 = vld [vmem:[#allocation5 + $0x3f0] sm:$0xf]
    %v459 = vld [vmem:[#allocation5 + $0x3f4] sm:$0xf]
    %v460 = vld [vmem:[#allocation5 + $0x3f8] sm:$0xf]
    %v461 = vld [vmem:[#allocation5 + $0x3fc] sm:$0xf]
    %v462 = vld [vmem:[#allocation10] sm:$0xf]
    %v463 = vld [vmem:[#allocation10 + $0x4] sm:$0xf]
    %v464 = vld [vmem:[#allocation10 + $0x8] sm:$0xf]
    %v465 = vld [vmem:[#allocation10 + $0xc] sm:$0xf]
    %v466 = vld [vmem:[#allocation10 + $0x10] sm:$0xf]
    %v467 = vld [vmem:[#allocation10 + $0x14] sm:$0xf]
    %v468 = vld [vmem:[#allocation10 + $0x18] sm:$0xf]
    %v469 = vld [vmem:[#allocation10 + $0x1c] sm:$0xf]
    %v726 = vunpack.c.l.b16 %v206
    %v727 = vunpack.c.l.b16 %v207
    %v728 = vunpack.c.l.b16 %v208
    %v729 = vunpack.c.l.b16 %v209
    %v730 = vunpack.c.l.b16 %v210
    %v731 = vunpack.c.l.b16 %v211
    %v732 = vunpack.c.l.b16 %v212
    %v733 = vunpack.c.l.b16 %v213
    %v734 = vunpack.c.l.b16 %v214
    %v735 = vunpack.c.l.b16 %v215
    %v736 = vunpack.c.l.b16 %v216
    %v737 = vunpack.c.l.b16 %v217
    %v738 = vunpack.c.l.b16 %v218
    %v739 = vunpack.c.l.b16 %v219
    %v740 = vunpack.c.l.b16 %v220
    %v741 = vunpack.c.l.b16 %v221
    %v742 = vunpack.c.l.b16 %v222
    %v743 = vunpack.c.l.b16 %v223
    %v744 = vunpack.c.l.b16 %v224
    %v745 = vunpack.c.l.b16 %v225
    %v746 = vunpack.c.l.b16 %v226
    %v747 = vunpack.c.l.b16 %v227
    %v748 = vunpack.c.l.b16 %v228
    %v749 = vunpack.c.l.b16 %v229
    %v750 = vunpack.c.l.b16 %v230
    %v751 = vunpack.c.l.b16 %v231
    %v752 = vunpack.c.l.b16 %v232
    %v753 = vunpack.c.l.b16 %v233
    %v754 = vunpack.c.l.b16 %v234
    %v755 = vunpack.c.l.b16 %v235
    %v756 = vunpack.c.l.b16 %v236
    %v757 = vunpack.c.l.b16 %v237
    %v758 = vunpack.c.l.b16 %v238
    %v759 = vunpack.c.l.b16 %v239
    %v760 = vunpack.c.l.b16 %v240
    %v761 = vunpack.c.l.b16 %v241
    %v762 = vunpack.c.l.b16 %v242
    %v763 = vunpack.c.l.b16 %v243
    %v764 = vunpack.c.l.b16 %v244
    %v765 = vunpack.c.l.b16 %v245
    %v766 = vunpack.c.l.b16 %v246
    %v767 = vunpack.c.l.b16 %v247
    %v768 = vunpack.c.l.b16 %v248
    %v769 = vunpack.c.l.b16 %v249
    %v770 = vunpack.c.l.b16 %v250
    %v771 = vunpack.c.l.b16 %v251
    %v772 = vunpack.c.l.b16 %v252
    %v773 = vunpack.c.l.b16 %v253
    %v774 = vunpack.c.l.b16 %v254
    %v775 = vunpack.c.l.b16 %v255
    %v776 = vunpack.c.l.b16 %v256
    %v777 = vunpack.c.l.b16 %v257
    %v778 = vunpack.c.l.b16 %v258
    %v779 = vunpack.c.l.b16 %v259
    %v780 = vunpack.c.l.b16 %v260
    %v781 = vunpack.c.l.b16 %v261
    %v782 = vunpack.c.l.b16 %v262
    %v783 = vunpack.c.l.b16 %v263
    %v784 = vunpack.c.l.b16 %v264
    %v785 = vunpack.c.l.b16 %v265
    %v786 = vunpack.c.l.b16 %v266
    %v787 = vunpack.c.l.b16 %v267
    %v788 = vunpack.c.l.b16 %v268
    %v789 = vunpack.c.l.b16 %v269
    %v790 = vunpack.c.l.b16 %v270
    %v791 = vunpack.c.l.b16 %v271
    %v792 = vunpack.c.l.b16 %v272
    %v793 = vunpack.c.l.b16 %v273
    %v794 = vunpack.c.l.b16 %v274
    %v795 = vunpack.c.l.b16 %v275
    %v796 = vunpack.c.l.b16 %v276
    %v797 = vunpack.c.l.b16 %v277
    %v798 = vunpack.c.l.b16 %v278
    %v799 = vunpack.c.l.b16 %v279
    %v800 = vunpack.c.l.b16 %v280
    %v801 = vunpack.c.l.b16 %v281
    %v802 = vunpack.c.l.b16 %v282
    %v803 = vunpack.c.l.b16 %v283
    %v804 = vunpack.c.l.b16 %v284
    %v805 = vunpack.c.l.b16 %v285
    %v806 = vunpack.c.l.b16 %v286
    %v807 = vunpack.c.l.b16 %v287
    %v808 = vunpack.c.l.b16 %v288
    %v809 = vunpack.c.l.b16 %v289
    %v810 = vunpack.c.l.b16 %v290
    %v811 = vunpack.c.l.b16 %v291
    %v812 = vunpack.c.l.b16 %v292
    %v813 = vunpack.c.l.b16 %v293
    %v814 = vunpack.c.l.b16 %v294
    %v815 = vunpack.c.l.b16 %v295
    %v816 = vunpack.c.l.b16 %v296
    %v817 = vunpack.c.l.b16 %v297
    %v818 = vunpack.c.l.b16 %v298
    %v819 = vunpack.c.l.b16 %v299
    %v820 = vunpack.c.l.b16 %v300
    %v821 = vunpack.c.l.b16 %v301
    %v822 = vunpack.c.l.b16 %v302
    %v823 = vunpack.c.l.b16 %v303
    %v824 = vunpack.c.l.b16 %v304
    %v825 = vunpack.c.l.b16 %v305
    %v826 = vunpack.c.l.b16 %v306
    %v827 = vunpack.c.l.b16 %v307
    %v828 = vunpack.c.l.b16 %v308
    %v829 = vunpack.c.l.b16 %v309
    %v830 = vunpack.c.l.b16 %v310
    %v831 = vunpack.c.l.b16 %v311
    %v832 = vunpack.c.l.b16 %v312
    %v833 = vunpack.c.l.b16 %v313
    %v834 = vunpack.c.l.b16 %v314
    %v835 = vunpack.c.l.b16 %v315
    %v836 = vunpack.c.l.b16 %v316
    %v837 = vunpack.c.l.b16 %v317
    %v838 = vunpack.c.l.b16 %v318
    %v839 = vunpack.c.l.b16 %v319
    %v840 = vunpack.c.l.b16 %v320
    %v841 = vunpack.c.l.b16 %v321
    %v842 = vunpack.c.l.b16 %v322
    %v843 = vunpack.c.l.b16 %v323
    %v844 = vunpack.c.l.b16 %v324
    %v845 = vunpack.c.l.b16 %v325
    %v846 = vunpack.c.l.b16 %v326
    %v847 = vunpack.c.l.b16 %v327
    %v848 = vunpack.c.l.b16 %v328
    %v849 = vunpack.c.l.b16 %v329
    %v850 = vunpack.c.l.b16 %v330
    %v851 = vunpack.c.l.b16 %v331
    %v852 = vunpack.c.l.b16 %v332
    %v853 = vunpack.c.l.b16 %v333
    %v854 = vunpack.c.l.b16 %v334
    %v855 = vunpack.c.l.b16 %v335
    %v856 = vunpack.c.l.b16 %v336
    %v857 = vunpack.c.l.b16 %v337
    %v858 = vunpack.c.l.b16 %v338
    %v859 = vunpack.c.l.b16 %v339
    %v860 = vunpack.c.l.b16 %v340
    %v861 = vunpack.c.l.b16 %v341
    %v862 = vunpack.c.l.b16 %v342
    %v863 = vunpack.c.l.b16 %v343
    %v864 = vunpack.c.l.b16 %v344
    %v865 = vunpack.c.l.b16 %v345
    %v866 = vunpack.c.l.b16 %v346
    %v867 = vunpack.c.l.b16 %v347
    %v868 = vunpack.c.l.b16 %v348
    %v869 = vunpack.c.l.b16 %v349
    %v870 = vunpack.c.l.b16 %v350
    %v871 = vunpack.c.l.b16 %v351
    %v872 = vunpack.c.l.b16 %v352
    %v873 = vunpack.c.l.b16 %v353
    %v874 = vunpack.c.l.b16 %v354
    %v875 = vunpack.c.l.b16 %v355
    %v876 = vunpack.c.l.b16 %v356
    %v877 = vunpack.c.l.b16 %v357
    %v878 = vunpack.c.l.b16 %v358
    %v879 = vunpack.c.l.b16 %v359
    %v880 = vunpack.c.l.b16 %v360
    %v881 = vunpack.c.l.b16 %v361
    %v882 = vunpack.c.l.b16 %v362
    %v883 = vunpack.c.l.b16 %v363
    %v884 = vunpack.c.l.b16 %v364
    %v885 = vunpack.c.l.b16 %v365
    %v886 = vunpack.c.l.b16 %v366
    %v887 = vunpack.c.l.b16 %v367
    %v888 = vunpack.c.l.b16 %v368
    %v889 = vunpack.c.l.b16 %v369
    %v890 = vunpack.c.l.b16 %v370
    %v891 = vunpack.c.l.b16 %v371
    %v892 = vunpack.c.l.b16 %v372
    %v893 = vunpack.c.l.b16 %v373
    %v894 = vunpack.c.l.b16 %v374
    %v895 = vunpack.c.l.b16 %v375
    %v896 = vunpack.c.l.b16 %v376
    %v897 = vunpack.c.l.b16 %v377
    %v898 = vunpack.c.l.b16 %v378
    %v899 = vunpack.c.l.b16 %v379
    %v900 = vunpack.c.l.b16 %v380
    %v901 = vunpack.c.l.b16 %v381
    %v902 = vunpack.c.l.b16 %v382
    %v903 = vunpack.c.l.b16 %v383
    %v904 = vunpack.c.l.b16 %v384
    %v905 = vunpack.c.l.b16 %v385
    %v906 = vunpack.c.l.b16 %v386
    %v907 = vunpack.c.l.b16 %v387
    %v908 = vunpack.c.l.b16 %v388
    %v909 = vunpack.c.l.b16 %v389
    %v910 = vunpack.c.l.b16 %v390
    %v911 = vunpack.c.l.b16 %v391
    %v912 = vunpack.c.l.b16 %v392
    %v913 = vunpack.c.l.b16 %v393
    %v914 = vunpack.c.l.b16 %v394
    %v915 = vunpack.c.l.b16 %v395
    %v916 = vunpack.c.l.b16 %v396
    %v917 = vunpack.c.l.b16 %v397
    %v918 = vunpack.c.l.b16 %v398
    %v919 = vunpack.c.l.b16 %v399
    %v920 = vunpack.c.l.b16 %v400
    %v921 = vunpack.c.l.b16 %v401
    %v922 = vunpack.c.l.b16 %v402
    %v923 = vunpack.c.l.b16 %v403
    %v924 = vunpack.c.l.b16 %v404
    %v925 = vunpack.c.l.b16 %v405
    %v926 = vunpack.c.l.b16 %v406
    %v927 = vunpack.c.l.b16 %v407
    %v928 = vunpack.c.l.b16 %v408
    %v929 = vunpack.c.l.b16 %v409
    %v930 = vunpack.c.l.b16 %v410
    %v931 = vunpack.c.l.b16 %v411
    %v932 = vunpack.c.l.b16 %v412
    %v933 = vunpack.c.l.b16 %v413
    %v934 = vunpack.c.l.b16 %v414
    %v935 = vunpack.c.l.b16 %v415
    %v936 = vunpack.c.l.b16 %v416
    %v937 = vunpack.c.l.b16 %v417
    %v938 = vunpack.c.l.b16 %v418
    %v939 = vunpack.c.l.b16 %v419
    %v940 = vunpack.c.l.b16 %v420
    %v941 = vunpack.c.l.b16 %v421
    %v942 = vunpack.c.l.b16 %v422
    %v943 = vunpack.c.l.b16 %v423
    %v944 = vunpack.c.l.b16 %v424
    %v945 = vunpack.c.l.b16 %v425
    %v946 = vunpack.c.l.b16 %v426
    %v947 = vunpack.c.l.b16 %v427
    %v948 = vunpack.c.l.b16 %v428
    %v949 = vunpack.c.l.b16 %v429
    %v950 = vunpack.c.l.b16 %v430
    %v951 = vunpack.c.l.b16 %v431
    %v952 = vunpack.c.l.b16 %v432
    %v953 = vunpack.c.l.b16 %v433
    %v954 = vunpack.c.l.b16 %v434
    %v955 = vunpack.c.l.b16 %v435
    %v956 = vunpack.c.l.b16 %v436
    %v957 = vunpack.c.l.b16 %v437
    %v958 = vunpack.c.l.b16 %v438
    %v959 = vunpack.c.l.b16 %v439
    %v960 = vunpack.c.l.b16 %v440
    %v961 = vunpack.c.l.b16 %v441
    %v962 = vunpack.c.l.b16 %v442
    %v963 = vunpack.c.l.b16 %v443
    %v964 = vunpack.c.l.b16 %v444
    %v965 = vunpack.c.l.b16 %v445
    %v966 = vunpack.c.l.b16 %v446
    %v967 = vunpack.c.l.b16 %v447
    %v968 = vunpack.c.l.b16 %v448
    %v969 = vunpack.c.l.b16 %v449
    %v970 = vunpack.c.l.b16 %v450
    %v971 = vunpack.c.l.b16 %v451
    %v972 = vunpack.c.l.b16 %v452
    %v973 = vunpack.c.l.b16 %v453
    %v974 = vunpack.c.l.b16 %v454
    %v975 = vunpack.c.l.b16 %v455
    %v976 = vunpack.c.l.b16 %v456
    %v977 = vunpack.c.l.b16 %v457
    %v978 = vunpack.c.l.b16 %v458
    %v979 = vunpack.c.l.b16 %v459
    %v980 = vunpack.c.l.b16 %v460
    %v981 = vunpack.c.l.b16 %v461
    %v982 = vpack.c.b16 %v727, %v726
    %v983 = vpack.c.b16 %v729, %v728
    %v984 = vpack.c.b16 %v731, %v730
    %v985 = vpack.c.b16 %v733, %v732
    %v986 = vpack.c.b16 %v735, %v734
    %v987 = vpack.c.b16 %v737, %v736
    %v988 = vpack.c.b16 %v739, %v738
    %v989 = vpack.c.b16 %v741, %v740
    %v990 = vpack.c.b16 %v743, %v742
    %v991 = vpack.c.b16 %v745, %v744
    %v992 = vpack.c.b16 %v747, %v746
    %v993 = vpack.c.b16 %v749, %v748
    %v994 = vpack.c.b16 %v751, %v750
    %v995 = vpack.c.b16 %v753, %v752
    %v996 = vpack.c.b16 %v755, %v754
    %v997 = vpack.c.b16 %v757, %v756
    %v998 = vpack.c.b16 %v759, %v758
    %v999 = vpack.c.b16 %v761, %v760
    %v1000 = vpack.c.b16 %v763, %v762
    %v1001 = vpack.c.b16 %v765, %v764
    %v1002 = vpack.c.b16 %v767, %v766
    %v1003 = vpack.c.b16 %v769, %v768
    %v1004 = vpack.c.b16 %v771, %v770
    %v1005 = vpack.c.b16 %v773, %v772
    %v1006 = vpack.c.b16 %v775, %v774
    %v1007 = vpack.c.b16 %v777, %v776
    %v1008 = vpack.c.b16 %v779, %v778
    %v1009 = vpack.c.b16 %v781, %v780
    %v1010 = vpack.c.b16 %v783, %v782
    %v1011 = vpack.c.b16 %v785, %v784
    %v1012 = vpack.c.b16 %v787, %v786
    %v1013 = vpack.c.b16 %v789, %v788
    %v1014 = vpack.c.b16 %v791, %v790
    %v1015 = vpack.c.b16 %v793, %v792
    %v1016 = vpack.c.b16 %v795, %v794
    %v1017 = vpack.c.b16 %v797, %v796
    %v1018 = vpack.c.b16 %v799, %v798
    %v1019 = vpack.c.b16 %v801, %v800
    %v1020 = vpack.c.b16 %v803, %v802
    %v1021 = vpack.c.b16 %v805, %v804
    %v1022 = vpack.c.b16 %v807, %v806
    %v1023 = vpack.c.b16 %v809, %v808
    %v1024 = vpack.c.b16 %v811, %v810
    %v1025 = vpack.c.b16 %v813, %v812
    %v1026 = vpack.c.b16 %v815, %v814
    %v1027 = vpack.c.b16 %v817, %v816
    %v1028 = vpack.c.b16 %v819, %v818
    %v1029 = vpack.c.b16 %v821, %v820
    %v1030 = vpack.c.b16 %v823, %v822
    %v1031 = vpack.c.b16 %v825, %v824
    %v1032 = vpack.c.b16 %v827, %v826
    %v1033 = vpack.c.b16 %v829, %v828
    %v1034 = vpack.c.b16 %v831, %v830
    %v1035 = vpack.c.b16 %v833, %v832
    %v1036 = vpack.c.b16 %v835, %v834
    %v1037 = vpack.c.b16 %v837, %v836
    %v1038 = vpack.c.b16 %v839, %v838
    %v1039 = vpack.c.b16 %v841, %v840
    %v1040 = vpack.c.b16 %v843, %v842
    %v1041 = vpack.c.b16 %v845, %v844
    %v1042 = vpack.c.b16 %v847, %v846
    %v1043 = vpack.c.b16 %v849, %v848
    %v1044 = vpack.c.b16 %v851, %v850
    %v1045 = vpack.c.b16 %v853, %v852
    %v1046 = vpack.c.b16 %v855, %v854
    %v1047 = vpack.c.b16 %v857, %v856
    %v1048 = vpack.c.b16 %v859, %v858
    %v1049 = vpack.c.b16 %v861, %v860
    %v1050 = vpack.c.b16 %v863, %v862
    %v1051 = vpack.c.b16 %v865, %v864
    %v1052 = vpack.c.b16 %v867, %v866
    %v1053 = vpack.c.b16 %v869, %v868
    %v1054 = vpack.c.b16 %v871, %v870
    %v1055 = vpack.c.b16 %v873, %v872
    %v1056 = vpack.c.b16 %v875, %v874
    %v1057 = vpack.c.b16 %v877, %v876
    %v1058 = vpack.c.b16 %v879, %v878
    %v1059 = vpack.c.b16 %v881, %v880
    %v1060 = vpack.c.b16 %v883, %v882
    %v1061 = vpack.c.b16 %v885, %v884
    %v1062 = vpack.c.b16 %v887, %v886
    %v1063 = vpack.c.b16 %v889, %v888
    %v1064 = vpack.c.b16 %v891, %v890
    %v1065 = vpack.c.b16 %v893, %v892
    %v1066 = vpack.c.b16 %v895, %v894
    %v1067 = vpack.c.b16 %v897, %v896
    %v1068 = vpack.c.b16 %v899, %v898
    %v1069 = vpack.c.b16 %v901, %v900
    %v1070 = vpack.c.b16 %v903, %v902
    %v1071 = vpack.c.b16 %v905, %v904
    %v1072 = vpack.c.b16 %v907, %v906
    %v1073 = vpack.c.b16 %v909, %v908
    %v1074 = vpack.c.b16 %v911, %v910
    %v1075 = vpack.c.b16 %v913, %v912
    %v1076 = vpack.c.b16 %v915, %v914
    %v1077 = vpack.c.b16 %v917, %v916
    %v1078 = vpack.c.b16 %v919, %v918
    %v1079 = vpack.c.b16 %v921, %v920
    %v1080 = vpack.c.b16 %v923, %v922
    %v1081 = vpack.c.b16 %v925, %v924
    %v1082 = vpack.c.b16 %v927, %v926
    %v1083 = vpack.c.b16 %v929, %v928
    %v1084 = vpack.c.b16 %v931, %v930
    %v1085 = vpack.c.b16 %v933, %v932
    %v1086 = vpack.c.b16 %v935, %v934
    %v1087 = vpack.c.b16 %v937, %v936
    %v1088 = vpack.c.b16 %v939, %v938
    %v1089 = vpack.c.b16 %v941, %v940
    %v1090 = vpack.c.b16 %v943, %v942
    %v1091 = vpack.c.b16 %v945, %v944
    %v1092 = vpack.c.b16 %v947, %v946
    %v1093 = vpack.c.b16 %v949, %v948
    %v1094 = vpack.c.b16 %v951, %v950
    %v1095 = vpack.c.b16 %v953, %v952
    %v1096 = vpack.c.b16 %v955, %v954
    %v1097 = vpack.c.b16 %v957, %v956
    %v1098 = vpack.c.b16 %v959, %v958
    %v1099 = vpack.c.b16 %v961, %v960
    %v1100 = vpack.c.b16 %v963, %v962
    %v1101 = vpack.c.b16 %v965, %v964
    %v1102 = vpack.c.b16 %v967, %v966
    %v1103 = vpack.c.b16 %v969, %v968
    %v1104 = vpack.c.b16 %v971, %v970
    %v1105 = vpack.c.b16 %v973, %v972
    %v1106 = vpack.c.b16 %v975, %v974
    %v1107 = vpack.c.b16 %v977, %v976
    %v1108 = vpack.c.b16 %v979, %v978
    %v1109 = vpack.c.b16 %v981, %v980
    %v1118 = vunpack.c.l.b16 %v462
    %v1119 = vunpack.c.l.b16 %v463
    %v1120 = vunpack.c.l.b16 %v464
    %v1121 = vunpack.c.l.b16 %v465
    %v1122 = vunpack.c.l.b16 %v466
    %v1123 = vunpack.c.l.b16 %v467
    %v1124 = vunpack.c.l.b16 %v468
    %v1125 = vunpack.c.l.b16 %v469
    %v1126 = vpack.c.b16 %v1119, %v1118
    %v1127 = vpack.c.b16 %v1121, %v1120
    %v1128 = vpack.c.b16 %v1123, %v1122
    %v1129 = vpack.c.b16 %v1125, %v1124
    %v1135 = vsel %vm161, %v982, 0
    %v1138 = vsel %vm161, %v983, 0
    %v1141 = vsel %vm161, %v984, 0
    %v1144 = vsel %vm161, %v985, 0
    %v1147 = vsel %vm161, %v986, 0
    %v1150 = vsel %vm161, %v987, 0
    %v1153 = vsel %vm161, %v988, 0
    %v1156 = vsel %vm161, %v989, 0
    %v1159 = vsel %vm161, %v990, 0
    %v1162 = vsel %vm161, %v991, 0
    %v1165 = vsel %vm161, %v992, 0
    %v1168 = vsel %vm161, %v993, 0
    %v1171 = vsel %vm161, %v994, 0
    %v1174 = vsel %vm161, %v995, 0
    %v1177 = vsel %vm161, %v996, 0
    %v1180 = vsel %vm161, %v997, 0
    %v1183 = vsel %vm161, %v998, 0
    %v1186 = vsel %vm161, %v999, 0
    %v1189 = vsel %vm161, %v1000, 0
    %v1192 = vsel %vm161, %v1001, 0
    %v1195 = vsel %vm161, %v1002, 0
    %v1198 = vsel %vm161, %v1003, 0
    %v1201 = vsel %vm161, %v1004, 0
    %v1204 = vsel %vm161, %v1005, 0
    %v1207 = vsel %vm161, %v1006, 0
    %v1210 = vsel %vm161, %v1007, 0
    %v1213 = vsel %vm161, %v1008, 0
    %v1216 = vsel %vm161, %v1009, 0
    %v1219 = vsel %vm161, %v1010, 0
    %v1222 = vsel %vm161, %v1011, 0
    %v1225 = vsel %vm161, %v1012, 0
    %v1228 = vsel %vm161, %v1013, 0
    %v1231 = vsel %vm161, %v1014, 0
    %v1234 = vsel %vm161, %v1015, 0
    %v1237 = vsel %vm161, %v1016, 0
    %v1240 = vsel %vm161, %v1017, 0
    %v1243 = vsel %vm161, %v1018, 0
    %v1246 = vsel %vm161, %v1019, 0
    %v1249 = vsel %vm161, %v1020, 0
    %v1252 = vsel %vm161, %v1021, 0
    %v1255 = vsel %vm161, %v1022, 0
    %v1258 = vsel %vm161, %v1023, 0
    %v1261 = vsel %vm161, %v1024, 0
    %v1264 = vsel %vm161, %v1025, 0
    %v1267 = vsel %vm161, %v1026, 0
    %v1270 = vsel %vm161, %v1027, 0
    %v1273 = vsel %vm161, %v1028, 0
    %v1276 = vsel %vm161, %v1029, 0
    %v1279 = vsel %vm161, %v1030, 0
    %v1282 = vsel %vm161, %v1031, 0
    %v1285 = vsel %vm161, %v1032, 0
    %v1288 = vsel %vm161, %v1033, 0
    %v1291 = vsel %vm161, %v1034, 0
    %v1294 = vsel %vm161, %v1035, 0
    %v1297 = vsel %vm161, %v1036, 0
    %v1300 = vsel %vm161, %v1037, 0
    %v1303 = vsel %vm161, %v1038, 0
    %v1306 = vsel %vm161, %v1039, 0
    %v1309 = vsel %vm161, %v1040, 0
    %v1312 = vsel %vm161, %v1041, 0
    %v1315 = vsel %vm161, %v1042, 0
    %v1318 = vsel %vm161, %v1043, 0
    %v1321 = vsel %vm161, %v1044, 0
    %v1324 = vsel %vm161, %v1045, 0
    %v1327 = vsel %vm161, %v1046, 0
    %v1330 = vsel %vm161, %v1047, 0
    %v1333 = vsel %vm161, %v1048, 0
    %v1336 = vsel %vm161, %v1049, 0
    %v1339 = vsel %vm161, %v1050, 0
    %v1342 = vsel %vm161, %v1051, 0
    %v1345 = vsel %vm161, %v1052, 0
    %v1348 = vsel %vm161, %v1053, 0
    %v1351 = vsel %vm161, %v1054, 0
    %v1354 = vsel %vm161, %v1055, 0
    %v1357 = vsel %vm161, %v1056, 0
    %v1360 = vsel %vm161, %v1057, 0
    %v1363 = vsel %vm161, %v1058, 0
    %v1366 = vsel %vm161, %v1059, 0
    %v1369 = vsel %vm161, %v1060, 0
    %v1372 = vsel %vm161, %v1061, 0
    %v1375 = vsel %vm161, %v1062, 0
    %v1378 = vsel %vm161, %v1063, 0
    %v1381 = vsel %vm161, %v1064, 0
    %v1384 = vsel %vm161, %v1065, 0
    %v1387 = vsel %vm161, %v1066, 0
    %v1390 = vsel %vm161, %v1067, 0
    %v1393 = vsel %vm161, %v1068, 0
    %v1396 = vsel %vm161, %v1069, 0
    %v1399 = vsel %vm161, %v1070, 0
    %v1402 = vsel %vm161, %v1071, 0
    %v1405 = vsel %vm161, %v1072, 0
    %v1408 = vsel %vm161, %v1073, 0
    %v1411 = vsel %vm161, %v1074, 0
    %v1414 = vsel %vm161, %v1075, 0
    %v1417 = vsel %vm161, %v1076, 0
    %v1420 = vsel %vm161, %v1077, 0
    %v1423 = vsel %vm161, %v1078, 0
    %v1426 = vsel %vm161, %v1079, 0
    %v1429 = vsel %vm161, %v1080, 0
    %v1432 = vsel %vm161, %v1081, 0
    %v1435 = vsel %vm161, %v1082, 0
    %v1438 = vsel %vm161, %v1083, 0
    %v1441 = vsel %vm161, %v1084, 0
    %v1444 = vsel %vm161, %v1085, 0
    %v1447 = vsel %vm161, %v1086, 0
    %v1450 = vsel %vm161, %v1087, 0
    %v1453 = vsel %vm161, %v1088, 0
    %v1456 = vsel %vm161, %v1089, 0
    %v1459 = vsel %vm161, %v1090, 0
    %v1462 = vsel %vm161, %v1091, 0
    %v1465 = vsel %vm161, %v1092, 0
    %v1468 = vsel %vm161, %v1093, 0
    %v1471 = vsel %vm161, %v1094, 0
    %v1474 = vsel %vm161, %v1095, 0
    %v1477 = vsel %vm161, %v1096, 0
    %v1480 = vsel %vm161, %v1097, 0
    %v1483 = vsel %vm161, %v1098, 0
    %v1486 = vsel %vm161, %v1099, 0
    %v1489 = vsel %vm161, %v1100, 0
    %v1492 = vsel %vm161, %v1101, 0
    %v1495 = vsel %vm161, %v1102, 0
    %v1498 = vsel %vm161, %v1103, 0
    %v1501 = vsel %vm161, %v1104, 0
    %v1504 = vsel %vm161, %v1105, 0
    %v1507 = vsel %vm161, %v1106, 0
    %v1510 = vsel %vm161, %v1107, 0
    %v1513 = vsel %vm161, %v1108, 0
    %v1516 = vsel %vm161, %v1109, 0
    %1518 = vmatprep.subr.bf16.mxu0 0
    %1519 = vmatpush1.bf16.msra.mxu0 %v1126
    %1520 = vmatprep.subr.bf16.mxu0 0
    %1521 = vmatpush1.bf16.msra.mxu0 %v1127
    %1522 = vmatprep.subr.bf16.mxu0 0
    %1523 = vmatpush1.bf16.msra.mxu0 %v1128
    %1524 = vmatprep.subr.bf16.mxu0 0
    %1525 = vmatpush1.bf16.msra.mxu0 %v1129
    %1526 = vmatprep.subr.bf16.mxu0 0
    %1527 = vmatpush1.bf16.msra.mxu0 0
    %1528 = vmatprep.subr.bf16.mxu0 0
    %1529 = vmatpush1.bf16.msra.mxu0 0
    %1530 = vmatprep.subr.bf16.mxu0 0
    %1531 = vmatpush1.bf16.msra.mxu0 0
    %1532 = vmatprep.subr.bf16.mxu0 0
    %1533 = vmatpush1.bf16.msra.mxu0 0
    %1534 = vmatprep.subr.bf16.mxu0 0
    %1535 = vmatpush1.bf16.msra.mxu0 0
    %1536 = vmatprep.subr.bf16.mxu0 0
    %1537 = vmatpush1.bf16.msra.mxu0 0
    %1538 = vmatprep.subr.bf16.mxu0 0
    %1539 = vmatpush1.bf16.msra.mxu0 0
    %1540 = vmatprep.subr.bf16.mxu0 0
    %1541 = vmatpush1.bf16.msra.mxu0 0
    %1542 = vmatprep.subr.bf16.mxu0 0
    %1543 = vmatpush1.bf16.msra.mxu0 0
    %1544 = vmatprep.subr.bf16.mxu0 0
    %1545 = vmatpush1.bf16.msra.mxu0 0
    %1546 = vmatprep.subr.bf16.mxu0 0
    %1547 = vmatpush1.bf16.msra.mxu0 0
    %1548 = vmatprep.subr.bf16.mxu0 0
    %1549 = vmatpush1.bf16.msra.mxu0 0
    %1550 = vmatprep.mubr.bf16.mxu0 0
    %1551 = vmatmul.mubr.bf16.gmra.mrb[0].mxu0 %v1135
    %v1552 = vpop.f32.mrb[0].mxu0
    %v1553 = vadd.f32 0.0, %v1552
    %v1554 = vpop.f32.mrb[0].mxu0
    %v1555 = vpop.f32.mrb[0].mxu0
    %v1556 = vadd.f32 0.0, %v1555
    %v1557 = vpop.f32.mrb[0].mxu0
    %1558 = vmatprep.mubr.bf16.mxu0 0
    %1559 = vmatmul.mubr.bf16.gmra.mrb[0].mxu0 %v1138
    %v1560 = vpop.f32.mrb[0].mxu0
    %v1561 = vadd.f32 0.0, %v1560
    %v1562 = vpop.f32.mrb[0].mxu0
    %v1563 = vpop.f32.mrb[0].mxu0
    %v1564 = vadd.f32 0.0, %v1563
    %v1565 = vpop.f32.mrb[0].mxu0
    %1566 = vmatprep.mubr.bf16.mxu0 0
    %1567 = vmatmul.mubr.bf16.gmra.mrb[0].mxu0 %v1141
    %v1568 = vpop.f32.mrb[0].mxu0
    %v1569 = vadd.f32 0.0, %v1568
    %v1570 = vpop.f32.mrb[0].mxu0
    %v1571 = vpop.f32.mrb[0].mxu0
    %v1572 = vadd.f32 0.0, %v1571
    %v1573 = vpop.f32.mrb[0].mxu0
    %1574 = vmatprep.mubr.bf16.mxu0 0
    %1575 = vmatmul.mubr.bf16.gmra.mrb[0].mxu0 %v1144
    %v1576 = vpop.f32.mrb[0].mxu0
    %v1577 = vadd.f32 0.0, %v1576
    %v1578 = vpop.f32.mrb[0].mxu0
    %v1579 = vpop.f32.mrb[0].mxu0
    %v1580 = vadd.f32 0.0, %v1579
    %v1581 = vpop.f32.mrb[0].mxu0
    %1582 = vmatprep.mubr.bf16.mxu0 0
    %1583 = vmatmul.mubr.bf16.gmra.mrb[0].mxu0 %v1147
    %v1584 = vpop.f32.mrb[0].mxu0
    %v1585 = vadd.f32 0.0, %v1584
    %v1586 = vpop.f32.mrb[0].mxu0
    %v1587 = vpop.f32.mrb[0].mxu0
    %v1588 = vadd.f32 0.0, %v1587
    %v1589 = vpop.f32.mrb[0].mxu0
    %1590 = vmatprep.mubr.bf16.mxu0 0
    %1591 = vmatmul.mubr.bf16.gmra.mrb[0].mxu0 %v1150
    %v1592 = vpop.f32.mrb[0].mxu0
    %v1593 = vadd.f32 0.0, %v1592
    %v1594 = vpop.f32.mrb[0].mxu0
    %v1595 = vpop.f32.mrb[0].mxu0
    %v1596 = vadd.f32 0.0, %v1595
    %v1597 = vpop.f32.mrb[0].mxu0
    %1598 = vmatprep.mubr.bf16.mxu0 0
    %1599 = vmatmul.mubr.bf16.gmra.mrb[0].mxu0 %v1153
    %v1600 = vpop.f32.mrb[0].mxu0
    %v1601 = vadd.f32 0.0, %v1600
    %v1602 = vpop.f32.mrb[0].mxu0
    %v1603 = vpop.f32.mrb[0].mxu0
    %v1604 = vadd.f32 0.0, %v1603
    %v1605 = vpop.f32.mrb[0].mxu0
    %1606 = vmatprep.mubr.bf16.mxu0 0
    %1607 = vmatmul.mubr.bf16.gmra.mrb[0].mxu0 %v1156
    %v1608 = vpop.f32.mrb[0].mxu0
    %v1609 = vadd.f32 0.0, %v1608
    %v1610 = vpop.f32.mrb[0].mxu0
    %v1611 = vpop.f32.mrb[0].mxu0
    %v1612 = vadd.f32 0.0, %v1611
    %v1613 = vpop.f32.mrb[0].mxu0
    %1614 = vmatprep.mubr.bf16.mxu0 0
    %1615 = vmatmul.mubr.bf16.gmra.mrb[0].mxu0 %v1159
    %v1616 = vpop.f32.mrb[0].mxu0
    %v1617 = vadd.f32 0.0, %v1616
    %v1618 = vpop.f32.mrb[0].mxu0
    %v1619 = vpop.f32.mrb[0].mxu0
    %v1620 = vadd.f32 0.0, %v1619
    %v1621 = vpop.f32.mrb[0].mxu0
    %1622 = vmatprep.mubr.bf16.mxu0 0
    %1623 = vmatmul.mubr.bf16.gmra.mrb[0].mxu0 %v1162
    %v1624 = vpop.f32.mrb[0].mxu0
    %v1625 = vadd.f32 0.0, %v1624
    %v1626 = vpop.f32.mrb[0].mxu0
    %v1627 = vpop.f32.mrb[0].mxu0
    %v1628 = vadd.f32 0.0, %v1627
    %v1629 = vpop.f32.mrb[0].mxu0
    %1630 = vmatprep.mubr.bf16.mxu0 0
    %1631 = vmatmul.mubr.bf16.gmra.mrb[0].mxu0 %v1165
    %v1632 = vpop.f32.mrb[0].mxu0
    %v1633 = vadd.f32 0.0, %v1632
    %v1634 = vpop.f32.mrb[0].mxu0
    %v1635 = vpop.f32.mrb[0].mxu0
    %v1636 = vadd.f32 0.0, %v1635
    %v1637 = vpop.f32.mrb[0].mxu0
    %1638 = vmatprep.mubr.bf16.mxu0 0
    %1639 = vmatmul.mubr.bf16.gmra.mrb[0].mxu0 %v1168
    %v1640 = vpop.f32.mrb[0].mxu0
    %v1641 = vadd.f32 0.0, %v1640
    %v1642 = vpop.f32.mrb[0].mxu0
    %v1643 = vpop.f32.mrb[0].mxu0
    %v1644 = vadd.f32 0.0, %v1643
    %v1645 = vpop.f32.mrb[0].mxu0
    %1646 = vmatprep.mubr.bf16.mxu0 0
    %1647 = vmatmul.mubr.bf16.gmra.mrb[0].mxu0 %v1171
    %v1648 = vpop.f32.mrb[0].mxu0
    %v1649 = vadd.f32 0.0, %v1648
    %v1650 = vpop.f32.mrb[0].mxu0
    %v1651 = vpop.f32.mrb[0].mxu0
    %v1652 = vadd.f32 0.0, %v1651
    %v1653 = vpop.f32.mrb[0].mxu0
    %1654 = vmatprep.mubr.bf16.mxu0 0
    %1655 = vmatmul.mubr.bf16.gmra.mrb[0].mxu0 %v1174
    %v1656 = vpop.f32.mrb[0].mxu0
    %v1657 = vadd.f32 0.0, %v1656
    %v1658 = vpop.f32.mrb[0].mxu0
    %v1659 = vpop.f32.mrb[0].mxu0
    %v1660 = vadd.f32 0.0, %v1659
    %v1661 = vpop.f32.mrb[0].mxu0
    %1662 = vmatprep.mubr.bf16.mxu0 0
    %1663 = vmatmul.mubr.bf16.gmra.mrb[0].mxu0 %v1177
    %v1664 = vpop.f32.mrb[0].mxu0
    %v1665 = vadd.f32 0.0, %v1664
    %v1666 = vpop.f32.mrb[0].mxu0
    %v1667 = vpop.f32.mrb[0].mxu0
    %v1668 = vadd.f32 0.0, %v1667
    %v1669 = vpop.f32.mrb[0].mxu0
    %1670 = vmatprep.mubr.bf16.mxu0 0
    %1671 = vmatmul.mubr.bf16.gmra.mrb[0].mxu0 %v1180
    %v1672 = vpop.f32.mrb[0].mxu0
    %v1673 = vadd.f32 0.0, %v1672
    %v1674 = vpop.f32.mrb[0].mxu0
    %v1675 = vpop.f32.mrb[0].mxu0
    %v1676 = vadd.f32 0.0, %v1675
    %v1677 = vpop.f32.mrb[0].mxu0
    %1678 = vmatprep.mubr.bf16.mxu0 0
    %1679 = vmatmul.mubr.bf16.gmra.mrb[0].mxu0 %v1183
    %v1680 = vpop.f32.mrb[0].mxu0
    %v1681 = vadd.f32 0.0, %v1680
    %v1682 = vpop.f32.mrb[0].mxu0
    %v1683 = vpop.f32.mrb[0].mxu0
    %v1684 = vadd.f32 0.0, %v1683
    %v1685 = vpop.f32.mrb[0].mxu0
    %1686 = vmatprep.mubr.bf16.mxu0 0
    %1687 = vmatmul.mubr.bf16.gmra.mrb[0].mxu0 %v1186
    %v1688 = vpop.f32.mrb[0].mxu0
    %v1689 = vadd.f32 0.0, %v1688
    %v1690 = vpop.f32.mrb[0].mxu0
    %v1691 = vpop.f32.mrb[0].mxu0
    %v1692 = vadd.f32 0.0, %v1691
    %v1693 = vpop.f32.mrb[0].mxu0
    %1694 = vmatprep.mubr.bf16.mxu0 0
    %1695 = vmatmul.mubr.bf16.gmra.mrb[0].mxu0 %v1189
    %v1696 = vpop.f32.mrb[0].mxu0
    %v1697 = vadd.f32 0.0, %v1696
    %v1698 = vpop.f32.mrb[0].mxu0
    %v1699 = vpop.f32.mrb[0].mxu0
    %v1700 = vadd.f32 0.0, %v1699
    %v1701 = vpop.f32.mrb[0].mxu0
    %1702 = vmatprep.mubr.bf16.mxu0 0
    %1703 = vmatmul.mubr.bf16.gmra.mrb[0].mxu0 %v1192
    %v1704 = vpop.f32.mrb[0].mxu0
    %v1705 = vadd.f32 0.0, %v1704
    %v1706 = vpop.f32.mrb[0].mxu0
    %v1707 = vpop.f32.mrb[0].mxu0
    %v1708 = vadd.f32 0.0, %v1707
    %v1709 = vpop.f32.mrb[0].mxu0
    %1710 = vmatprep.mubr.bf16.mxu0 0
    %1711 = vmatmul.mubr.bf16.gmra.mrb[0].mxu0 %v1195
    %v1712 = vpop.f32.mrb[0].mxu0
    %v1713 = vadd.f32 0.0, %v1712
    %v1714 = vpop.f32.mrb[0].mxu0
    %v1715 = vpop.f32.mrb[0].mxu0
    %v1716 = vadd.f32 0.0, %v1715
    %v1717 = vpop.f32.mrb[0].mxu0
    %1718 = vmatprep.mubr.bf16.mxu0 0
    %1719 = vmatmul.mubr.bf16.gmra.mrb[0].mxu0 %v1198
    %v1720 = vpop.f32.mrb[0].mxu0
    %v1721 = vadd.f32 0.0, %v1720
    %v1722 = vpop.f32.mrb[0].mxu0
    %v1723 = vpop.f32.mrb[0].mxu0
    %v1724 = vadd.f32 0.0, %v1723
    %v1725 = vpop.f32.mrb[0].mxu0
    %1726 = vmatprep.mubr.bf16.mxu0 0
    %1727 = vmatmul.mubr.bf16.gmra.mrb[0].mxu0 %v1201
    %v1728 = vpop.f32.mrb[0].mxu0
    %v1729 = vadd.f32 0.0, %v1728
    %v1730 = vpop.f32.mrb[0].mxu0
    %v1731 = vpop.f32.mrb[0].mxu0
    %v1732 = vadd.f32 0.0, %v1731
    %v1733 = vpop.f32.mrb[0].mxu0
    %1734 = vmatprep.mubr.bf16.mxu0 0
    %1735 = vmatmul.mubr.bf16.gmra.mrb[0].mxu0 %v1204
    %v1736 = vpop.f32.mrb[0].mxu0
    %v1737 = vadd.f32 0.0, %v1736
    %v1738 = vpop.f32.mrb[0].mxu0
    %v1739 = vpop.f32.mrb[0].mxu0
    %v1740 = vadd.f32 0.0, %v1739
    %v1741 = vpop.f32.mrb[0].mxu0
    %1742 = vmatprep.mubr.bf16.mxu0 0
    %1743 = vmatmul.mubr.bf16.gmra.mrb[0].mxu0 %v1207
    %v1744 = vpop.f32.mrb[0].mxu0
    %v1745 = vadd.f32 0.0, %v1744
    %v1746 = vpop.f32.mrb[0].mxu0
    %v1747 = vpop.f32.mrb[0].mxu0
    %v1748 = vadd.f32 0.0, %v1747
    %v1749 = vpop.f32.mrb[0].mxu0
    %1750 = vmatprep.mubr.bf16.mxu0 0
    %1751 = vmatmul.mubr.bf16.gmra.mrb[0].mxu0 %v1210
    %v1752 = vpop.f32.mrb[0].mxu0
    %v1753 = vadd.f32 0.0, %v1752
    %v1754 = vpop.f32.mrb[0].mxu0
    %v1755 = vpop.f32.mrb[0].mxu0
    %v1756 = vadd.f32 0.0, %v1755
    %v1757 = vpop.f32.mrb[0].mxu0
    %1758 = vmatprep.mubr.bf16.mxu0 0
    %1759 = vmatmul.mubr.bf16.gmra.mrb[0].mxu0 %v1213
    %v1760 = vpop.f32.mrb[0].mxu0
    %v1761 = vadd.f32 0.0, %v1760
    %v1762 = vpop.f32.mrb[0].mxu0
    %v1763 = vpop.f32.mrb[0].mxu0
    %v1764 = vadd.f32 0.0, %v1763
    %v1765 = vpop.f32.mrb[0].mxu0
    %1766 = vmatprep.mubr.bf16.mxu0 0
    %1767 = vmatmul.mubr.bf16.gmra.mrb[0].mxu0 %v1216
    %v1768 = vpop.f32.mrb[0].mxu0
    %v1769 = vadd.f32 0.0, %v1768
    %v1770 = vpop.f32.mrb[0].mxu0
    %v1771 = vpop.f32.mrb[0].mxu0
    %v1772 = vadd.f32 0.0, %v1771
    %v1773 = vpop.f32.mrb[0].mxu0
    %1774 = vmatprep.mubr.bf16.mxu0 0
    %1775 = vmatmul.mubr.bf16.gmra.mrb[0].mxu0 %v1219
    %v1776 = vpop.f32.mrb[0].mxu0
    %v1777 = vadd.f32 0.0, %v1776
    %v1778 = vpop.f32.mrb[0].mxu0
    %v1779 = vpop.f32.mrb[0].mxu0
    %v1780 = vadd.f32 0.0, %v1779
    %v1781 = vpop.f32.mrb[0].mxu0
    %1782 = vmatprep.mubr.bf16.mxu0 0
    %1783 = vmatmul.mubr.bf16.gmra.mrb[0].mxu0 %v1222
    %v1784 = vpop.f32.mrb[0].mxu0
    %v1785 = vadd.f32 0.0, %v1784
    %v1786 = vpop.f32.mrb[0].mxu0
    %v1787 = vpop.f32.mrb[0].mxu0
    %v1788 = vadd.f32 0.0, %v1787
    %v1789 = vpop.f32.mrb[0].mxu0
    %1790 = vmatprep.mubr.bf16.mxu0 0
    %1791 = vmatmul.mubr.bf16.gmra.mrb[0].mxu0 %v1225
    %v1792 = vpop.f32.mrb[0].mxu0
    %v1793 = vadd.f32 0.0, %v1792
    %v1794 = vpop.f32.mrb[0].mxu0
    %v1795 = vpop.f32.mrb[0].mxu0
    %v1796 = vadd.f32 0.0, %v1795
    %v1797 = vpop.f32.mrb[0].mxu0
    %1798 = vmatprep.mubr.bf16.mxu0 0
    %1799 = vmatmul.mubr.bf16.gmra.mrb[0].mxu0 %v1228
    %v1800 = vpop.f32.mrb[0].mxu0
    %v1801 = vadd.f32 0.0, %v1800
    %v1802 = vpop.f32.mrb[0].mxu0
    %v1803 = vpop.f32.mrb[0].mxu0
    %v1804 = vadd.f32 0.0, %v1803
    %v1805 = vpop.f32.mrb[0].mxu0
    %1806 = vmatprep.mubr.bf16.mxu0 0
    %1807 = vmatmul.mubr.bf16.gmra.mrb[0].mxu0 %v1231
    %v1808 = vpop.f32.mrb[0].mxu0
    %v1809 = vadd.f32 0.0, %v1808
    %v1810 = vpop.f32.mrb[0].mxu0
    %v1811 = vpop.f32.mrb[0].mxu0
    %v1812 = vadd.f32 0.0, %v1811
    %v1813 = vpop.f32.mrb[0].mxu0
    %1814 = vmatprep.mubr.bf16.mxu0 0
    %1815 = vmatmul.mubr.bf16.gmra.mrb[0].mxu0 %v1234
    %v1816 = vpop.f32.mrb[0].mxu0
    %v1817 = vadd.f32 0.0, %v1816
    %v1818 = vpop.f32.mrb[0].mxu0
    %v1819 = vpop.f32.mrb[0].mxu0
    %v1820 = vadd.f32 0.0, %v1819
    %v1821 = vpop.f32.mrb[0].mxu0
    %1822 = vmatprep.mubr.bf16.mxu0 0
    %1823 = vmatmul.mubr.bf16.gmra.mrb[0].mxu0 %v1237
    %v1824 = vpop.f32.mrb[0].mxu0
    %v1825 = vadd.f32 0.0, %v1824
    %v1826 = vpop.f32.mrb[0].mxu0
    %v1827 = vpop.f32.mrb[0].mxu0
    %v1828 = vadd.f32 0.0, %v1827
    %v1829 = vpop.f32.mrb[0].mxu0
    %1830 = vmatprep.mubr.bf16.mxu0 0
    %1831 = vmatmul.mubr.bf16.gmra.mrb[0].mxu0 %v1240
    %v1832 = vpop.f32.mrb[0].mxu0
    %v1833 = vadd.f32 0.0, %v1832
    %v1834 = vpop.f32.mrb[0].mxu0
    %v1835 = vpop.f32.mrb[0].mxu0
    %v1836 = vadd.f32 0.0, %v1835
    %v1837 = vpop.f32.mrb[0].mxu0
    %1838 = vmatprep.mubr.bf16.mxu0 0
    %1839 = vmatmul.mubr.bf16.gmra.mrb[0].mxu0 %v1243
    %v1840 = vpop.f32.mrb[0].mxu0
    %v1841 = vadd.f32 0.0, %v1840
    %v1842 = vpop.f32.mrb[0].mxu0
    %v1843 = vpop.f32.mrb[0].mxu0
    %v1844 = vadd.f32 0.0, %v1843
    %v1845 = vpop.f32.mrb[0].mxu0
    %1846 = vmatprep.mubr.bf16.mxu0 0
    %1847 = vmatmul.mubr.bf16.gmra.mrb[0].mxu0 %v1246
    %v1848 = vpop.f32.mrb[0].mxu0
    %v1849 = vadd.f32 0.0, %v1848
    %v1850 = vpop.f32.mrb[0].mxu0
    %v1851 = vpop.f32.mrb[0].mxu0
    %v1852 = vadd.f32 0.0, %v1851
    %v1853 = vpop.f32.mrb[0].mxu0
    %1854 = vmatprep.mubr.bf16.mxu0 0
    %1855 = vmatmul.mubr.bf16.gmra.mrb[0].mxu0 %v1249
    %v1856 = vpop.f32.mrb[0].mxu0
    %v1857 = vadd.f32 0.0, %v1856
    %v1858 = vpop.f32.mrb[0].mxu0
    %v1859 = vpop.f32.mrb[0].mxu0
    %v1860 = vadd.f32 0.0, %v1859
    %v1861 = vpop.f32.mrb[0].mxu0
    %1862 = vmatprep.mubr.bf16.mxu0 0
    %1863 = vmatmul.mubr.bf16.gmra.mrb[0].mxu0 %v1252
    %v1864 = vpop.f32.mrb[0].mxu0
    %v1865 = vadd.f32 0.0, %v1864
    %v1866 = vpop.f32.mrb[0].mxu0
    %v1867 = vpop.f32.mrb[0].mxu0
    %v1868 = vadd.f32 0.0, %v1867
    %v1869 = vpop.f32.mrb[0].mxu0
    %1870 = vmatprep.mubr.bf16.mxu0 0
    %1871 = vmatmul.mubr.bf16.gmra.mrb[0].mxu0 %v1255
    %v1872 = vpop.f32.mrb[0].mxu0
    %v1873 = vadd.f32 0.0, %v1872
    %v1874 = vpop.f32.mrb[0].mxu0
    %v1875 = vpop.f32.mrb[0].mxu0
    %v1876 = vadd.f32 0.0, %v1875
    %v1877 = vpop.f32.mrb[0].mxu0
    %1878 = vmatprep.mubr.bf16.mxu0 0
    %1879 = vmatmul.mubr.bf16.gmra.mrb[0].mxu0 %v1258
    %v1880 = vpop.f32.mrb[0].mxu0
    %v1881 = vadd.f32 0.0, %v1880
    %v1882 = vpop.f32.mrb[0].mxu0
    %v1883 = vpop.f32.mrb[0].mxu0
    %v1884 = vadd.f32 0.0, %v1883
    %v1885 = vpop.f32.mrb[0].mxu0
    %1886 = vmatprep.mubr.bf16.mxu0 0
    %1887 = vmatmul.mubr.bf16.gmra.mrb[0].mxu0 %v1261
    %v1888 = vpop.f32.mrb[0].mxu0
    %v1889 = vadd.f32 0.0, %v1888
    %v1890 = vpop.f32.mrb[0].mxu0
    %v1891 = vpop.f32.mrb[0].mxu0
    %v1892 = vadd.f32 0.0, %v1891
    %v1893 = vpop.f32.mrb[0].mxu0
    %1894 = vmatprep.mubr.bf16.mxu0 0
    %1895 = vmatmul.mubr.bf16.gmra.mrb[0].mxu0 %v1264
    %v1896 = vpop.f32.mrb[0].mxu0
    %v1897 = vadd.f32 0.0, %v1896
    %v1898 = vpop.f32.mrb[0].mxu0
    %v1899 = vpop.f32.mrb[0].mxu0
    %v1900 = vadd.f32 0.0, %v1899
    %v1901 = vpop.f32.mrb[0].mxu0
    %1902 = vmatprep.mubr.bf16.mxu0 0
    %1903 = vmatmul.mubr.bf16.gmra.mrb[0].mxu0 %v1267
    %v1904 = vpop.f32.mrb[0].mxu0
    %v1905 = vadd.f32 0.0, %v1904
    %v1906 = vpop.f32.mrb[0].mxu0
    %v1907 = vpop.f32.mrb[0].mxu0
    %v1908 = vadd.f32 0.0, %v1907
    %v1909 = vpop.f32.mrb[0].mxu0
    %1910 = vmatprep.mubr.bf16.mxu0 0
    %1911 = vmatmul.mubr.bf16.gmra.mrb[0].mxu0 %v1270
    %v1912 = vpop.f32.mrb[0].mxu0
    %v1913 = vadd.f32 0.0, %v1912
    %v1914 = vpop.f32.mrb[0].mxu0
    %v1915 = vpop.f32.mrb[0].mxu0
    %v1916 = vadd.f32 0.0, %v1915
    %v1917 = vpop.f32.mrb[0].mxu0
    %1918 = vmatprep.mubr.bf16.mxu0 0
    %1919 = vmatmul.mubr.bf16.gmra.mrb[0].mxu0 %v1273
    %v1920 = vpop.f32.mrb[0].mxu0
    %v1921 = vadd.f32 0.0, %v1920
    %v1922 = vpop.f32.mrb[0].mxu0
    %v1923 = vpop.f32.mrb[0].mxu0
    %v1924 = vadd.f32 0.0, %v1923
    %v1925 = vpop.f32.mrb[0].mxu0
    %1926 = vmatprep.mubr.bf16.mxu0 0
    %1927 = vmatmul.mubr.bf16.gmra.mrb[0].mxu0 %v1276
    %v1928 = vpop.f32.mrb[0].mxu0
    %v1929 = vadd.f32 0.0, %v1928
    %v1930 = vpop.f32.mrb[0].mxu0
    %v1931 = vpop.f32.mrb[0].mxu0
    %v1932 = vadd.f32 0.0, %v1931
    %v1933 = vpop.f32.mrb[0].mxu0
    %1934 = vmatprep.mubr.bf16.mxu0 0
    %1935 = vmatmul.mubr.bf16.gmra.mrb[0].mxu0 %v1279
    %v1936 = vpop.f32.mrb[0].mxu0
    %v1937 = vadd.f32 0.0, %v1936
    %v1938 = vpop.f32.mrb[0].mxu0
    %v1939 = vpop.f32.mrb[0].mxu0
    %v1940 = vadd.f32 0.0, %v1939
    %v1941 = vpop.f32.mrb[0].mxu0
    %1942 = vmatprep.mubr.bf16.mxu0 0
    %1943 = vmatmul.mubr.bf16.gmra.mrb[0].mxu0 %v1282
    %v1944 = vpop.f32.mrb[0].mxu0
    %v1945 = vadd.f32 0.0, %v1944
    %v1946 = vpop.f32.mrb[0].mxu0
    %v1947 = vpop.f32.mrb[0].mxu0
    %v1948 = vadd.f32 0.0, %v1947
    %v1949 = vpop.f32.mrb[0].mxu0
    %1950 = vmatprep.mubr.bf16.mxu0 0
    %1951 = vmatmul.mubr.bf16.gmra.mrb[0].mxu0 %v1285
    %v1952 = vpop.f32.mrb[0].mxu0
    %v1953 = vadd.f32 0.0, %v1952
    %v1954 = vpop.f32.mrb[0].mxu0
    %v1955 = vpop.f32.mrb[0].mxu0
    %v1956 = vadd.f32 0.0, %v1955
    %v1957 = vpop.f32.mrb[0].mxu0
    %1958 = vmatprep.mubr.bf16.mxu0 0
    %1959 = vmatmul.mubr.bf16.gmra.mrb[0].mxu0 %v1288
    %v1960 = vpop.f32.mrb[0].mxu0
    %v1961 = vadd.f32 0.0, %v1960
    %v1962 = vpop.f32.mrb[0].mxu0
    %v1963 = vpop.f32.mrb[0].mxu0
    %v1964 = vadd.f32 0.0, %v1963
    %v1965 = vpop.f32.mrb[0].mxu0
    %1966 = vmatprep.mubr.bf16.mxu0 0
    %1967 = vmatmul.mubr.bf16.gmra.mrb[0].mxu0 %v1291
    %v1968 = vpop.f32.mrb[0].mxu0
    %v1969 = vadd.f32 0.0, %v1968
    %v1970 = vpop.f32.mrb[0].mxu0
    %v1971 = vpop.f32.mrb[0].mxu0
    %v1972 = vadd.f32 0.0, %v1971
    %v1973 = vpop.f32.mrb[0].mxu0
    %1974 = vmatprep.mubr.bf16.mxu0 0
    %1975 = vmatmul.mubr.bf16.gmra.mrb[0].mxu0 %v1294
    %v1976 = vpop.f32.mrb[0].mxu0
    %v1977 = vadd.f32 0.0, %v1976
    %v1978 = vpop.f32.mrb[0].mxu0
    %v1979 = vpop.f32.mrb[0].mxu0
    %v1980 = vadd.f32 0.0, %v1979
    %v1981 = vpop.f32.mrb[0].mxu0
    %1982 = vmatprep.mubr.bf16.mxu0 0
    %1983 = vmatmul.mubr.bf16.gmra.mrb[0].mxu0 %v1297
    %v1984 = vpop.f32.mrb[0].mxu0
    %v1985 = vadd.f32 0.0, %v1984
    %v1986 = vpop.f32.mrb[0].mxu0
    %v1987 = vpop.f32.mrb[0].mxu0
    %v1988 = vadd.f32 0.0, %v1987
    %v1989 = vpop.f32.mrb[0].mxu0
    %1990 = vmatprep.mubr.bf16.mxu0 0
    %1991 = vmatmul.mubr.bf16.gmra.mrb[0].mxu0 %v1300
    %v1992 = vpop.f32.mrb[0].mxu0
    %v1993 = vadd.f32 0.0, %v1992
    %v1994 = vpop.f32.mrb[0].mxu0
    %v1995 = vpop.f32.mrb[0].mxu0
    %v1996 = vadd.f32 0.0, %v1995
    %v1997 = vpop.f32.mrb[0].mxu0
    %1998 = vmatprep.mubr.bf16.mxu0 0
    %1999 = vmatmul.mubr.bf16.gmra.mrb[0].mxu0 %v1303
    %v2000 = vpop.f32.mrb[0].mxu0
    %v2001 = vadd.f32 0.0, %v2000
    %v2002 = vpop.f32.mrb[0].mxu0
    %v2003 = vpop.f32.mrb[0].mxu0
    %v2004 = vadd.f32 0.0, %v2003
    %v2005 = vpop.f32.mrb[0].mxu0
    %2006 = vmatprep.mubr.bf16.mxu0 0
    %2007 = vmatmul.mubr.bf16.gmra.mrb[0].mxu0 %v1306
    %v2008 = vpop.f32.mrb[0].mxu0
    %v2009 = vadd.f32 0.0, %v2008
    %v2010 = vpop.f32.mrb[0].mxu0
    %v2011 = vpop.f32.mrb[0].mxu0
    %v2012 = vadd.f32 0.0, %v2011
    %v2013 = vpop.f32.mrb[0].mxu0
    %2014 = vmatprep.mubr.bf16.mxu0 0
    %2015 = vmatmul.mubr.bf16.gmra.mrb[0].mxu0 %v1309
    %v2016 = vpop.f32.mrb[0].mxu0
    %v2017 = vadd.f32 0.0, %v2016
    %v2018 = vpop.f32.mrb[0].mxu0
    %v2019 = vpop.f32.mrb[0].mxu0
    %v2020 = vadd.f32 0.0, %v2019
    %v2021 = vpop.f32.mrb[0].mxu0
    %2022 = vmatprep.mubr.bf16.mxu0 0
    %2023 = vmatmul.mubr.bf16.gmra.mrb[0].mxu0 %v1312
    %v2024 = vpop.f32.mrb[0].mxu0
    %v2025 = vadd.f32 0.0, %v2024
    %v2026 = vpop.f32.mrb[0].mxu0
    %v2027 = vpop.f32.mrb[0].mxu0
    %v2028 = vadd.f32 0.0, %v2027
    %v2029 = vpop.f32.mrb[0].mxu0
    %2030 = vmatprep.mubr.bf16.mxu0 0
    %2031 = vmatmul.mubr.bf16.gmra.mrb[0].mxu0 %v1315
    %v2032 = vpop.f32.mrb[0].mxu0
    %v2033 = vadd.f32 0.0, %v2032
    %v2034 = vpop.f32.mrb[0].mxu0
    %v2035 = vpop.f32.mrb[0].mxu0
    %v2036 = vadd.f32 0.0, %v2035
    %v2037 = vpop.f32.mrb[0].mxu0
    %2038 = vmatprep.mubr.bf16.mxu0 0
    %2039 = vmatmul.mubr.bf16.gmra.mrb[0].mxu0 %v1318
    %v2040 = vpop.f32.mrb[0].mxu0
    %v2041 = vadd.f32 0.0, %v2040
    %v2042 = vpop.f32.mrb[0].mxu0
    %v2043 = vpop.f32.mrb[0].mxu0
    %v2044 = vadd.f32 0.0, %v2043
    %v2045 = vpop.f32.mrb[0].mxu0
    %2046 = vmatprep.mubr.bf16.mxu0 0
    %2047 = vmatmul.mubr.bf16.gmra.mrb[0].mxu0 %v1321
    %v2048 = vpop.f32.mrb[0].mxu0
    %v2049 = vadd.f32 0.0, %v2048
    %v2050 = vpop.f32.mrb[0].mxu0
    %v2051 = vpop.f32.mrb[0].mxu0
    %v2052 = vadd.f32 0.0, %v2051
    %v2053 = vpop.f32.mrb[0].mxu0
    %2054 = vmatprep.mubr.bf16.mxu0 0
    %2055 = vmatmul.mubr.bf16.gmra.mrb[0].mxu0 %v1324
    %v2056 = vpop.f32.mrb[0].mxu0
    %v2057 = vadd.f32 0.0, %v2056
    %v2058 = vpop.f32.mrb[0].mxu0
    %v2059 = vpop.f32.mrb[0].mxu0
    %v2060 = vadd.f32 0.0, %v2059
    %v2061 = vpop.f32.mrb[0].mxu0
    %2062 = vmatprep.mubr.bf16.mxu0 0
    %2063 = vmatmul.mubr.bf16.gmra.mrb[0].mxu0 %v1327
    %v2064 = vpop.f32.mrb[0].mxu0
    %v2065 = vadd.f32 0.0, %v2064
    %v2066 = vpop.f32.mrb[0].mxu0
    %v2067 = vpop.f32.mrb[0].mxu0
    %v2068 = vadd.f32 0.0, %v2067
    %v2069 = vpop.f32.mrb[0].mxu0
    %2070 = vmatprep.mubr.bf16.mxu0 0
    %2071 = vmatmul.mubr.bf16.gmra.mrb[0].mxu0 %v1330
    %v2072 = vpop.f32.mrb[0].mxu0
    %v2073 = vadd.f32 0.0, %v2072
    %v2074 = vpop.f32.mrb[0].mxu0
    %v2075 = vpop.f32.mrb[0].mxu0
    %v2076 = vadd.f32 0.0, %v2075
    %v2077 = vpop.f32.mrb[0].mxu0
    %2078 = vmatprep.mubr.bf16.mxu0 0
    %2079 = vmatmul.mubr.bf16.gmra.mrb[0].mxu0 %v1333
    %v2080 = vpop.f32.mrb[0].mxu0
    %v2081 = vadd.f32 0.0, %v2080
    %v2082 = vpop.f32.mrb[0].mxu0
    %v2083 = vpop.f32.mrb[0].mxu0
    %v2084 = vadd.f32 0.0, %v2083
    %v2085 = vpop.f32.mrb[0].mxu0
    %2086 = vmatprep.mubr.bf16.mxu0 0
    %2087 = vmatmul.mubr.bf16.gmra.mrb[0].mxu0 %v1336
    %v2088 = vpop.f32.mrb[0].mxu0
    %v2089 = vadd.f32 0.0, %v2088
    %v2090 = vpop.f32.mrb[0].mxu0
    %v2091 = vpop.f32.mrb[0].mxu0
    %v2092 = vadd.f32 0.0, %v2091
    %v2093 = vpop.f32.mrb[0].mxu0
    %2094 = vmatprep.mubr.bf16.mxu0 0
    %2095 = vmatmul.mubr.bf16.gmra.mrb[0].mxu0 %v1339
    %v2096 = vpop.f32.mrb[0].mxu0
    %v2097 = vadd.f32 0.0, %v2096
    %v2098 = vpop.f32.mrb[0].mxu0
    %v2099 = vpop.f32.mrb[0].mxu0
    %v2100 = vadd.f32 0.0, %v2099
    %v2101 = vpop.f32.mrb[0].mxu0
    %2102 = vmatprep.mubr.bf16.mxu0 0
    %2103 = vmatmul.mubr.bf16.gmra.mrb[0].mxu0 %v1342
    %v2104 = vpop.f32.mrb[0].mxu0
    %v2105 = vadd.f32 0.0, %v2104
    %v2106 = vpop.f32.mrb[0].mxu0
    %v2107 = vpop.f32.mrb[0].mxu0
    %v2108 = vadd.f32 0.0, %v2107
    %v2109 = vpop.f32.mrb[0].mxu0
    %2110 = vmatprep.mubr.bf16.mxu0 0
    %2111 = vmatmul.mubr.bf16.gmra.mrb[0].mxu0 %v1345
    %v2112 = vpop.f32.mrb[0].mxu0
    %v2113 = vadd.f32 0.0, %v2112
    %v2114 = vpop.f32.mrb[0].mxu0
    %v2115 = vpop.f32.mrb[0].mxu0
    %v2116 = vadd.f32 0.0, %v2115
    %v2117 = vpop.f32.mrb[0].mxu0
    %2118 = vmatprep.mubr.bf16.mxu0 0
    %2119 = vmatmul.mubr.bf16.gmra.mrb[0].mxu0 %v1348
    %v2120 = vpop.f32.mrb[0].mxu0
    %v2121 = vadd.f32 0.0, %v2120
    %v2122 = vpop.f32.mrb[0].mxu0
    %v2123 = vpop.f32.mrb[0].mxu0
    %v2124 = vadd.f32 0.0, %v2123
    %v2125 = vpop.f32.mrb[0].mxu0
    %2126 = vmatprep.mubr.bf16.mxu0 0
    %2127 = vmatmul.mubr.bf16.gmra.mrb[0].mxu0 %v1351
    %v2128 = vpop.f32.mrb[0].mxu0
    %v2129 = vadd.f32 0.0, %v2128
    %v2130 = vpop.f32.mrb[0].mxu0
    %v2131 = vpop.f32.mrb[0].mxu0
    %v2132 = vadd.f32 0.0, %v2131
    %v2133 = vpop.f32.mrb[0].mxu0
    %2134 = vmatprep.mubr.bf16.mxu0 0
    %2135 = vmatmul.mubr.bf16.gmra.mrb[0].mxu0 %v1354
    %v2136 = vpop.f32.mrb[0].mxu0
    %v2137 = vadd.f32 0.0, %v2136
    %v2138 = vpop.f32.mrb[0].mxu0
    %v2139 = vpop.f32.mrb[0].mxu0
    %v2140 = vadd.f32 0.0, %v2139
    %v2141 = vpop.f32.mrb[0].mxu0
    %2142 = vmatprep.mubr.bf16.mxu0 0
    %2143 = vmatmul.mubr.bf16.gmra.mrb[0].mxu0 %v1357
    %v2144 = vpop.f32.mrb[0].mxu0
    %v2145 = vadd.f32 0.0, %v2144
    %v2146 = vpop.f32.mrb[0].mxu0
    %v2147 = vpop.f32.mrb[0].mxu0
    %v2148 = vadd.f32 0.0, %v2147
    %v2149 = vpop.f32.mrb[0].mxu0
    %2150 = vmatprep.mubr.bf16.mxu0 0
    %2151 = vmatmul.mubr.bf16.gmra.mrb[0].mxu0 %v1360
    %v2152 = vpop.f32.mrb[0].mxu0
    %v2153 = vadd.f32 0.0, %v2152
    %v2154 = vpop.f32.mrb[0].mxu0
    %v2155 = vpop.f32.mrb[0].mxu0
    %v2156 = vadd.f32 0.0, %v2155
    %v2157 = vpop.f32.mrb[0].mxu0
    %2158 = vmatprep.mubr.bf16.mxu0 0
    %2159 = vmatmul.mubr.bf16.gmra.mrb[0].mxu0 %v1363
    %v2160 = vpop.f32.mrb[0].mxu0
    %v2161 = vadd.f32 0.0, %v2160
    %v2162 = vpop.f32.mrb[0].mxu0
    %v2163 = vpop.f32.mrb[0].mxu0
    %v2164 = vadd.f32 0.0, %v2163
    %v2165 = vpop.f32.mrb[0].mxu0
    %2166 = vmatprep.mubr.bf16.mxu0 0
    %2167 = vmatmul.mubr.bf16.gmra.mrb[0].mxu0 %v1366
    %v2168 = vpop.f32.mrb[0].mxu0
    %v2169 = vadd.f32 0.0, %v2168
    %v2170 = vpop.f32.mrb[0].mxu0
    %v2171 = vpop.f32.mrb[0].mxu0
    %v2172 = vadd.f32 0.0, %v2171
    %v2173 = vpop.f32.mrb[0].mxu0
    %2174 = vmatprep.mubr.bf16.mxu0 0
    %2175 = vmatmul.mubr.bf16.gmra.mrb[0].mxu0 %v1369
    %v2176 = vpop.f32.mrb[0].mxu0
    %v2177 = vadd.f32 0.0, %v2176
    %v2178 = vpop.f32.mrb[0].mxu0
    %v2179 = vpop.f32.mrb[0].mxu0
    %v2180 = vadd.f32 0.0, %v2179
    %v2181 = vpop.f32.mrb[0].mxu0
    %2182 = vmatprep.mubr.bf16.mxu0 0
    %2183 = vmatmul.mubr.bf16.gmra.mrb[0].mxu0 %v1372
    %v2184 = vpop.f32.mrb[0].mxu0
    %v2185 = vadd.f32 0.0, %v2184
    %v2186 = vpop.f32.mrb[0].mxu0
    %v2187 = vpop.f32.mrb[0].mxu0
    %v2188 = vadd.f32 0.0, %v2187
    %v2189 = vpop.f32.mrb[0].mxu0
    %2190 = vmatprep.mubr.bf16.mxu0 0
    %2191 = vmatmul.mubr.bf16.gmra.mrb[0].mxu0 %v1375
    %v2192 = vpop.f32.mrb[0].mxu0
    %v2193 = vadd.f32 0.0, %v2192
    %v2194 = vpop.f32.mrb[0].mxu0
    %v2195 = vpop.f32.mrb[0].mxu0
    %v2196 = vadd.f32 0.0, %v2195
    %v2197 = vpop.f32.mrb[0].mxu0
    %2198 = vmatprep.mubr.bf16.mxu0 0
    %2199 = vmatmul.mubr.bf16.gmra.mrb[0].mxu0 %v1378
    %v2200 = vpop.f32.mrb[0].mxu0
    %v2201 = vadd.f32 0.0, %v2200
    %v2202 = vpop.f32.mrb[0].mxu0
    %v2203 = vpop.f32.mrb[0].mxu0
    %v2204 = vadd.f32 0.0, %v2203
    %v2205 = vpop.f32.mrb[0].mxu0
    %2206 = vmatprep.mubr.bf16.mxu0 0
    %2207 = vmatmul.mubr.bf16.gmra.mrb[0].mxu0 %v1381
    %v2208 = vpop.f32.mrb[0].mxu0
    %v2209 = vadd.f32 0.0, %v2208
    %v2210 = vpop.f32.mrb[0].mxu0
    %v2211 = vpop.f32.mrb[0].mxu0
    %v2212 = vadd.f32 0.0, %v2211
    %v2213 = vpop.f32.mrb[0].mxu0
    %2214 = vmatprep.mubr.bf16.mxu0 0
    %2215 = vmatmul.mubr.bf16.gmra.mrb[0].mxu0 %v1384
    %v2216 = vpop.f32.mrb[0].mxu0
    %v2217 = vadd.f32 0.0, %v2216
    %v2218 = vpop.f32.mrb[0].mxu0
    %v2219 = vpop.f32.mrb[0].mxu0
    %v2220 = vadd.f32 0.0, %v2219
    %v2221 = vpop.f32.mrb[0].mxu0
    %2222 = vmatprep.mubr.bf16.mxu0 0
    %2223 = vmatmul.mubr.bf16.gmra.mrb[0].mxu0 %v1387
    %v2224 = vpop.f32.mrb[0].mxu0
    %v2225 = vadd.f32 0.0, %v2224
    %v2226 = vpop.f32.mrb[0].mxu0
    %v2227 = vpop.f32.mrb[0].mxu0
    %v2228 = vadd.f32 0.0, %v2227
    %v2229 = vpop.f32.mrb[0].mxu0
    %2230 = vmatprep.mubr.bf16.mxu0 0
    %2231 = vmatmul.mubr.bf16.gmra.mrb[0].mxu0 %v1390
    %v2232 = vpop.f32.mrb[0].mxu0
    %v2233 = vadd.f32 0.0, %v2232
    %v2234 = vpop.f32.mrb[0].mxu0
    %v2235 = vpop.f32.mrb[0].mxu0
    %v2236 = vadd.f32 0.0, %v2235
    %v2237 = vpop.f32.mrb[0].mxu0
    %2238 = vmatprep.mubr.bf16.mxu0 0
    %2239 = vmatmul.mubr.bf16.gmra.mrb[0].mxu0 %v1393
    %v2240 = vpop.f32.mrb[0].mxu0
    %v2241 = vadd.f32 0.0, %v2240
    %v2242 = vpop.f32.mrb[0].mxu0
    %v2243 = vpop.f32.mrb[0].mxu0
    %v2244 = vadd.f32 0.0, %v2243
    %v2245 = vpop.f32.mrb[0].mxu0
    %2246 = vmatprep.mubr.bf16.mxu0 0
    %2247 = vmatmul.mubr.bf16.gmra.mrb[0].mxu0 %v1396
    %v2248 = vpop.f32.mrb[0].mxu0
    %v2249 = vadd.f32 0.0, %v2248
    %v2250 = vpop.f32.mrb[0].mxu0
    %v2251 = vpop.f32.mrb[0].mxu0
    %v2252 = vadd.f32 0.0, %v2251
    %v2253 = vpop.f32.mrb[0].mxu0
    %2254 = vmatprep.mubr.bf16.mxu0 0
    %2255 = vmatmul.mubr.bf16.gmra.mrb[0].mxu0 %v1399
    %v2256 = vpop.f32.mrb[0].mxu0
    %v2257 = vadd.f32 0.0, %v2256
    %v2258 = vpop.f32.mrb[0].mxu0
    %v2259 = vpop.f32.mrb[0].mxu0
    %v2260 = vadd.f32 0.0, %v2259
    %v2261 = vpop.f32.mrb[0].mxu0
    %2262 = vmatprep.mubr.bf16.mxu0 0
    %2263 = vmatmul.mubr.bf16.gmra.mrb[0].mxu0 %v1402
    %v2264 = vpop.f32.mrb[0].mxu0
    %v2265 = vadd.f32 0.0, %v2264
    %v2266 = vpop.f32.mrb[0].mxu0
    %v2267 = vpop.f32.mrb[0].mxu0
    %v2268 = vadd.f32 0.0, %v2267
    %v2269 = vpop.f32.mrb[0].mxu0
    %2270 = vmatprep.mubr.bf16.mxu0 0
    %2271 = vmatmul.mubr.bf16.gmra.mrb[0].mxu0 %v1405
    %v2272 = vpop.f32.mrb[0].mxu0
    %v2273 = vadd.f32 0.0, %v2272
    %v2274 = vpop.f32.mrb[0].mxu0
    %v2275 = vpop.f32.mrb[0].mxu0
    %v2276 = vadd.f32 0.0, %v2275
    %v2277 = vpop.f32.mrb[0].mxu0
    %2278 = vmatprep.mubr.bf16.mxu0 0
    %2279 = vmatmul.mubr.bf16.gmra.mrb[0].mxu0 %v1408
    %v2280 = vpop.f32.mrb[0].mxu0
    %v2281 = vadd.f32 0.0, %v2280
    %v2282 = vpop.f32.mrb[0].mxu0
    %v2283 = vpop.f32.mrb[0].mxu0
    %v2284 = vadd.f32 0.0, %v2283
    %v2285 = vpop.f32.mrb[0].mxu0
    %2286 = vmatprep.mubr.bf16.mxu0 0
    %2287 = vmatmul.mubr.bf16.gmra.mrb[0].mxu0 %v1411
    %v2288 = vpop.f32.mrb[0].mxu0
    %v2289 = vadd.f32 0.0, %v2288
    %v2290 = vpop.f32.mrb[0].mxu0
    %v2291 = vpop.f32.mrb[0].mxu0
    %v2292 = vadd.f32 0.0, %v2291
    %v2293 = vpop.f32.mrb[0].mxu0
    %2294 = vmatprep.mubr.bf16.mxu0 0
    %2295 = vmatmul.mubr.bf16.gmra.mrb[0].mxu0 %v1414
    %v2296 = vpop.f32.mrb[0].mxu0
    %v2297 = vadd.f32 0.0, %v2296
    %v2298 = vpop.f32.mrb[0].mxu0
    %v2299 = vpop.f32.mrb[0].mxu0
    %v2300 = vadd.f32 0.0, %v2299
    %v2301 = vpop.f32.mrb[0].mxu0
    %2302 = vmatprep.mubr.bf16.mxu0 0
    %2303 = vmatmul.mubr.bf16.gmra.mrb[0].mxu0 %v1417
    %v2304 = vpop.f32.mrb[0].mxu0
    %v2305 = vadd.f32 0.0, %v2304
    %v2306 = vpop.f32.mrb[0].mxu0
    %v2307 = vpop.f32.mrb[0].mxu0
    %v2308 = vadd.f32 0.0, %v2307
    %v2309 = vpop.f32.mrb[0].mxu0
    %2310 = vmatprep.mubr.bf16.mxu0 0
    %2311 = vmatmul.mubr.bf16.gmra.mrb[0].mxu0 %v1420
    %v2312 = vpop.f32.mrb[0].mxu0
    %v2313 = vadd.f32 0.0, %v2312
    %v2314 = vpop.f32.mrb[0].mxu0
    %v2315 = vpop.f32.mrb[0].mxu0
    %v2316 = vadd.f32 0.0, %v2315
    %v2317 = vpop.f32.mrb[0].mxu0
    %2318 = vmatprep.mubr.bf16.mxu0 0
    %2319 = vmatmul.mubr.bf16.gmra.mrb[0].mxu0 %v1423
    %v2320 = vpop.f32.mrb[0].mxu0
    %v2321 = vadd.f32 0.0, %v2320
    %v2322 = vpop.f32.mrb[0].mxu0
    %v2323 = vpop.f32.mrb[0].mxu0
    %v2324 = vadd.f32 0.0, %v2323
    %v2325 = vpop.f32.mrb[0].mxu0
    %2326 = vmatprep.mubr.bf16.mxu0 0
    %2327 = vmatmul.mubr.bf16.gmra.mrb[0].mxu0 %v1426
    %v2328 = vpop.f32.mrb[0].mxu0
    %v2329 = vadd.f32 0.0, %v2328
    %v2330 = vpop.f32.mrb[0].mxu0
    %v2331 = vpop.f32.mrb[0].mxu0
    %v2332 = vadd.f32 0.0, %v2331
    %v2333 = vpop.f32.mrb[0].mxu0
    %2334 = vmatprep.mubr.bf16.mxu0 0
    %2335 = vmatmul.mubr.bf16.gmra.mrb[0].mxu0 %v1429
    %v2336 = vpop.f32.mrb[0].mxu0
    %v2337 = vadd.f32 0.0, %v2336
    %v2338 = vpop.f32.mrb[0].mxu0
    %v2339 = vpop.f32.mrb[0].mxu0
    %v2340 = vadd.f32 0.0, %v2339
    %v2341 = vpop.f32.mrb[0].mxu0
    %2342 = vmatprep.mubr.bf16.mxu0 0
    %2343 = vmatmul.mubr.bf16.gmra.mrb[0].mxu0 %v1432
    %v2344 = vpop.f32.mrb[0].mxu0
    %v2345 = vadd.f32 0.0, %v2344
    %v2346 = vpop.f32.mrb[0].mxu0
    %v2347 = vpop.f32.mrb[0].mxu0
    %v2348 = vadd.f32 0.0, %v2347
    %v2349 = vpop.f32.mrb[0].mxu0
    %2350 = vmatprep.mubr.bf16.mxu0 0
    %2351 = vmatmul.mubr.bf16.gmra.mrb[0].mxu0 %v1435
    %v2352 = vpop.f32.mrb[0].mxu0
    %v2353 = vadd.f32 0.0, %v2352
    %v2354 = vpop.f32.mrb[0].mxu0
    %v2355 = vpop.f32.mrb[0].mxu0
    %v2356 = vadd.f32 0.0, %v2355
    %v2357 = vpop.f32.mrb[0].mxu0
    %2358 = vmatprep.mubr.bf16.mxu0 0
    %2359 = vmatmul.mubr.bf16.gmra.mrb[0].mxu0 %v1438
    %v2360 = vpop.f32.mrb[0].mxu0
    %v2361 = vadd.f32 0.0, %v2360
    %v2362 = vpop.f32.mrb[0].mxu0
    %v2363 = vpop.f32.mrb[0].mxu0
    %v2364 = vadd.f32 0.0, %v2363
    %v2365 = vpop.f32.mrb[0].mxu0
    %2366 = vmatprep.mubr.bf16.mxu0 0
    %2367 = vmatmul.mubr.bf16.gmra.mrb[0].mxu0 %v1441
    %v2368 = vpop.f32.mrb[0].mxu0
    %v2369 = vadd.f32 0.0, %v2368
    %v2370 = vpop.f32.mrb[0].mxu0
    %v2371 = vpop.f32.mrb[0].mxu0
    %v2372 = vadd.f32 0.0, %v2371
    %v2373 = vpop.f32.mrb[0].mxu0
    %2374 = vmatprep.mubr.bf16.mxu0 0
    %2375 = vmatmul.mubr.bf16.gmra.mrb[0].mxu0 %v1444
    %v2376 = vpop.f32.mrb[0].mxu0
    %v2377 = vadd.f32 0.0, %v2376
    %v2378 = vpop.f32.mrb[0].mxu0
    %v2379 = vpop.f32.mrb[0].mxu0
    %v2380 = vadd.f32 0.0, %v2379
    %v2381 = vpop.f32.mrb[0].mxu0
    %2382 = vmatprep.mubr.bf16.mxu0 0
    %2383 = vmatmul.mubr.bf16.gmra.mrb[0].mxu0 %v1447
    %v2384 = vpop.f32.mrb[0].mxu0
    %v2385 = vadd.f32 0.0, %v2384
    %v2386 = vpop.f32.mrb[0].mxu0
    %v2387 = vpop.f32.mrb[0].mxu0
    %v2388 = vadd.f32 0.0, %v2387
    %v2389 = vpop.f32.mrb[0].mxu0
    %2390 = vmatprep.mubr.bf16.mxu0 0
    %2391 = vmatmul.mubr.bf16.gmra.mrb[0].mxu0 %v1450
    %v2392 = vpop.f32.mrb[0].mxu0
    %v2393 = vadd.f32 0.0, %v2392
    %v2394 = vpop.f32.mrb[0].mxu0
    %v2395 = vpop.f32.mrb[0].mxu0
    %v2396 = vadd.f32 0.0, %v2395
    %v2397 = vpop.f32.mrb[0].mxu0
    %2398 = vmatprep.mubr.bf16.mxu0 0
    %2399 = vmatmul.mubr.bf16.gmra.mrb[0].mxu0 %v1453
    %v2400 = vpop.f32.mrb[0].mxu0
    %v2401 = vadd.f32 0.0, %v2400
    %v2402 = vpop.f32.mrb[0].mxu0
    %v2403 = vpop.f32.mrb[0].mxu0
    %v2404 = vadd.f32 0.0, %v2403
    %v2405 = vpop.f32.mrb[0].mxu0
    %2406 = vmatprep.mubr.bf16.mxu0 0
    %2407 = vmatmul.mubr.bf16.gmra.mrb[0].mxu0 %v1456
    %v2408 = vpop.f32.mrb[0].mxu0
    %v2409 = vadd.f32 0.0, %v2408
    %v2410 = vpop.f32.mrb[0].mxu0
    %v2411 = vpop.f32.mrb[0].mxu0
    %v2412 = vadd.f32 0.0, %v2411
    %v2413 = vpop.f32.mrb[0].mxu0
    %2414 = vmatprep.mubr.bf16.mxu0 0
    %2415 = vmatmul.mubr.bf16.gmra.mrb[0].mxu0 %v1459
    %v2416 = vpop.f32.mrb[0].mxu0
    %v2417 = vadd.f32 0.0, %v2416
    %v2418 = vpop.f32.mrb[0].mxu0
    %v2419 = vpop.f32.mrb[0].mxu0
    %v2420 = vadd.f32 0.0, %v2419
    %v2421 = vpop.f32.mrb[0].mxu0
    %2422 = vmatprep.mubr.bf16.mxu0 0
    %2423 = vmatmul.mubr.bf16.gmra.mrb[0].mxu0 %v1462
    %v2424 = vpop.f32.mrb[0].mxu0
    %v2425 = vadd.f32 0.0, %v2424
    %v2426 = vpop.f32.mrb[0].mxu0
    %v2427 = vpop.f32.mrb[0].mxu0
    %v2428 = vadd.f32 0.0, %v2427
    %v2429 = vpop.f32.mrb[0].mxu0
    %2430 = vmatprep.mubr.bf16.mxu0 0
    %2431 = vmatmul.mubr.bf16.gmra.mrb[0].mxu0 %v1465
    %v2432 = vpop.f32.mrb[0].mxu0
    %v2433 = vadd.f32 0.0, %v2432
    %v2434 = vpop.f32.mrb[0].mxu0
    %v2435 = vpop.f32.mrb[0].mxu0
    %v2436 = vadd.f32 0.0, %v2435
    %v2437 = vpop.f32.mrb[0].mxu0
    %2438 = vmatprep.mubr.bf16.mxu0 0
    %2439 = vmatmul.mubr.bf16.gmra.mrb[0].mxu0 %v1468
    %v2440 = vpop.f32.mrb[0].mxu0
    %v2441 = vadd.f32 0.0, %v2440
    %v2442 = vpop.f32.mrb[0].mxu0
    %v2443 = vpop.f32.mrb[0].mxu0
    %v2444 = vadd.f32 0.0, %v2443
    %v2445 = vpop.f32.mrb[0].mxu0
    %2446 = vmatprep.mubr.bf16.mxu0 0
    %2447 = vmatmul.mubr.bf16.gmra.mrb[0].mxu0 %v1471
    %v2448 = vpop.f32.mrb[0].mxu0
    %v2449 = vadd.f32 0.0, %v2448
    %v2450 = vpop.f32.mrb[0].mxu0
    %v2451 = vpop.f32.mrb[0].mxu0
    %v2452 = vadd.f32 0.0, %v2451
    %v2453 = vpop.f32.mrb[0].mxu0
    %2454 = vmatprep.mubr.bf16.mxu0 0
    %2455 = vmatmul.mubr.bf16.gmra.mrb[0].mxu0 %v1474
    %v2456 = vpop.f32.mrb[0].mxu0
    %v2457 = vadd.f32 0.0, %v2456
    %v2458 = vpop.f32.mrb[0].mxu0
    %v2459 = vpop.f32.mrb[0].mxu0
    %v2460 = vadd.f32 0.0, %v2459
    %v2461 = vpop.f32.mrb[0].mxu0
    %2462 = vmatprep.mubr.bf16.mxu0 0
    %2463 = vmatmul.mubr.bf16.gmra.mrb[0].mxu0 %v1477
    %v2464 = vpop.f32.mrb[0].mxu0
    %v2465 = vadd.f32 0.0, %v2464
    %v2466 = vpop.f32.mrb[0].mxu0
    %v2467 = vpop.f32.mrb[0].mxu0
    %v2468 = vadd.f32 0.0, %v2467
    %v2469 = vpop.f32.mrb[0].mxu0
    %2470 = vmatprep.mubr.bf16.mxu0 0
    %2471 = vmatmul.mubr.bf16.gmra.mrb[0].mxu0 %v1480
    %v2472 = vpop.f32.mrb[0].mxu0
    %v2473 = vadd.f32 0.0, %v2472
    %v2474 = vpop.f32.mrb[0].mxu0
    %v2475 = vpop.f32.mrb[0].mxu0
    %v2476 = vadd.f32 0.0, %v2475
    %v2477 = vpop.f32.mrb[0].mxu0
    %2478 = vmatprep.mubr.bf16.mxu0 0
    %2479 = vmatmul.mubr.bf16.gmra.mrb[0].mxu0 %v1483
    %v2480 = vpop.f32.mrb[0].mxu0
    %v2481 = vadd.f32 0.0, %v2480
    %v2482 = vpop.f32.mrb[0].mxu0
    %v2483 = vpop.f32.mrb[0].mxu0
    %v2484 = vadd.f32 0.0, %v2483
    %v2485 = vpop.f32.mrb[0].mxu0
    %2486 = vmatprep.mubr.bf16.mxu0 0
    %2487 = vmatmul.mubr.bf16.gmra.mrb[0].mxu0 %v1486
    %v2488 = vpop.f32.mrb[0].mxu0
    %v2489 = vadd.f32 0.0, %v2488
    %v2490 = vpop.f32.mrb[0].mxu0
    %v2491 = vpop.f32.mrb[0].mxu0
    %v2492 = vadd.f32 0.0, %v2491
    %v2493 = vpop.f32.mrb[0].mxu0
    %2494 = vmatprep.mubr.bf16.mxu0 0
    %2495 = vmatmul.mubr.bf16.gmra.mrb[0].mxu0 %v1489
    %v2496 = vpop.f32.mrb[0].mxu0
    %v2497 = vadd.f32 0.0, %v2496
    %v2498 = vpop.f32.mrb[0].mxu0
    %v2499 = vpop.f32.mrb[0].mxu0
    %v2500 = vadd.f32 0.0, %v2499
    %v2501 = vpop.f32.mrb[0].mxu0
    %2502 = vmatprep.mubr.bf16.mxu0 0
    %2503 = vmatmul.mubr.bf16.gmra.mrb[0].mxu0 %v1492
    %v2504 = vpop.f32.mrb[0].mxu0
    %v2505 = vadd.f32 0.0, %v2504
    %v2506 = vpop.f32.mrb[0].mxu0
    %v2507 = vpop.f32.mrb[0].mxu0
    %v2508 = vadd.f32 0.0, %v2507
    %v2509 = vpop.f32.mrb[0].mxu0
    %2510 = vmatprep.mubr.bf16.mxu0 0
    %2511 = vmatmul.mubr.bf16.gmra.mrb[0].mxu0 %v1495
    %v2512 = vpop.f32.mrb[0].mxu0
    %v2513 = vadd.f32 0.0, %v2512
    %v2514 = vpop.f32.mrb[0].mxu0
    %v2515 = vpop.f32.mrb[0].mxu0
    %v2516 = vadd.f32 0.0, %v2515
    %v2517 = vpop.f32.mrb[0].mxu0
    %2518 = vmatprep.mubr.bf16.mxu0 0
    %2519 = vmatmul.mubr.bf16.gmra.mrb[0].mxu0 %v1498
    %v2520 = vpop.f32.mrb[0].mxu0
    %v2521 = vadd.f32 0.0, %v2520
    %v2522 = vpop.f32.mrb[0].mxu0
    %v2523 = vpop.f32.mrb[0].mxu0
    %v2524 = vadd.f32 0.0, %v2523
    %v2525 = vpop.f32.mrb[0].mxu0
    %2526 = vmatprep.mubr.bf16.mxu0 0
    %2527 = vmatmul.mubr.bf16.gmra.mrb[0].mxu0 %v1501
    %v2528 = vpop.f32.mrb[0].mxu0
    %v2529 = vadd.f32 0.0, %v2528
    %v2530 = vpop.f32.mrb[0].mxu0
    %v2531 = vpop.f32.mrb[0].mxu0
    %v2532 = vadd.f32 0.0, %v2531
    %v2533 = vpop.f32.mrb[0].mxu0
    %2534 = vmatprep.mubr.bf16.mxu0 0
    %2535 = vmatmul.mubr.bf16.gmra.mrb[0].mxu0 %v1504
    %v2536 = vpop.f32.mrb[0].mxu0
    %v2537 = vadd.f32 0.0, %v2536
    %v2538 = vpop.f32.mrb[0].mxu0
    %v2539 = vpop.f32.mrb[0].mxu0
    %v2540 = vadd.f32 0.0, %v2539
    %v2541 = vpop.f32.mrb[0].mxu0
    %2542 = vmatprep.mubr.bf16.mxu0 0
    %2543 = vmatmul.mubr.bf16.gmra.mrb[0].mxu0 %v1507
    %v2544 = vpop.f32.mrb[0].mxu0
    %v2545 = vadd.f32 0.0, %v2544
    %v2546 = vpop.f32.mrb[0].mxu0
    %v2547 = vpop.f32.mrb[0].mxu0
    %v2548 = vadd.f32 0.0, %v2547
    %v2549 = vpop.f32.mrb[0].mxu0
    %2550 = vmatprep.mubr.bf16.mxu0 0
    %2551 = vmatmul.mubr.bf16.gmra.mrb[0].mxu0 %v1510
    %v2552 = vpop.f32.mrb[0].mxu0
    %v2553 = vadd.f32 0.0, %v2552
    %v2554 = vpop.f32.mrb[0].mxu0
    %v2555 = vpop.f32.mrb[0].mxu0
    %v2556 = vadd.f32 0.0, %v2555
    %v2557 = vpop.f32.mrb[0].mxu0
    %2558 = vmatprep.mubr.bf16.mxu0 0
    %2559 = vmatmul.mubr.bf16.gmra.mrb[0].mxu0 %v1513
    %v2560 = vpop.f32.mrb[0].mxu0
    %v2561 = vadd.f32 0.0, %v2560
    %v2562 = vpop.f32.mrb[0].mxu0
    %v2563 = vpop.f32.mrb[0].mxu0
    %v2564 = vadd.f32 0.0, %v2563
    %v2565 = vpop.f32.mrb[0].mxu0
    %2566 = vmatprep.mubr.bf16.mxu0 0
    %2567 = vmatmul.mubr.bf16.gmra.mrb[0].mxu0 %v1516
    %v2568 = vpop.f32.mrb[0].mxu0
    %v2569 = vadd.f32 0.0, %v2568
    %v2570 = vpop.f32.mrb[0].mxu0
    %v2571 = vpop.f32.mrb[0].mxu0
    %v2572 = vadd.f32 0.0, %v2571
    %v2573 = vpop.f32.mrb[0].mxu0
    %2574 = vdwg.mxu0
    %v2575 = vadd.f32 %v1553, %v200
    %v2576 = vadd.f32 %v1556, %v203
    %v2577 = vadd.f32 %v1561, %v200
    %v2578 = vadd.f32 %v1564, %v203
    %v2579 = vadd.f32 %v1569, %v200
    %v2580 = vadd.f32 %v1572, %v203
    %v2581 = vadd.f32 %v1577, %v200
    %v2582 = vadd.f32 %v1580, %v203
    %v2583 = vadd.f32 %v1585, %v200
    %v2584 = vadd.f32 %v1588, %v203
    %v2585 = vadd.f32 %v1593, %v200
    %v2586 = vadd.f32 %v1596, %v203
    %v2587 = vadd.f32 %v1601, %v200
    %v2588 = vadd.f32 %v1604, %v203
    %v2589 = vadd.f32 %v1609, %v200
    %v2590 = vadd.f32 %v1612, %v203
    %v2591 = vadd.f32 %v1617, %v200
    %v2592 = vadd.f32 %v1620, %v203
    %v2593 = vadd.f32 %v1625, %v200
    %v2594 = vadd.f32 %v1628, %v203
    %v2595 = vadd.f32 %v1633, %v200
    %v2596 = vadd.f32 %v1636, %v203
    %v2597 = vadd.f32 %v1641, %v200
    %v2598 = vadd.f32 %v1644, %v203
    %v2599 = vadd.f32 %v1649, %v200
    %v2600 = vadd.f32 %v1652, %v203
    %v2601 = vadd.f32 %v1657, %v200
    %v2602 = vadd.f32 %v1660, %v203
    %v2603 = vadd.f32 %v1665, %v200
    %v2604 = vadd.f32 %v1668, %v203
    %v2605 = vadd.f32 %v1673, %v200
    %v2606 = vadd.f32 %v1676, %v203
    %v2607 = vadd.f32 %v1681, %v200
    %v2608 = vadd.f32 %v1684, %v203
    %v2609 = vadd.f32 %v1689, %v200
    %v2610 = vadd.f32 %v1692, %v203
    %v2611 = vadd.f32 %v1697, %v200
    %v2612 = vadd.f32 %v1700, %v203
    %v2613 = vadd.f32 %v1705, %v200
    %v2614 = vadd.f32 %v1708, %v203
    %v2615 = vadd.f32 %v1713, %v200
    %v2616 = vadd.f32 %v1716, %v203
    %v2617 = vadd.f32 %v1721, %v200
    %v2618 = vadd.f32 %v1724, %v203
    %v2619 = vadd.f32 %v1729, %v200
    %v2620 = vadd.f32 %v1732, %v203
    %v2621 = vadd.f32 %v1737, %v200
    %v2622 = vadd.f32 %v1740, %v203
    %v2623 = vadd.f32 %v1745, %v200
    %v2624 = vadd.f32 %v1748, %v203
    %v2625 = vadd.f32 %v1753, %v200
    %v2626 = vadd.f32 %v1756, %v203
    %v2627 = vadd.f32 %v1761, %v200
    %v2628 = vadd.f32 %v1764, %v203
    %v2629 = vadd.f32 %v1769, %v200
    %v2630 = vadd.f32 %v1772, %v203
    %v2631 = vadd.f32 %v1777, %v200
    %v2632 = vadd.f32 %v1780, %v203
    %v2633 = vadd.f32 %v1785, %v200
    %v2634 = vadd.f32 %v1788, %v203
    %v2635 = vadd.f32 %v1793, %v200
    %v2636 = vadd.f32 %v1796, %v203
    %v2637 = vadd.f32 %v1801, %v200
    %v2638 = vadd.f32 %v1804, %v203
    %v2639 = vadd.f32 %v1809, %v200
    %v2640 = vadd.f32 %v1812, %v203
    %v2641 = vadd.f32 %v1817, %v200
    %v2642 = vadd.f32 %v1820, %v203
    %v2643 = vadd.f32 %v1825, %v200
    %v2644 = vadd.f32 %v1828, %v203
    %v2645 = vadd.f32 %v1833, %v200
    %v2646 = vadd.f32 %v1836, %v203
    %v2647 = vadd.f32 %v1841, %v200
    %v2648 = vadd.f32 %v1844, %v203
    %v2649 = vadd.f32 %v1849, %v200
    %v2650 = vadd.f32 %v1852, %v203
    %v2651 = vadd.f32 %v1857, %v200
    %v2652 = vadd.f32 %v1860, %v203
    %v2653 = vadd.f32 %v1865, %v200
    %v2654 = vadd.f32 %v1868, %v203
    %v2655 = vadd.f32 %v1873, %v200
    %v2656 = vadd.f32 %v1876, %v203
    %v2657 = vadd.f32 %v1881, %v200
    %v2658 = vadd.f32 %v1884, %v203
    %v2659 = vadd.f32 %v1889, %v200
    %v2660 = vadd.f32 %v1892, %v203
    %v2661 = vadd.f32 %v1897, %v200
    %v2662 = vadd.f32 %v1900, %v203
    %v2663 = vadd.f32 %v1905, %v200
    %v2664 = vadd.f32 %v1908, %v203
    %v2665 = vadd.f32 %v1913, %v200
    %v2666 = vadd.f32 %v1916, %v203
    %v2667 = vadd.f32 %v1921, %v200
    %v2668 = vadd.f32 %v1924, %v203
    %v2669 = vadd.f32 %v1929, %v200
    %v2670 = vadd.f32 %v1932, %v203
    %v2671 = vadd.f32 %v1937, %v200
    %v2672 = vadd.f32 %v1940, %v203
    %v2673 = vadd.f32 %v1945, %v200
    %v2674 = vadd.f32 %v1948, %v203
    %v2675 = vadd.f32 %v1953, %v200
    %v2676 = vadd.f32 %v1956, %v203
    %v2677 = vadd.f32 %v1961, %v200
    %v2678 = vadd.f32 %v1964, %v203
    %v2679 = vadd.f32 %v1969, %v200
    %v2680 = vadd.f32 %v1972, %v203
    %v2681 = vadd.f32 %v1977, %v200
    %v2682 = vadd.f32 %v1980, %v203
    %v2683 = vadd.f32 %v1985, %v200
    %v2684 = vadd.f32 %v1988, %v203
    %v2685 = vadd.f32 %v1993, %v200
    %v2686 = vadd.f32 %v1996, %v203
    %v2687 = vadd.f32 %v2001, %v200
    %v2688 = vadd.f32 %v2004, %v203
    %v2689 = vadd.f32 %v2009, %v200
    %v2690 = vadd.f32 %v2012, %v203
    %v2691 = vadd.f32 %v2017, %v200
    %v2692 = vadd.f32 %v2020, %v203
    %v2693 = vadd.f32 %v2025, %v200
    %v2694 = vadd.f32 %v2028, %v203
    %v2695 = vadd.f32 %v2033, %v200
    %v2696 = vadd.f32 %v2036, %v203
    %v2697 = vadd.f32 %v2041, %v200
    %v2698 = vadd.f32 %v2044, %v203
    %v2699 = vadd.f32 %v2049, %v200
    %v2700 = vadd.f32 %v2052, %v203
    %v2701 = vadd.f32 %v2057, %v200
    %v2702 = vadd.f32 %v2060, %v203
    %v2703 = vadd.f32 %v2065, %v200
    %v2704 = vadd.f32 %v2068, %v203
    %v2705 = vadd.f32 %v2073, %v200
    %v2706 = vadd.f32 %v2076, %v203
    %v2707 = vadd.f32 %v2081, %v200
    %v2708 = vadd.f32 %v2084, %v203
    %v2709 = vadd.f32 %v2089, %v200
    %v2710 = vadd.f32 %v2092, %v203
    %v2711 = vadd.f32 %v2097, %v200
    %v2712 = vadd.f32 %v2100, %v203
    %v2713 = vadd.f32 %v2105, %v200
    %v2714 = vadd.f32 %v2108, %v203
    %v2715 = vadd.f32 %v2113, %v200
    %v2716 = vadd.f32 %v2116, %v203
    %v2717 = vadd.f32 %v2121, %v200
    %v2718 = vadd.f32 %v2124, %v203
    %v2719 = vadd.f32 %v2129, %v200
    %v2720 = vadd.f32 %v2132, %v203
    %v2721 = vadd.f32 %v2137, %v200
    %v2722 = vadd.f32 %v2140, %v203
    %v2723 = vadd.f32 %v2145, %v200
    %v2724 = vadd.f32 %v2148, %v203
    %v2725 = vadd.f32 %v2153, %v200
    %v2726 = vadd.f32 %v2156, %v203
    %v2727 = vadd.f32 %v2161, %v200
    %v2728 = vadd.f32 %v2164, %v203
    %v2729 = vadd.f32 %v2169, %v200
    %v2730 = vadd.f32 %v2172, %v203
    %v2731 = vadd.f32 %v2177, %v200
    %v2732 = vadd.f32 %v2180, %v203
    %v2733 = vadd.f32 %v2185, %v200
    %v2734 = vadd.f32 %v2188, %v203
    %v2735 = vadd.f32 %v2193, %v200
    %v2736 = vadd.f32 %v2196, %v203
    %v2737 = vadd.f32 %v2201, %v200
    %v2738 = vadd.f32 %v2204, %v203
    %v2739 = vadd.f32 %v2209, %v200
    %v2740 = vadd.f32 %v2212, %v203
    %v2741 = vadd.f32 %v2217, %v200
    %v2742 = vadd.f32 %v2220, %v203
    %v2743 = vadd.f32 %v2225, %v200
    %v2744 = vadd.f32 %v2228, %v203
    %v2745 = vadd.f32 %v2233, %v200
    %v2746 = vadd.f32 %v2236, %v203
    %v2747 = vadd.f32 %v2241, %v200
    %v2748 = vadd.f32 %v2244, %v203
    %v2749 = vadd.f32 %v2249, %v200
    %v2750 = vadd.f32 %v2252, %v203
    %v2751 = vadd.f32 %v2257, %v200
    %v2752 = vadd.f32 %v2260, %v203
    %v2753 = vadd.f32 %v2265, %v200
    %v2754 = vadd.f32 %v2268, %v203
    %v2755 = vadd.f32 %v2273, %v200
    %v2756 = vadd.f32 %v2276, %v203
    %v2757 = vadd.f32 %v2281, %v200
    %v2758 = vadd.f32 %v2284, %v203
    %v2759 = vadd.f32 %v2289, %v200
    %v2760 = vadd.f32 %v2292, %v203
    %v2761 = vadd.f32 %v2297, %v200
    %v2762 = vadd.f32 %v2300, %v203
    %v2763 = vadd.f32 %v2305, %v200
    %v2764 = vadd.f32 %v2308, %v203
    %v2765 = vadd.f32 %v2313, %v200
    %v2766 = vadd.f32 %v2316, %v203
    %v2767 = vadd.f32 %v2321, %v200
    %v2768 = vadd.f32 %v2324, %v203
    %v2769 = vadd.f32 %v2329, %v200
    %v2770 = vadd.f32 %v2332, %v203
    %v2771 = vadd.f32 %v2337, %v200
    %v2772 = vadd.f32 %v2340, %v203
    %v2773 = vadd.f32 %v2345, %v200
    %v2774 = vadd.f32 %v2348, %v203
    %v2775 = vadd.f32 %v2353, %v200
    %v2776 = vadd.f32 %v2356, %v203
    %v2777 = vadd.f32 %v2361, %v200
    %v2778 = vadd.f32 %v2364, %v203
    %v2779 = vadd.f32 %v2369, %v200
    %v2780 = vadd.f32 %v2372, %v203
    %v2781 = vadd.f32 %v2377, %v200
    %v2782 = vadd.f32 %v2380, %v203
    %v2783 = vadd.f32 %v2385, %v200
    %v2784 = vadd.f32 %v2388, %v203
    %v2785 = vadd.f32 %v2393, %v200
    %v2786 = vadd.f32 %v2396, %v203
    %v2787 = vadd.f32 %v2401, %v200
    %v2788 = vadd.f32 %v2404, %v203
    %v2789 = vadd.f32 %v2409, %v200
    %v2790 = vadd.f32 %v2412, %v203
    %v2791 = vadd.f32 %v2417, %v200
    %v2792 = vadd.f32 %v2420, %v203
    %v2793 = vadd.f32 %v2425, %v200
    %v2794 = vadd.f32 %v2428, %v203
    %v2795 = vadd.f32 %v2433, %v200
    %v2796 = vadd.f32 %v2436, %v203
    %v2797 = vadd.f32 %v2441, %v200
    %v2798 = vadd.f32 %v2444, %v203
    %v2799 = vadd.f32 %v2449, %v200
    %v2800 = vadd.f32 %v2452, %v203
    %v2801 = vadd.f32 %v2457, %v200
    %v2802 = vadd.f32 %v2460, %v203
    %v2803 = vadd.f32 %v2465, %v200
    %v2804 = vadd.f32 %v2468, %v203
    %v2805 = vadd.f32 %v2473, %v200
    %v2806 = vadd.f32 %v2476, %v203
    %v2807 = vadd.f32 %v2481, %v200
    %v2808 = vadd.f32 %v2484, %v203
    %v2809 = vadd.f32 %v2489, %v200
    %v2810 = vadd.f32 %v2492, %v203
    %v2811 = vadd.f32 %v2497, %v200
    %v2812 = vadd.f32 %v2500, %v203
    %v2813 = vadd.f32 %v2505, %v200
    %v2814 = vadd.f32 %v2508, %v203
    %v2815 = vadd.f32 %v2513, %v200
    %v2816 = vadd.f32 %v2516, %v203
    %v2817 = vadd.f32 %v2521, %v200
    %v2818 = vadd.f32 %v2524, %v203
    %v2819 = vadd.f32 %v2529, %v200
    %v2820 = vadd.f32 %v2532, %v203
    %v2821 = vadd.f32 %v2537, %v200
    %v2822 = vadd.f32 %v2540, %v203
    %v2823 = vadd.f32 %v2545, %v200
    %v2824 = vadd.f32 %v2548, %v203
    %v2825 = vadd.f32 %v2553, %v200
    %v2826 = vadd.f32 %v2556, %v203
    %v2827 = vadd.f32 %v2561, %v200
    %v2828 = vadd.f32 %v2564, %v203
    %v2829 = vadd.f32 %v2569, %v200
    %v2830 = vadd.f32 %v2572, %v203
    %v2831 = vtanh.pop %v2575
    %v2832 = vtanh.pop %v2576
    %v2833 = vtanh.pop %v2577
    %v2834 = vtanh.pop %v2578
    %v2835 = vtanh.pop %v2579
    %v2836 = vtanh.pop %v2580
    %v2837 = vtanh.pop %v2581
    %v2838 = vtanh.pop %v2582
    %v2839 = vtanh.pop %v2583
    %v2840 = vtanh.pop %v2584
    %v2841 = vtanh.pop %v2585
    %v2842 = vtanh.pop %v2586
    %v2843 = vtanh.pop %v2587
    %v2844 = vtanh.pop %v2588
    %v2845 = vtanh.pop %v2589
    %v2846 = vtanh.pop %v2590
    %v2847 = vtanh.pop %v2591
    %v2848 = vtanh.pop %v2592
    %v2849 = vtanh.pop %v2593
    %v2850 = vtanh.pop %v2594
    %v2851 = vtanh.pop %v2595
    %v2852 = vtanh.pop %v2596
    %v2853 = vtanh.pop %v2597
    %v2854 = vtanh.pop %v2598
    %v2855 = vtanh.pop %v2599
    %v2856 = vtanh.pop %v2600
    %v2857 = vtanh.pop %v2601
    %v2858 = vtanh.pop %v2602
    %v2859 = vtanh.pop %v2603
    %v2860 = vtanh.pop %v2604
    %v2861 = vtanh.pop %v2605
    %v2862 = vtanh.pop %v2606
    %v2863 = vtanh.pop %v2607
    %v2864 = vtanh.pop %v2608
    %v2865 = vtanh.pop %v2609
    %v2866 = vtanh.pop %v2610
    %v2867 = vtanh.pop %v2611
    %v2868 = vtanh.pop %v2612
    %v2869 = vtanh.pop %v2613
    %v2870 = vtanh.pop %v2614
    %v2871 = vtanh.pop %v2615
    %v2872 = vtanh.pop %v2616
    %v2873 = vtanh.pop %v2617
    %v2874 = vtanh.pop %v2618
    %v2875 = vtanh.pop %v2619
    %v2876 = vtanh.pop %v2620
    %v2877 = vtanh.pop %v2621
    %v2878 = vtanh.pop %v2622
    %v2879 = vtanh.pop %v2623
    %v2880 = vtanh.pop %v2624
    %v2881 = vtanh.pop %v2625
    %v2882 = vtanh.pop %v2626
    %v2883 = vtanh.pop %v2627
    %v2884 = vtanh.pop %v2628
    %v2885 = vtanh.pop %v2629
    %v2886 = vtanh.pop %v2630
    %v2887 = vtanh.pop %v2631
    %v2888 = vtanh.pop %v2632
    %v2889 = vtanh.pop %v2633
    %v2890 = vtanh.pop %v2634
    %v2891 = vtanh.pop %v2635
    %v2892 = vtanh.pop %v2636
    %v2893 = vtanh.pop %v2637
    %v2894 = vtanh.pop %v2638
    %v2895 = vtanh.pop %v2639
    %v2896 = vtanh.pop %v2640
    %v2897 = vtanh.pop %v2641
    %v2898 = vtanh.pop %v2642
    %v2899 = vtanh.pop %v2643
    %v2900 = vtanh.pop %v2644
    %v2901 = vtanh.pop %v2645
    %v2902 = vtanh.pop %v2646
    %v2903 = vtanh.pop %v2647
    %v2904 = vtanh.pop %v2648
    %v2905 = vtanh.pop %v2649
    %v2906 = vtanh.pop %v2650
    %v2907 = vtanh.pop %v2651
    %v2908 = vtanh.pop %v2652
    %v2909 = vtanh.pop %v2653
    %v2910 = vtanh.pop %v2654
    %v2911 = vtanh.pop %v2655
    %v2912 = vtanh.pop %v2656
    %v2913 = vtanh.pop %v2657
    %v2914 = vtanh.pop %v2658
    %v2915 = vtanh.pop %v2659
    %v2916 = vtanh.pop %v2660
    %v2917 = vtanh.pop %v2661
    %v2918 = vtanh.pop %v2662
    %v2919 = vtanh.pop %v2663
    %v2920 = vtanh.pop %v2664
    %v2921 = vtanh.pop %v2665
    %v2922 = vtanh.pop %v2666
    %v2923 = vtanh.pop %v2667
    %v2924 = vtanh.pop %v2668
    %v2925 = vtanh.pop %v2669
    %v2926 = vtanh.pop %v2670
    %v2927 = vtanh.pop %v2671
    %v2928 = vtanh.pop %v2672
    %v2929 = vtanh.pop %v2673
    %v2930 = vtanh.pop %v2674
    %v2931 = vtanh.pop %v2675
    %v2932 = vtanh.pop %v2676
    %v2933 = vtanh.pop %v2677
    %v2934 = vtanh.pop %v2678
    %v2935 = vtanh.pop %v2679
    %v2936 = vtanh.pop %v2680
    %v2937 = vtanh.pop %v2681
    %v2938 = vtanh.pop %v2682
    %v2939 = vtanh.pop %v2683
    %v2940 = vtanh.pop %v2684
    %v2941 = vtanh.pop %v2685
    %v2942 = vtanh.pop %v2686
    %v2943 = vtanh.pop %v2687
    %v2944 = vtanh.pop %v2688
    %v2945 = vtanh.pop %v2689
    %v2946 = vtanh.pop %v2690
    %v2947 = vtanh.pop %v2691
    %v2948 = vtanh.pop %v2692
    %v2949 = vtanh.pop %v2693
    %v2950 = vtanh.pop %v2694
    %v2951 = vtanh.pop %v2695
    %v2952 = vtanh.pop %v2696
    %v2953 = vtanh.pop %v2697
    %v2954 = vtanh.pop %v2698
    %v2955 = vtanh.pop %v2699
    %v2956 = vtanh.pop %v2700
    %v2957 = vtanh.pop %v2701
    %v2958 = vtanh.pop %v2702
    %v2959 = vtanh.pop %v2703
    %v2960 = vtanh.pop %v2704
    %v2961 = vtanh.pop %v2705
    %v2962 = vtanh.pop %v2706
    %v2963 = vtanh.pop %v2707
    %v2964 = vtanh.pop %v2708
    %v2965 = vtanh.pop %v2709
    %v2966 = vtanh.pop %v2710
    %v2967 = vtanh.pop %v2711
    %v2968 = vtanh.pop %v2712
    %v2969 = vtanh.pop %v2713
    %v2970 = vtanh.pop %v2714
    %v2971 = vtanh.pop %v2715
    %v2972 = vtanh.pop %v2716
    %v2973 = vtanh.pop %v2717
    %v2974 = vtanh.pop %v2718
    %v2975 = vtanh.pop %v2719
    %v2976 = vtanh.pop %v2720
    %v2977 = vtanh.pop %v2721
    %v2978 = vtanh.pop %v2722
    %v2979 = vtanh.pop %v2723
    %v2980 = vtanh.pop %v2724
    %v2981 = vtanh.pop %v2725
    %v2982 = vtanh.pop %v2726
    %v2983 = vtanh.pop %v2727
    %v2984 = vtanh.pop %v2728
    %v2985 = vtanh.pop %v2729
    %v2986 = vtanh.pop %v2730
    %v2987 = vtanh.pop %v2731
    %v2988 = vtanh.pop %v2732
    %v2989 = vtanh.pop %v2733
    %v2990 = vtanh.pop %v2734
    %v2991 = vtanh.pop %v2735
    %v2992 = vtanh.pop %v2736
    %v2993 = vtanh.pop %v2737
    %v2994 = vtanh.pop %v2738
    %v2995 = vtanh.pop %v2739
    %v2996 = vtanh.pop %v2740
    %v2997 = vtanh.pop %v2741
    %v2998 = vtanh.pop %v2742
    %v2999 = vtanh.pop %v2743
    %v3000 = vtanh.pop %v2744
    %v3001 = vtanh.pop %v2745
    %v3002 = vtanh.pop %v2746
    %v3003 = vtanh.pop %v2747
    %v3004 = vtanh.pop %v2748
    %v3005 = vtanh.pop %v2749
    %v3006 = vtanh.pop %v2750
    %v3007 = vtanh.pop %v2751
    %v3008 = vtanh.pop %v2752
    %v3009 = vtanh.pop %v2753
    %v3010 = vtanh.pop %v2754
    %v3011 = vtanh.pop %v2755
    %v3012 = vtanh.pop %v2756
    %v3013 = vtanh.pop %v2757
    %v3014 = vtanh.pop %v2758
    %v3015 = vtanh.pop %v2759
    %v3016 = vtanh.pop %v2760
    %v3017 = vtanh.pop %v2761
    %v3018 = vtanh.pop %v2762
    %v3019 = vtanh.pop %v2763
    %v3020 = vtanh.pop %v2764
    %v3021 = vtanh.pop %v2765
    %v3022 = vtanh.pop %v2766
    %v3023 = vtanh.pop %v2767
    %v3024 = vtanh.pop %v2768
    %v3025 = vtanh.pop %v2769
    %v3026 = vtanh.pop %v2770
    %v3027 = vtanh.pop %v2771
    %v3028 = vtanh.pop %v2772
    %v3029 = vtanh.pop %v2773
    %v3030 = vtanh.pop %v2774
    %v3031 = vtanh.pop %v2775
    %v3032 = vtanh.pop %v2776
    %v3033 = vtanh.pop %v2777
    %v3034 = vtanh.pop %v2778
    %v3035 = vtanh.pop %v2779
    %v3036 = vtanh.pop %v2780
    %v3037 = vtanh.pop %v2781
    %v3038 = vtanh.pop %v2782
    %v3039 = vtanh.pop %v2783
    %v3040 = vtanh.pop %v2784
    %v3041 = vtanh.pop %v2785
    %v3042 = vtanh.pop %v2786
    %v3043 = vtanh.pop %v2787
    %v3044 = vtanh.pop %v2788
    %v3045 = vtanh.pop %v2789
    %v3046 = vtanh.pop %v2790
    %v3047 = vtanh.pop %v2791
    %v3048 = vtanh.pop %v2792
    %v3049 = vtanh.pop %v2793
    %v3050 = vtanh.pop %v2794
    %v3051 = vtanh.pop %v2795
    %v3052 = vtanh.pop %v2796
    %v3053 = vtanh.pop %v2797
    %v3054 = vtanh.pop %v2798
    %v3055 = vtanh.pop %v2799
    %v3056 = vtanh.pop %v2800
    %v3057 = vtanh.pop %v2801
    %v3058 = vtanh.pop %v2802
    %v3059 = vtanh.pop %v2803
    %v3060 = vtanh.pop %v2804
    %v3061 = vtanh.pop %v2805
    %v3062 = vtanh.pop %v2806
    %v3063 = vtanh.pop %v2807
    %v3064 = vtanh.pop %v2808
    %v3065 = vtanh.pop %v2809
    %v3066 = vtanh.pop %v2810
    %v3067 = vtanh.pop %v2811
    %v3068 = vtanh.pop %v2812
    %v3069 = vtanh.pop %v2813
    %v3070 = vtanh.pop %v2814
    %v3071 = vtanh.pop %v2815
    %v3072 = vtanh.pop %v2816
    %v3073 = vtanh.pop %v2817
    %v3074 = vtanh.pop %v2818
    %v3075 = vtanh.pop %v2819
    %v3076 = vtanh.pop %v2820
    %v3077 = vtanh.pop %v2821
    %v3078 = vtanh.pop %v2822
    %v3079 = vtanh.pop %v2823
    %v3080 = vtanh.pop %v2824
    %v3081 = vtanh.pop %v2825
    %v3082 = vtanh.pop %v2826
    %v3083 = vtanh.pop %v2827
    %v3084 = vtanh.pop %v2828
    %v3085 = vtanh.pop %v2829
    %v3086 = vtanh.pop %v2830
    %v3087 = vld [vmem:[#allocation13] sm:$0x1]
    %v3089 = vlaneseq
    %v3090 = vshrl.u32 %v3089, 7
    %v3091 = vsub.s32 0, %v3090
    %v3092 = vrot.slane %v3087, %v3091
    %v3094 = vmul.f32 %v2831, %v3092
    %v3095 = vmul.f32 %v2832, %v3092
    %v3096 = vmul.f32 %v2833, %v3092
    %v3097 = vmul.f32 %v2834, %v3092
    %v3098 = vmul.f32 %v2835, %v3092
    %v3099 = vmul.f32 %v2836, %v3092
    %v3100 = vmul.f32 %v2837, %v3092
    %v3101 = vmul.f32 %v2838, %v3092
    %v3102 = vmul.f32 %v2839, %v3092
    %v3103 = vmul.f32 %v2840, %v3092
    %v3104 = vmul.f32 %v2841, %v3092
    %v3105 = vmul.f32 %v2842, %v3092
    %v3106 = vmul.f32 %v2843, %v3092
    %v3107 = vmul.f32 %v2844, %v3092
    %v3108 = vmul.f32 %v2845, %v3092
    %v3109 = vmul.f32 %v2846, %v3092
    %v3110 = vmul.f32 %v2847, %v3092
    %v3111 = vmul.f32 %v2848, %v3092
    %v3112 = vmul.f32 %v2849, %v3092
    %v3113 = vmul.f32 %v2850, %v3092
    %v3114 = vmul.f32 %v2851, %v3092
    %v3115 = vmul.f32 %v2852, %v3092
    %v3116 = vmul.f32 %v2853, %v3092
    %v3117 = vmul.f32 %v2854, %v3092
    %v3118 = vmul.f32 %v2855, %v3092
    %v3119 = vmul.f32 %v2856, %v3092
    %v3120 = vmul.f32 %v2857, %v3092
    %v3121 = vmul.f32 %v2858, %v3092
    %v3122 = vmul.f32 %v2859, %v3092
    %v3123 = vmul.f32 %v2860, %v3092
    %v3124 = vmul.f32 %v2861, %v3092
    %v3125 = vmul.f32 %v2862, %v3092
    %v3126 = vmul.f32 %v2863, %v3092
    %v3127 = vmul.f32 %v2864, %v3092
    %v3128 = vmul.f32 %v2865, %v3092
    %v3129 = vmul.f32 %v2866, %v3092
    %v3130 = vmul.f32 %v2867, %v3092
    %v3131 = vmul.f32 %v2868, %v3092
    %v3132 = vmul.f32 %v2869, %v3092
    %v3133 = vmul.f32 %v2870, %v3092
    %v3134 = vmul.f32 %v2871, %v3092
    %v3135 = vmul.f32 %v2872, %v3092
    %v3136 = vmul.f32 %v2873, %v3092
    %v3137 = vmul.f32 %v2874, %v3092
    %v3138 = vmul.f32 %v2875, %v3092
    %v3139 = vmul.f32 %v2876, %v3092
    %v3140 = vmul.f32 %v2877, %v3092
    %v3141 = vmul.f32 %v2878, %v3092
    %v3142 = vmul.f32 %v2879, %v3092
    %v3143 = vmul.f32 %v2880, %v3092
    %v3144 = vmul.f32 %v2881, %v3092
    %v3145 = vmul.f32 %v2882, %v3092
    %v3146 = vmul.f32 %v2883, %v3092
    %v3147 = vmul.f32 %v2884, %v3092
    %v3148 = vmul.f32 %v2885, %v3092
    %v3149 = vmul.f32 %v2886, %v3092
    %v3150 = vmul.f32 %v2887, %v3092
    %v3151 = vmul.f32 %v2888, %v3092
    %v3152 = vmul.f32 %v2889, %v3092
    %v3153 = vmul.f32 %v2890, %v3092
    %v3154 = vmul.f32 %v2891, %v3092
    %v3155 = vmul.f32 %v2892, %v3092
    %v3156 = vmul.f32 %v2893, %v3092
    %v3157 = vmul.f32 %v2894, %v3092
    %v3158 = vmul.f32 %v2895, %v3092
    %v3159 = vmul.f32 %v2896, %v3092
    %v3160 = vmul.f32 %v2897, %v3092
    %v3161 = vmul.f32 %v2898, %v3092
    %v3162 = vmul.f32 %v2899, %v3092
    %v3163 = vmul.f32 %v2900, %v3092
    %v3164 = vmul.f32 %v2901, %v3092
    %v3165 = vmul.f32 %v2902, %v3092
    %v3166 = vmul.f32 %v2903, %v3092
    %v3167 = vmul.f32 %v2904, %v3092
    %v3168 = vmul.f32 %v2905, %v3092
    %v3169 = vmul.f32 %v2906, %v3092
    %v3170 = vmul.f32 %v2907, %v3092
    %v3171 = vmul.f32 %v2908, %v3092
    %v3172 = vmul.f32 %v2909, %v3092
    %v3173 = vmul.f32 %v2910, %v3092
    %v3174 = vmul.f32 %v2911, %v3092
    %v3175 = vmul.f32 %v2912, %v3092
    %v3176 = vmul.f32 %v2913, %v3092
    %v3177 = vmul.f32 %v2914, %v3092
    %v3178 = vmul.f32 %v2915, %v3092
    %v3179 = vmul.f32 %v2916, %v3092
    %v3180 = vmul.f32 %v2917, %v3092
    %v3181 = vmul.f32 %v2918, %v3092
    %v3182 = vmul.f32 %v2919, %v3092
    %v3183 = vmul.f32 %v2920, %v3092
    %v3184 = vmul.f32 %v2921, %v3092
    %v3185 = vmul.f32 %v2922, %v3092
    %v3186 = vmul.f32 %v2923, %v3092
    %v3187 = vmul.f32 %v2924, %v3092
    %v3188 = vmul.f32 %v2925, %v3092
    %v3189 = vmul.f32 %v2926, %v3092
    %v3190 = vmul.f32 %v2927, %v3092
    %v3191 = vmul.f32 %v2928, %v3092
    %v3192 = vmul.f32 %v2929, %v3092
    %v3193 = vmul.f32 %v2930, %v3092
    %v3194 = vmul.f32 %v2931, %v3092
    %v3195 = vmul.f32 %v2932, %v3092
    %v3196 = vmul.f32 %v2933, %v3092
    %v3197 = vmul.f32 %v2934, %v3092
    %v3198 = vmul.f32 %v2935, %v3092
    %v3199 = vmul.f32 %v2936, %v3092
    %v3200 = vmul.f32 %v2937, %v3092
    %v3201 = vmul.f32 %v2938, %v3092
    %v3202 = vmul.f32 %v2939, %v3092
    %v3203 = vmul.f32 %v2940, %v3092
    %v3204 = vmul.f32 %v2941, %v3092
    %v3205 = vmul.f32 %v2942, %v3092
    %v3206 = vmul.f32 %v2943, %v3092
    %v3207 = vmul.f32 %v2944, %v3092
    %v3208 = vmul.f32 %v2945, %v3092
    %v3209 = vmul.f32 %v2946, %v3092
    %v3210 = vmul.f32 %v2947, %v3092
    %v3211 = vmul.f32 %v2948, %v3092
    %v3212 = vmul.f32 %v2949, %v3092
    %v3213 = vmul.f32 %v2950, %v3092
    %v3214 = vmul.f32 %v2951, %v3092
    %v3215 = vmul.f32 %v2952, %v3092
    %v3216 = vmul.f32 %v2953, %v3092
    %v3217 = vmul.f32 %v2954, %v3092
    %v3218 = vmul.f32 %v2955, %v3092
    %v3219 = vmul.f32 %v2956, %v3092
    %v3220 = vmul.f32 %v2957, %v3092
    %v3221 = vmul.f32 %v2958, %v3092
    %v3222 = vmul.f32 %v2959, %v3092
    %v3223 = vmul.f32 %v2960, %v3092
    %v3224 = vmul.f32 %v2961, %v3092
    %v3225 = vmul.f32 %v2962, %v3092
    %v3226 = vmul.f32 %v2963, %v3092
    %v3227 = vmul.f32 %v2964, %v3092
    %v3228 = vmul.f32 %v2965, %v3092
    %v3229 = vmul.f32 %v2966, %v3092
    %v3230 = vmul.f32 %v2967, %v3092
    %v3231 = vmul.f32 %v2968, %v3092
    %v3232 = vmul.f32 %v2969, %v3092
    %v3233 = vmul.f32 %v2970, %v3092
    %v3234 = vmul.f32 %v2971, %v3092
    %v3235 = vmul.f32 %v2972, %v3092
    %v3236 = vmul.f32 %v2973, %v3092
    %v3237 = vmul.f32 %v2974, %v3092
    %v3238 = vmul.f32 %v2975, %v3092
    %v3239 = vmul.f32 %v2976, %v3092
    %v3240 = vmul.f32 %v2977, %v3092
    %v3241 = vmul.f32 %v2978, %v3092
    %v3242 = vmul.f32 %v2979, %v3092
    %v3243 = vmul.f32 %v2980, %v3092
    %v3244 = vmul.f32 %v2981, %v3092
    %v3245 = vmul.f32 %v2982, %v3092
    %v3246 = vmul.f32 %v2983, %v3092
    %v3247 = vmul.f32 %v2984, %v3092
    %v3248 = vmul.f32 %v2985, %v3092
    %v3249 = vmul.f32 %v2986, %v3092
    %v3250 = vmul.f32 %v2987, %v3092
    %v3251 = vmul.f32 %v2988, %v3092
    %v3252 = vmul.f32 %v2989, %v3092
    %v3253 = vmul.f32 %v2990, %v3092
    %v3254 = vmul.f32 %v2991, %v3092
    %v3255 = vmul.f32 %v2992, %v3092
    %v3256 = vmul.f32 %v2993, %v3092
    %v3257 = vmul.f32 %v2994, %v3092
    %v3258 = vmul.f32 %v2995, %v3092
    %v3259 = vmul.f32 %v2996, %v3092
    %v3260 = vmul.f32 %v2997, %v3092
    %v3261 = vmul.f32 %v2998, %v3092
    %v3262 = vmul.f32 %v2999, %v3092
    %v3263 = vmul.f32 %v3000, %v3092
    %v3264 = vmul.f32 %v3001, %v3092
    %v3265 = vmul.f32 %v3002, %v3092
    %v3266 = vmul.f32 %v3003, %v3092
    %v3267 = vmul.f32 %v3004, %v3092
    %v3268 = vmul.f32 %v3005, %v3092
    %v3269 = vmul.f32 %v3006, %v3092
    %v3270 = vmul.f32 %v3007, %v3092
    %v3271 = vmul.f32 %v3008, %v3092
    %v3272 = vmul.f32 %v3009, %v3092
    %v3273 = vmul.f32 %v3010, %v3092
    %v3274 = vmul.f32 %v3011, %v3092
    %v3275 = vmul.f32 %v3012, %v3092
    %v3276 = vmul.f32 %v3013, %v3092
    %v3277 = vmul.f32 %v3014, %v3092
    %v3278 = vmul.f32 %v3015, %v3092
    %v3279 = vmul.f32 %v3016, %v3092
    %v3280 = vmul.f32 %v3017, %v3092
    %v3281 = vmul.f32 %v3018, %v3092
    %v3282 = vmul.f32 %v3019, %v3092
    %v3283 = vmul.f32 %v3020, %v3092
    %v3284 = vmul.f32 %v3021, %v3092
    %v3285 = vmul.f32 %v3022, %v3092
    %v3286 = vmul.f32 %v3023, %v3092
    %v3287 = vmul.f32 %v3024, %v3092
    %v3288 = vmul.f32 %v3025, %v3092
    %v3289 = vmul.f32 %v3026, %v3092
    %v3290 = vmul.f32 %v3027, %v3092
    %v3291 = vmul.f32 %v3028, %v3092
    %v3292 = vmul.f32 %v3029, %v3092
    %v3293 = vmul.f32 %v3030, %v3092
    %v3294 = vmul.f32 %v3031, %v3092
    %v3295 = vmul.f32 %v3032, %v3092
    %v3296 = vmul.f32 %v3033, %v3092
    %v3297 = vmul.f32 %v3034, %v3092
    %v3298 = vmul.f32 %v3035, %v3092
    %v3299 = vmul.f32 %v3036, %v3092
    %v3300 = vmul.f32 %v3037, %v3092
    %v3301 = vmul.f32 %v3038, %v3092
    %v3302 = vmul.f32 %v3039, %v3092
    %v3303 = vmul.f32 %v3040, %v3092
    %v3304 = vmul.f32 %v3041, %v3092
    %v3305 = vmul.f32 %v3042, %v3092
    %v3306 = vmul.f32 %v3043, %v3092
    %v3307 = vmul.f32 %v3044, %v3092
    %v3308 = vmul.f32 %v3045, %v3092
    %v3309 = vmul.f32 %v3046, %v3092
    %v3310 = vmul.f32 %v3047, %v3092
    %v3311 = vmul.f32 %v3048, %v3092
    %v3312 = vmul.f32 %v3049, %v3092
    %v3313 = vmul.f32 %v3050, %v3092
    %v3314 = vmul.f32 %v3051, %v3092
    %v3315 = vmul.f32 %v3052, %v3092
    %v3316 = vmul.f32 %v3053, %v3092
    %v3317 = vmul.f32 %v3054, %v3092
    %v3318 = vmul.f32 %v3055, %v3092
    %v3319 = vmul.f32 %v3056, %v3092
    %v3320 = vmul.f32 %v3057, %v3092
    %v3321 = vmul.f32 %v3058, %v3092
    %v3322 = vmul.f32 %v3059, %v3092
    %v3323 = vmul.f32 %v3060, %v3092
    %v3324 = vmul.f32 %v3061, %v3092
    %v3325 = vmul.f32 %v3062, %v3092
    %v3326 = vmul.f32 %v3063, %v3092
    %v3327 = vmul.f32 %v3064, %v3092
    %v3328 = vmul.f32 %v3065, %v3092
    %v3329 = vmul.f32 %v3066, %v3092
    %v3330 = vmul.f32 %v3067, %v3092
    %v3331 = vmul.f32 %v3068, %v3092
    %v3332 = vmul.f32 %v3069, %v3092
    %v3333 = vmul.f32 %v3070, %v3092
    %v3334 = vmul.f32 %v3071, %v3092
    %v3335 = vmul.f32 %v3072, %v3092
    %v3336 = vmul.f32 %v3073, %v3092
    %v3337 = vmul.f32 %v3074, %v3092
    %v3338 = vmul.f32 %v3075, %v3092
    %v3339 = vmul.f32 %v3076, %v3092
    %v3340 = vmul.f32 %v3077, %v3092
    %v3341 = vmul.f32 %v3078, %v3092
    %v3342 = vmul.f32 %v3079, %v3092
    %v3343 = vmul.f32 %v3080, %v3092
    %v3344 = vmul.f32 %v3081, %v3092
    %v3345 = vmul.f32 %v3082, %v3092
    %v3346 = vmul.f32 %v3083, %v3092
    %v3347 = vmul.f32 %v3084, %v3092
    %v3348 = vmul.f32 %v3085, %v3092
    %v3349 = vmul.f32 %v3086, %v3092
    %v3350 = vsel %vm161, %v3094, 0.0
    %3351 = vadd.xlane.f32.xlu0 %v3350
    %v3352 = vpop.xlane.xlu0 %3351
    %v3353 = vsel %vm161, %v3095, 0.0
    %3354 = vadd.xlane.f32.xlu0 %v3353
    %v3355 = vpop.xlane.xlu0 %3354
    %v3356 = vsel %vm161, %v3096, 0.0
    %3357 = vadd.xlane.f32.xlu0 %v3356
    %v3358 = vpop.xlane.xlu0 %3357
    %v3359 = vsel %vm161, %v3097, 0.0
    %3360 = vadd.xlane.f32.xlu0 %v3359
    %v3361 = vpop.xlane.xlu0 %3360
    %v3362 = vsel %vm161, %v3098, 0.0
    %3363 = vadd.xlane.f32.xlu0 %v3362
    %v3364 = vpop.xlane.xlu0 %3363
    %v3365 = vsel %vm161, %v3099, 0.0
    %3366 = vadd.xlane.f32.xlu0 %v3365
    %v3367 = vpop.xlane.xlu0 %3366
    %v3368 = vsel %vm161, %v3100, 0.0
    %3369 = vadd.xlane.f32.xlu0 %v3368
    %v3370 = vpop.xlane.xlu0 %3369
    %v3371 = vsel %vm161, %v3101, 0.0
    %3372 = vadd.xlane.f32.xlu0 %v3371
    %v3373 = vpop.xlane.xlu0 %3372
    %v3374 = vsel %vm161, %v3102, 0.0
    %3375 = vadd.xlane.f32.xlu0 %v3374
    %v3376 = vpop.xlane.xlu0 %3375
    %v3377 = vsel %vm161, %v3103, 0.0
    %3378 = vadd.xlane.f32.xlu0 %v3377
    %v3379 = vpop.xlane.xlu0 %3378
    %v3380 = vsel %vm161, %v3104, 0.0
    %3381 = vadd.xlane.f32.xlu0 %v3380
    %v3382 = vpop.xlane.xlu0 %3381
    %v3383 = vsel %vm161, %v3105, 0.0
    %3384 = vadd.xlane.f32.xlu0 %v3383
    %v3385 = vpop.xlane.xlu0 %3384
    %v3386 = vsel %vm161, %v3106, 0.0
    %3387 = vadd.xlane.f32.xlu0 %v3386
    %v3388 = vpop.xlane.xlu0 %3387
    %v3389 = vsel %vm161, %v3107, 0.0
    %3390 = vadd.xlane.f32.xlu0 %v3389
    %v3391 = vpop.xlane.xlu0 %3390
    %v3392 = vsel %vm161, %v3108, 0.0
    %3393 = vadd.xlane.f32.xlu0 %v3392
    %v3394 = vpop.xlane.xlu0 %3393
    %v3395 = vsel %vm161, %v3109, 0.0
    %3396 = vadd.xlane.f32.xlu0 %v3395
    %v3397 = vpop.xlane.xlu0 %3396
    %v3398 = vsel %vm161, %v3110, 0.0
    %3399 = vadd.xlane.f32.xlu0 %v3398
    %v3400 = vpop.xlane.xlu0 %3399
    %v3401 = vsel %vm161, %v3111, 0.0
    %3402 = vadd.xlane.f32.xlu0 %v3401
    %v3403 = vpop.xlane.xlu0 %3402
    %v3404 = vsel %vm161, %v3112, 0.0
    %3405 = vadd.xlane.f32.xlu0 %v3404
    %v3406 = vpop.xlane.xlu0 %3405
    %v3407 = vsel %vm161, %v3113, 0.0
    %3408 = vadd.xlane.f32.xlu0 %v3407
    %v3409 = vpop.xlane.xlu0 %3408
    %v3410 = vsel %vm161, %v3114, 0.0
    %3411 = vadd.xlane.f32.xlu0 %v3410
    %v3412 = vpop.xlane.xlu0 %3411
    %v3413 = vsel %vm161, %v3115, 0.0
    %3414 = vadd.xlane.f32.xlu0 %v3413
    %v3415 = vpop.xlane.xlu0 %3414
    %v3416 = vsel %vm161, %v3116, 0.0
    %3417 = vadd.xlane.f32.xlu0 %v3416
    %v3418 = vpop.xlane.xlu0 %3417
    %v3419 = vsel %vm161, %v3117, 0.0
    %3420 = vadd.xlane.f32.xlu0 %v3419
    %v3421 = vpop.xlane.xlu0 %3420
    %v3422 = vsel %vm161, %v3118, 0.0
    %3423 = vadd.xlane.f32.xlu0 %v3422
    %v3424 = vpop.xlane.xlu0 %3423
    %v3425 = vsel %vm161, %v3119, 0.0
    %3426 = vadd.xlane.f32.xlu0 %v3425
    %v3427 = vpop.xlane.xlu0 %3426
    %v3428 = vsel %vm161, %v3120, 0.0
    %3429 = vadd.xlane.f32.xlu0 %v3428
    %v3430 = vpop.xlane.xlu0 %3429
    %v3431 = vsel %vm161, %v3121, 0.0
    %3432 = vadd.xlane.f32.xlu0 %v3431
    %v3433 = vpop.xlane.xlu0 %3432
    %v3434 = vsel %vm161, %v3122, 0.0
    %3435 = vadd.xlane.f32.xlu0 %v3434
    %v3436 = vpop.xlane.xlu0 %3435
    %v3437 = vsel %vm161, %v3123, 0.0
    %3438 = vadd.xlane.f32.xlu0 %v3437
    %v3439 = vpop.xlane.xlu0 %3438
    %v3440 = vsel %vm161, %v3124, 0.0
    %3441 = vadd.xlane.f32.xlu0 %v3440
    %v3442 = vpop.xlane.xlu0 %3441
    %v3443 = vsel %vm161, %v3125, 0.0
    %3444 = vadd.xlane.f32.xlu0 %v3443
    %v3445 = vpop.xlane.xlu0 %3444
    %v3446 = vsel %vm161, %v3126, 0.0
    %3447 = vadd.xlane.f32.xlu0 %v3446
    %v3448 = vpop.xlane.xlu0 %3447
    %v3449 = vsel %vm161, %v3127, 0.0
    %3450 = vadd.xlane.f32.xlu0 %v3449
    %v3451 = vpop.xlane.xlu0 %3450
    %v3452 = vsel %vm161, %v3128, 0.0
    %3453 = vadd.xlane.f32.xlu0 %v3452
    %v3454 = vpop.xlane.xlu0 %3453
    %v3455 = vsel %vm161, %v3129, 0.0
    %3456 = vadd.xlane.f32.xlu0 %v3455
    %v3457 = vpop.xlane.xlu0 %3456
    %v3458 = vsel %vm161, %v3130, 0.0
    %3459 = vadd.xlane.f32.xlu0 %v3458
    %v3460 = vpop.xlane.xlu0 %3459
    %v3461 = vsel %vm161, %v3131, 0.0
    %3462 = vadd.xlane.f32.xlu0 %v3461
    %v3463 = vpop.xlane.xlu0 %3462
    %v3464 = vsel %vm161, %v3132, 0.0
    %3465 = vadd.xlane.f32.xlu0 %v3464
    %v3466 = vpop.xlane.xlu0 %3465
    %v3467 = vsel %vm161, %v3133, 0.0
    %3468 = vadd.xlane.f32.xlu0 %v3467
    %v3469 = vpop.xlane.xlu0 %3468
    %v3470 = vsel %vm161, %v3134, 0.0
    %3471 = vadd.xlane.f32.xlu0 %v3470
    %v3472 = vpop.xlane.xlu0 %3471
    %v3473 = vsel %vm161, %v3135, 0.0
    %3474 = vadd.xlane.f32.xlu0 %v3473
    %v3475 = vpop.xlane.xlu0 %3474
    %v3476 = vsel %vm161, %v3136, 0.0
    %3477 = vadd.xlane.f32.xlu0 %v3476
    %v3478 = vpop.xlane.xlu0 %3477
    %v3479 = vsel %vm161, %v3137, 0.0
    %3480 = vadd.xlane.f32.xlu0 %v3479
    %v3481 = vpop.xlane.xlu0 %3480
    %v3482 = vsel %vm161, %v3138, 0.0
    %3483 = vadd.xlane.f32.xlu0 %v3482
    %v3484 = vpop.xlane.xlu0 %3483
    %v3485 = vsel %vm161, %v3139, 0.0
    %3486 = vadd.xlane.f32.xlu0 %v3485
    %v3487 = vpop.xlane.xlu0 %3486
    %v3488 = vsel %vm161, %v3140, 0.0
    %3489 = vadd.xlane.f32.xlu0 %v3488
    %v3490 = vpop.xlane.xlu0 %3489
    %v3491 = vsel %vm161, %v3141, 0.0
    %3492 = vadd.xlane.f32.xlu0 %v3491
    %v3493 = vpop.xlane.xlu0 %3492
    %v3494 = vsel %vm161, %v3142, 0.0
    %3495 = vadd.xlane.f32.xlu0 %v3494
    %v3496 = vpop.xlane.xlu0 %3495
    %v3497 = vsel %vm161, %v3143, 0.0
    %3498 = vadd.xlane.f32.xlu0 %v3497
    %v3499 = vpop.xlane.xlu0 %3498
    %v3500 = vsel %vm161, %v3144, 0.0
    %3501 = vadd.xlane.f32.xlu0 %v3500
    %v3502 = vpop.xlane.xlu0 %3501
    %v3503 = vsel %vm161, %v3145, 0.0
    %3504 = vadd.xlane.f32.xlu0 %v3503
    %v3505 = vpop.xlane.xlu0 %3504
    %v3506 = vsel %vm161, %v3146, 0.0
    %3507 = vadd.xlane.f32.xlu0 %v3506
    %v3508 = vpop.xlane.xlu0 %3507
    %v3509 = vsel %vm161, %v3147, 0.0
    %3510 = vadd.xlane.f32.xlu0 %v3509
    %v3511 = vpop.xlane.xlu0 %3510
    %v3512 = vsel %vm161, %v3148, 0.0
    %3513 = vadd.xlane.f32.xlu0 %v3512
    %v3514 = vpop.xlane.xlu0 %3513
    %v3515 = vsel %vm161, %v3149, 0.0
    %3516 = vadd.xlane.f32.xlu0 %v3515
    %v3517 = vpop.xlane.xlu0 %3516
    %v3518 = vsel %vm161, %v3150, 0.0
    %3519 = vadd.xlane.f32.xlu0 %v3518
    %v3520 = vpop.xlane.xlu0 %3519
    %v3521 = vsel %vm161, %v3151, 0.0
    %3522 = vadd.xlane.f32.xlu0 %v3521
    %v3523 = vpop.xlane.xlu0 %3522
    %v3524 = vsel %vm161, %v3152, 0.0
    %3525 = vadd.xlane.f32.xlu0 %v3524
    %v3526 = vpop.xlane.xlu0 %3525
    %v3527 = vsel %vm161, %v3153, 0.0
    %3528 = vadd.xlane.f32.xlu0 %v3527
    %v3529 = vpop.xlane.xlu0 %3528
    %v3530 = vsel %vm161, %v3154, 0.0
    %3531 = vadd.xlane.f32.xlu0 %v3530
    %v3532 = vpop.xlane.xlu0 %3531
    %v3533 = vsel %vm161, %v3155, 0.0
    %3534 = vadd.xlane.f32.xlu0 %v3533
    %v3535 = vpop.xlane.xlu0 %3534
    %v3536 = vsel %vm161, %v3156, 0.0
    %3537 = vadd.xlane.f32.xlu0 %v3536
    %v3538 = vpop.xlane.xlu0 %3537
    %v3539 = vsel %vm161, %v3157, 0.0
    %3540 = vadd.xlane.f32.xlu0 %v3539
    %v3541 = vpop.xlane.xlu0 %3540
    %v3542 = vsel %vm161, %v3158, 0.0
    %3543 = vadd.xlane.f32.xlu0 %v3542
    %v3544 = vpop.xlane.xlu0 %3543
    %v3545 = vsel %vm161, %v3159, 0.0
    %3546 = vadd.xlane.f32.xlu0 %v3545
    %v3547 = vpop.xlane.xlu0 %3546
    %v3548 = vsel %vm161, %v3160, 0.0
    %3549 = vadd.xlane.f32.xlu0 %v3548
    %v3550 = vpop.xlane.xlu0 %3549
    %v3551 = vsel %vm161, %v3161, 0.0
    %3552 = vadd.xlane.f32.xlu0 %v3551
    %v3553 = vpop.xlane.xlu0 %3552
    %v3554 = vsel %vm161, %v3162, 0.0
    %3555 = vadd.xlane.f32.xlu0 %v3554
    %v3556 = vpop.xlane.xlu0 %3555
    %v3557 = vsel %vm161, %v3163, 0.0
    %3558 = vadd.xlane.f32.xlu0 %v3557
    %v3559 = vpop.xlane.xlu0 %3558
    %v3560 = vsel %vm161, %v3164, 0.0
    %3561 = vadd.xlane.f32.xlu0 %v3560
    %v3562 = vpop.xlane.xlu0 %3561
    %v3563 = vsel %vm161, %v3165, 0.0
    %3564 = vadd.xlane.f32.xlu0 %v3563
    %v3565 = vpop.xlane.xlu0 %3564
    %v3566 = vsel %vm161, %v3166, 0.0
    %3567 = vadd.xlane.f32.xlu0 %v3566
    %v3568 = vpop.xlane.xlu0 %3567
    %v3569 = vsel %vm161, %v3167, 0.0
    %3570 = vadd.xlane.f32.xlu0 %v3569
    %v3571 = vpop.xlane.xlu0 %3570
    %v3572 = vsel %vm161, %v3168, 0.0
    %3573 = vadd.xlane.f32.xlu0 %v3572
    %v3574 = vpop.xlane.xlu0 %3573
    %v3575 = vsel %vm161, %v3169, 0.0
    %3576 = vadd.xlane.f32.xlu0 %v3575
    %v3577 = vpop.xlane.xlu0 %3576
    %v3578 = vsel %vm161, %v3170, 0.0
    %3579 = vadd.xlane.f32.xlu0 %v3578
    %v3580 = vpop.xlane.xlu0 %3579
    %v3581 = vsel %vm161, %v3171, 0.0
    %3582 = vadd.xlane.f32.xlu0 %v3581
    %v3583 = vpop.xlane.xlu0 %3582
    %v3584 = vsel %vm161, %v3172, 0.0
    %3585 = vadd.xlane.f32.xlu0 %v3584
    %v3586 = vpop.xlane.xlu0 %3585
    %v3587 = vsel %vm161, %v3173, 0.0
    %3588 = vadd.xlane.f32.xlu0 %v3587
    %v3589 = vpop.xlane.xlu0 %3588
    %v3590 = vsel %vm161, %v3174, 0.0
    %3591 = vadd.xlane.f32.xlu0 %v3590
    %v3592 = vpop.xlane.xlu0 %3591
    %v3593 = vsel %vm161, %v3175, 0.0
    %3594 = vadd.xlane.f32.xlu0 %v3593
    %v3595 = vpop.xlane.xlu0 %3594
    %v3596 = vsel %vm161, %v3176, 0.0
    %3597 = vadd.xlane.f32.xlu0 %v3596
    %v3598 = vpop.xlane.xlu0 %3597
    %v3599 = vsel %vm161, %v3177, 0.0
    %3600 = vadd.xlane.f32.xlu0 %v3599
    %v3601 = vpop.xlane.xlu0 %3600
    %v3602 = vsel %vm161, %v3178, 0.0
    %3603 = vadd.xlane.f32.xlu0 %v3602
    %v3604 = vpop.xlane.xlu0 %3603
    %v3605 = vsel %vm161, %v3179, 0.0
    %3606 = vadd.xlane.f32.xlu0 %v3605
    %v3607 = vpop.xlane.xlu0 %3606
    %v3608 = vsel %vm161, %v3180, 0.0
    %3609 = vadd.xlane.f32.xlu0 %v3608
    %v3610 = vpop.xlane.xlu0 %3609
    %v3611 = vsel %vm161, %v3181, 0.0
    %3612 = vadd.xlane.f32.xlu0 %v3611
    %v3613 = vpop.xlane.xlu0 %3612
    %v3614 = vsel %vm161, %v3182, 0.0
    %3615 = vadd.xlane.f32.xlu0 %v3614
    %v3616 = vpop.xlane.xlu0 %3615
    %v3617 = vsel %vm161, %v3183, 0.0
    %3618 = vadd.xlane.f32.xlu0 %v3617
    %v3619 = vpop.xlane.xlu0 %3618
    %v3620 = vsel %vm161, %v3184, 0.0
    %3621 = vadd.xlane.f32.xlu0 %v3620
    %v3622 = vpop.xlane.xlu0 %3621
    %v3623 = vsel %vm161, %v3185, 0.0
    %3624 = vadd.xlane.f32.xlu0 %v3623
    %v3625 = vpop.xlane.xlu0 %3624
    %v3626 = vsel %vm161, %v3186, 0.0
    %3627 = vadd.xlane.f32.xlu0 %v3626
    %v3628 = vpop.xlane.xlu0 %3627
    %v3629 = vsel %vm161, %v3187, 0.0
    %3630 = vadd.xlane.f32.xlu0 %v3629
    %v3631 = vpop.xlane.xlu0 %3630
    %v3632 = vsel %vm161, %v3188, 0.0
    %3633 = vadd.xlane.f32.xlu0 %v3632
    %v3634 = vpop.xlane.xlu0 %3633
    %v3635 = vsel %vm161, %v3189, 0.0
    %3636 = vadd.xlane.f32.xlu0 %v3635
    %v3637 = vpop.xlane.xlu0 %3636
    %v3638 = vsel %vm161, %v3190, 0.0
    %3639 = vadd.xlane.f32.xlu0 %v3638
    %v3640 = vpop.xlane.xlu0 %3639
    %v3641 = vsel %vm161, %v3191, 0.0
    %3642 = vadd.xlane.f32.xlu0 %v3641
    %v3643 = vpop.xlane.xlu0 %3642
    %v3644 = vsel %vm161, %v3192, 0.0
    %3645 = vadd.xlane.f32.xlu0 %v3644
    %v3646 = vpop.xlane.xlu0 %3645
    %v3647 = vsel %vm161, %v3193, 0.0
    %3648 = vadd.xlane.f32.xlu0 %v3647
    %v3649 = vpop.xlane.xlu0 %3648
    %v3650 = vsel %vm161, %v3194, 0.0
    %3651 = vadd.xlane.f32.xlu0 %v3650
    %v3652 = vpop.xlane.xlu0 %3651
    %v3653 = vsel %vm161, %v3195, 0.0
    %3654 = vadd.xlane.f32.xlu0 %v3653
    %v3655 = vpop.xlane.xlu0 %3654
    %v3656 = vsel %vm161, %v3196, 0.0
    %3657 = vadd.xlane.f32.xlu0 %v3656
    %v3658 = vpop.xlane.xlu0 %3657
    %v3659 = vsel %vm161, %v3197, 0.0
    %3660 = vadd.xlane.f32.xlu0 %v3659
    %v3661 = vpop.xlane.xlu0 %3660
    %v3662 = vsel %vm161, %v3198, 0.0
    %3663 = vadd.xlane.f32.xlu0 %v3662
    %v3664 = vpop.xlane.xlu0 %3663
    %v3665 = vsel %vm161, %v3199, 0.0
    %3666 = vadd.xlane.f32.xlu0 %v3665
    %v3667 = vpop.xlane.xlu0 %3666
    %v3668 = vsel %vm161, %v3200, 0.0
    %3669 = vadd.xlane.f32.xlu0 %v3668
    %v3670 = vpop.xlane.xlu0 %3669
    %v3671 = vsel %vm161, %v3201, 0.0
    %3672 = vadd.xlane.f32.xlu0 %v3671
    %v3673 = vpop.xlane.xlu0 %3672
    %v3674 = vsel %vm161, %v3202, 0.0
    %3675 = vadd.xlane.f32.xlu0 %v3674
    %v3676 = vpop.xlane.xlu0 %3675
    %v3677 = vsel %vm161, %v3203, 0.0
    %3678 = vadd.xlane.f32.xlu0 %v3677
    %v3679 = vpop.xlane.xlu0 %3678
    %v3680 = vsel %vm161, %v3204, 0.0
    %3681 = vadd.xlane.f32.xlu0 %v3680
    %v3682 = vpop.xlane.xlu0 %3681
    %v3683 = vsel %vm161, %v3205, 0.0
    %3684 = vadd.xlane.f32.xlu0 %v3683
    %v3685 = vpop.xlane.xlu0 %3684
    %v3686 = vsel %vm161, %v3206, 0.0
    %3687 = vadd.xlane.f32.xlu0 %v3686
    %v3688 = vpop.xlane.xlu0 %3687
    %v3689 = vsel %vm161, %v3207, 0.0
    %3690 = vadd.xlane.f32.xlu0 %v3689
    %v3691 = vpop.xlane.xlu0 %3690
    %v3692 = vsel %vm161, %v3208, 0.0
    %3693 = vadd.xlane.f32.xlu0 %v3692
    %v3694 = vpop.xlane.xlu0 %3693
    %v3695 = vsel %vm161, %v3209, 0.0
    %3696 = vadd.xlane.f32.xlu0 %v3695
    %v3697 = vpop.xlane.xlu0 %3696
    %v3698 = vsel %vm161, %v3210, 0.0
    %3699 = vadd.xlane.f32.xlu0 %v3698
    %v3700 = vpop.xlane.xlu0 %3699
    %v3701 = vsel %vm161, %v3211, 0.0
    %3702 = vadd.xlane.f32.xlu0 %v3701
    %v3703 = vpop.xlane.xlu0 %3702
    %v3704 = vsel %vm161, %v3212, 0.0
    %3705 = vadd.xlane.f32.xlu0 %v3704
    %v3706 = vpop.xlane.xlu0 %3705
    %v3707 = vsel %vm161, %v3213, 0.0
    %3708 = vadd.xlane.f32.xlu0 %v3707
    %v3709 = vpop.xlane.xlu0 %3708
    %v3710 = vsel %vm161, %v3214, 0.0
    %3711 = vadd.xlane.f32.xlu0 %v3710
    %v3712 = vpop.xlane.xlu0 %3711
    %v3713 = vsel %vm161, %v3215, 0.0
    %3714 = vadd.xlane.f32.xlu0 %v3713
    %v3715 = vpop.xlane.xlu0 %3714
    %v3716 = vsel %vm161, %v3216, 0.0
    %3717 = vadd.xlane.f32.xlu0 %v3716
    %v3718 = vpop.xlane.xlu0 %3717
    %v3719 = vsel %vm161, %v3217, 0.0
    %3720 = vadd.xlane.f32.xlu0 %v3719
    %v3721 = vpop.xlane.xlu0 %3720
    %v3722 = vsel %vm161, %v3218, 0.0
    %3723 = vadd.xlane.f32.xlu0 %v3722
    %v3724 = vpop.xlane.xlu0 %3723
    %v3725 = vsel %vm161, %v3219, 0.0
    %3726 = vadd.xlane.f32.xlu0 %v3725
    %v3727 = vpop.xlane.xlu0 %3726
    %v3728 = vsel %vm161, %v3220, 0.0
    %3729 = vadd.xlane.f32.xlu0 %v3728
    %v3730 = vpop.xlane.xlu0 %3729
    %v3731 = vsel %vm161, %v3221, 0.0
    %3732 = vadd.xlane.f32.xlu0 %v3731
    %v3733 = vpop.xlane.xlu0 %3732
    %v3734 = vsel %vm161, %v3222, 0.0
    %3735 = vadd.xlane.f32.xlu0 %v3734
    %v3736 = vpop.xlane.xlu0 %3735
    %v3737 = vsel %vm161, %v3223, 0.0
    %3738 = vadd.xlane.f32.xlu0 %v3737
    %v3739 = vpop.xlane.xlu0 %3738
    %v3740 = vsel %vm161, %v3224, 0.0
    %3741 = vadd.xlane.f32.xlu0 %v3740
    %v3742 = vpop.xlane.xlu0 %3741
    %v3743 = vsel %vm161, %v3225, 0.0
    %3744 = vadd.xlane.f32.xlu0 %v3743
    %v3745 = vpop.xlane.xlu0 %3744
    %v3746 = vsel %vm161, %v3226, 0.0
    %3747 = vadd.xlane.f32.xlu0 %v3746
    %v3748 = vpop.xlane.xlu0 %3747
    %v3749 = vsel %vm161, %v3227, 0.0
    %3750 = vadd.xlane.f32.xlu0 %v3749
    %v3751 = vpop.xlane.xlu0 %3750
    %v3752 = vsel %vm161, %v3228, 0.0
    %3753 = vadd.xlane.f32.xlu0 %v3752
    %v3754 = vpop.xlane.xlu0 %3753
    %v3755 = vsel %vm161, %v3229, 0.0
    %3756 = vadd.xlane.f32.xlu0 %v3755
    %v3757 = vpop.xlane.xlu0 %3756
    %v3758 = vsel %vm161, %v3230, 0.0
    %3759 = vadd.xlane.f32.xlu0 %v3758
    %v3760 = vpop.xlane.xlu0 %3759
    %v3761 = vsel %vm161, %v3231, 0.0
    %3762 = vadd.xlane.f32.xlu0 %v3761
    %v3763 = vpop.xlane.xlu0 %3762
    %v3764 = vsel %vm161, %v3232, 0.0
    %3765 = vadd.xlane.f32.xlu0 %v3764
    %v3766 = vpop.xlane.xlu0 %3765
    %v3767 = vsel %vm161, %v3233, 0.0
    %3768 = vadd.xlane.f32.xlu0 %v3767
    %v3769 = vpop.xlane.xlu0 %3768
    %v3770 = vsel %vm161, %v3234, 0.0
    %3771 = vadd.xlane.f32.xlu0 %v3770
    %v3772 = vpop.xlane.xlu0 %3771
    %v3773 = vsel %vm161, %v3235, 0.0
    %3774 = vadd.xlane.f32.xlu0 %v3773
    %v3775 = vpop.xlane.xlu0 %3774
    %v3776 = vsel %vm161, %v3236, 0.0
    %3777 = vadd.xlane.f32.xlu0 %v3776
    %v3778 = vpop.xlane.xlu0 %3777
    %v3779 = vsel %vm161, %v3237, 0.0
    %3780 = vadd.xlane.f32.xlu0 %v3779
    %v3781 = vpop.xlane.xlu0 %3780
    %v3782 = vsel %vm161, %v3238, 0.0
    %3783 = vadd.xlane.f32.xlu0 %v3782
    %v3784 = vpop.xlane.xlu0 %3783
    %v3785 = vsel %vm161, %v3239, 0.0
    %3786 = vadd.xlane.f32.xlu0 %v3785
    %v3787 = vpop.xlane.xlu0 %3786
    %v3788 = vsel %vm161, %v3240, 0.0
    %3789 = vadd.xlane.f32.xlu0 %v3788
    %v3790 = vpop.xlane.xlu0 %3789
    %v3791 = vsel %vm161, %v3241, 0.0
    %3792 = vadd.xlane.f32.xlu0 %v3791
    %v3793 = vpop.xlane.xlu0 %3792
    %v3794 = vsel %vm161, %v3242, 0.0
    %3795 = vadd.xlane.f32.xlu0 %v3794
    %v3796 = vpop.xlane.xlu0 %3795
    %v3797 = vsel %vm161, %v3243, 0.0
    %3798 = vadd.xlane.f32.xlu0 %v3797
    %v3799 = vpop.xlane.xlu0 %3798
    %v3800 = vsel %vm161, %v3244, 0.0
    %3801 = vadd.xlane.f32.xlu0 %v3800
    %v3802 = vpop.xlane.xlu0 %3801
    %v3803 = vsel %vm161, %v3245, 0.0
    %3804 = vadd.xlane.f32.xlu0 %v3803
    %v3805 = vpop.xlane.xlu0 %3804
    %v3806 = vsel %vm161, %v3246, 0.0
    %3807 = vadd.xlane.f32.xlu0 %v3806
    %v3808 = vpop.xlane.xlu0 %3807
    %v3809 = vsel %vm161, %v3247, 0.0
    %3810 = vadd.xlane.f32.xlu0 %v3809
    %v3811 = vpop.xlane.xlu0 %3810
    %v3812 = vsel %vm161, %v3248, 0.0
    %3813 = vadd.xlane.f32.xlu0 %v3812
    %v3814 = vpop.xlane.xlu0 %3813
    %v3815 = vsel %vm161, %v3249, 0.0
    %3816 = vadd.xlane.f32.xlu0 %v3815
    %v3817 = vpop.xlane.xlu0 %3816
    %v3818 = vsel %vm161, %v3250, 0.0
    %3819 = vadd.xlane.f32.xlu0 %v3818
    %v3820 = vpop.xlane.xlu0 %3819
    %v3821 = vsel %vm161, %v3251, 0.0
    %3822 = vadd.xlane.f32.xlu0 %v3821
    %v3823 = vpop.xlane.xlu0 %3822
    %v3824 = vsel %vm161, %v3252, 0.0
    %3825 = vadd.xlane.f32.xlu0 %v3824
    %v3826 = vpop.xlane.xlu0 %3825
    %v3827 = vsel %vm161, %v3253, 0.0
    %3828 = vadd.xlane.f32.xlu0 %v3827
    %v3829 = vpop.xlane.xlu0 %3828
    %v3830 = vsel %vm161, %v3254, 0.0
    %3831 = vadd.xlane.f32.xlu0 %v3830
    %v3832 = vpop.xlane.xlu0 %3831
    %v3833 = vsel %vm161, %v3255, 0.0
    %3834 = vadd.xlane.f32.xlu0 %v3833
    %v3835 = vpop.xlane.xlu0 %3834
    %v3836 = vsel %vm161, %v3256, 0.0
    %3837 = vadd.xlane.f32.xlu0 %v3836
    %v3838 = vpop.xlane.xlu0 %3837
    %v3839 = vsel %vm161, %v3257, 0.0
    %3840 = vadd.xlane.f32.xlu0 %v3839
    %v3841 = vpop.xlane.xlu0 %3840
    %v3842 = vsel %vm161, %v3258, 0.0
    %3843 = vadd.xlane.f32.xlu0 %v3842
    %v3844 = vpop.xlane.xlu0 %3843
    %v3845 = vsel %vm161, %v3259, 0.0
    %3846 = vadd.xlane.f32.xlu0 %v3845
    %v3847 = vpop.xlane.xlu0 %3846
    %v3848 = vsel %vm161, %v3260, 0.0
    %3849 = vadd.xlane.f32.xlu0 %v3848
    %v3850 = vpop.xlane.xlu0 %3849
    %v3851 = vsel %vm161, %v3261, 0.0
    %3852 = vadd.xlane.f32.xlu0 %v3851
    %v3853 = vpop.xlane.xlu0 %3852
    %v3854 = vsel %vm161, %v3262, 0.0
    %3855 = vadd.xlane.f32.xlu0 %v3854
    %v3856 = vpop.xlane.xlu0 %3855
    %v3857 = vsel %vm161, %v3263, 0.0
    %3858 = vadd.xlane.f32.xlu0 %v3857
    %v3859 = vpop.xlane.xlu0 %3858
    %v3860 = vsel %vm161, %v3264, 0.0
    %3861 = vadd.xlane.f32.xlu0 %v3860
    %v3862 = vpop.xlane.xlu0 %3861
    %v3863 = vsel %vm161, %v3265, 0.0
    %3864 = vadd.xlane.f32.xlu0 %v3863
    %v3865 = vpop.xlane.xlu0 %3864
    %v3866 = vsel %vm161, %v3266, 0.0
    %3867 = vadd.xlane.f32.xlu0 %v3866
    %v3868 = vpop.xlane.xlu0 %3867
    %v3869 = vsel %vm161, %v3267, 0.0
    %3870 = vadd.xlane.f32.xlu0 %v3869
    %v3871 = vpop.xlane.xlu0 %3870
    %v3872 = vsel %vm161, %v3268, 0.0
    %3873 = vadd.xlane.f32.xlu0 %v3872
    %v3874 = vpop.xlane.xlu0 %3873
    %v3875 = vsel %vm161, %v3269, 0.0
    %3876 = vadd.xlane.f32.xlu0 %v3875
    %v3877 = vpop.xlane.xlu0 %3876
    %v3878 = vsel %vm161, %v3270, 0.0
    %3879 = vadd.xlane.f32.xlu0 %v3878
    %v3880 = vpop.xlane.xlu0 %3879
    %v3881 = vsel %vm161, %v3271, 0.0
    %3882 = vadd.xlane.f32.xlu0 %v3881
    %v3883 = vpop.xlane.xlu0 %3882
    %v3884 = vsel %vm161, %v3272, 0.0
    %3885 = vadd.xlane.f32.xlu0 %v3884
    %v3886 = vpop.xlane.xlu0 %3885
    %v3887 = vsel %vm161, %v3273, 0.0
    %3888 = vadd.xlane.f32.xlu0 %v3887
    %v3889 = vpop.xlane.xlu0 %3888
    %v3890 = vsel %vm161, %v3274, 0.0
    %3891 = vadd.xlane.f32.xlu0 %v3890
    %v3892 = vpop.xlane.xlu0 %3891
    %v3893 = vsel %vm161, %v3275, 0.0
    %3894 = vadd.xlane.f32.xlu0 %v3893
    %v3895 = vpop.xlane.xlu0 %3894
    %v3896 = vsel %vm161, %v3276, 0.0
    %3897 = vadd.xlane.f32.xlu0 %v3896
    %v3898 = vpop.xlane.xlu0 %3897
    %v3899 = vsel %vm161, %v3277, 0.0
    %3900 = vadd.xlane.f32.xlu0 %v3899
    %v3901 = vpop.xlane.xlu0 %3900
    %v3902 = vsel %vm161, %v3278, 0.0
    %3903 = vadd.xlane.f32.xlu0 %v3902
    %v3904 = vpop.xlane.xlu0 %3903
    %v3905 = vsel %vm161, %v3279, 0.0
    %3906 = vadd.xlane.f32.xlu0 %v3905
    %v3907 = vpop.xlane.xlu0 %3906
    %v3908 = vsel %vm161, %v3280, 0.0
    %3909 = vadd.xlane.f32.xlu0 %v3908
    %v3910 = vpop.xlane.xlu0 %3909
    %v3911 = vsel %vm161, %v3281, 0.0
    %3912 = vadd.xlane.f32.xlu0 %v3911
    %v3913 = vpop.xlane.xlu0 %3912
    %v3914 = vsel %vm161, %v3282, 0.0
    %3915 = vadd.xlane.f32.xlu0 %v3914
    %v3916 = vpop.xlane.xlu0 %3915
    %v3917 = vsel %vm161, %v3283, 0.0
    %3918 = vadd.xlane.f32.xlu0 %v3917
    %v3919 = vpop.xlane.xlu0 %3918
    %v3920 = vsel %vm161, %v3284, 0.0
    %3921 = vadd.xlane.f32.xlu0 %v3920
    %v3922 = vpop.xlane.xlu0 %3921
    %v3923 = vsel %vm161, %v3285, 0.0
    %3924 = vadd.xlane.f32.xlu0 %v3923
    %v3925 = vpop.xlane.xlu0 %3924
    %v3926 = vsel %vm161, %v3286, 0.0
    %3927 = vadd.xlane.f32.xlu0 %v3926
    %v3928 = vpop.xlane.xlu0 %3927
    %v3929 = vsel %vm161, %v3287, 0.0
    %3930 = vadd.xlane.f32.xlu0 %v3929
    %v3931 = vpop.xlane.xlu0 %3930
    %v3932 = vsel %vm161, %v3288, 0.0
    %3933 = vadd.xlane.f32.xlu0 %v3932
    %v3934 = vpop.xlane.xlu0 %3933
    %v3935 = vsel %vm161, %v3289, 0.0
    %3936 = vadd.xlane.f32.xlu0 %v3935
    %v3937 = vpop.xlane.xlu0 %3936
    %v3938 = vsel %vm161, %v3290, 0.0
    %3939 = vadd.xlane.f32.xlu0 %v3938
    %v3940 = vpop.xlane.xlu0 %3939
    %v3941 = vsel %vm161, %v3291, 0.0
    %3942 = vadd.xlane.f32.xlu0 %v3941
    %v3943 = vpop.xlane.xlu0 %3942
    %v3944 = vsel %vm161, %v3292, 0.0
    %3945 = vadd.xlane.f32.xlu0 %v3944
    %v3946 = vpop.xlane.xlu0 %3945
    %v3947 = vsel %vm161, %v3293, 0.0
    %3948 = vadd.xlane.f32.xlu0 %v3947
    %v3949 = vpop.xlane.xlu0 %3948
    %v3950 = vsel %vm161, %v3294, 0.0
    %3951 = vadd.xlane.f32.xlu0 %v3950
    %v3952 = vpop.xlane.xlu0 %3951
    %v3953 = vsel %vm161, %v3295, 0.0
    %3954 = vadd.xlane.f32.xlu0 %v3953
    %v3955 = vpop.xlane.xlu0 %3954
    %v3956 = vsel %vm161, %v3296, 0.0
    %3957 = vadd.xlane.f32.xlu0 %v3956
    %v3958 = vpop.xlane.xlu0 %3957
    %v3959 = vsel %vm161, %v3297, 0.0
    %3960 = vadd.xlane.f32.xlu0 %v3959
    %v3961 = vpop.xlane.xlu0 %3960
    %v3962 = vsel %vm161, %v3298, 0.0
    %3963 = vadd.xlane.f32.xlu0 %v3962
    %v3964 = vpop.xlane.xlu0 %3963
    %v3965 = vsel %vm161, %v3299, 0.0
    %3966 = vadd.xlane.f32.xlu0 %v3965
    %v3967 = vpop.xlane.xlu0 %3966
    %v3968 = vsel %vm161, %v3300, 0.0
    %3969 = vadd.xlane.f32.xlu0 %v3968
    %v3970 = vpop.xlane.xlu0 %3969
    %v3971 = vsel %vm161, %v3301, 0.0
    %3972 = vadd.xlane.f32.xlu0 %v3971
    %v3973 = vpop.xlane.xlu0 %3972
    %v3974 = vsel %vm161, %v3302, 0.0
    %3975 = vadd.xlane.f32.xlu0 %v3974
    %v3976 = vpop.xlane.xlu0 %3975
    %v3977 = vsel %vm161, %v3303, 0.0
    %3978 = vadd.xlane.f32.xlu0 %v3977
    %v3979 = vpop.xlane.xlu0 %3978
    %v3980 = vsel %vm161, %v3304, 0.0
    %3981 = vadd.xlane.f32.xlu0 %v3980
    %v3982 = vpop.xlane.xlu0 %3981
    %v3983 = vsel %vm161, %v3305, 0.0
    %3984 = vadd.xlane.f32.xlu0 %v3983
    %v3985 = vpop.xlane.xlu0 %3984
    %v3986 = vsel %vm161, %v3306, 0.0
    %3987 = vadd.xlane.f32.xlu0 %v3986
    %v3988 = vpop.xlane.xlu0 %3987
    %v3989 = vsel %vm161, %v3307, 0.0
    %3990 = vadd.xlane.f32.xlu0 %v3989
    %v3991 = vpop.xlane.xlu0 %3990
    %v3992 = vsel %vm161, %v3308, 0.0
    %3993 = vadd.xlane.f32.xlu0 %v3992
    %v3994 = vpop.xlane.xlu0 %3993
    %v3995 = vsel %vm161, %v3309, 0.0
    %3996 = vadd.xlane.f32.xlu0 %v3995
    %v3997 = vpop.xlane.xlu0 %3996
    %v3998 = vsel %vm161, %v3310, 0.0
    %3999 = vadd.xlane.f32.xlu0 %v3998
    %v4000 = vpop.xlane.xlu0 %3999
    %v4001 = vsel %vm161, %v3311, 0.0
    %4002 = vadd.xlane.f32.xlu0 %v4001
    %v4003 = vpop.xlane.xlu0 %4002
    %v4004 = vsel %vm161, %v3312, 0.0
    %4005 = vadd.xlane.f32.xlu0 %v4004
    %v4006 = vpop.xlane.xlu0 %4005
    %v4007 = vsel %vm161, %v3313, 0.0
    %4008 = vadd.xlane.f32.xlu0 %v4007
    %v4009 = vpop.xlane.xlu0 %4008
    %v4010 = vsel %vm161, %v3314, 0.0
    %4011 = vadd.xlane.f32.xlu0 %v4010
    %v4012 = vpop.xlane.xlu0 %4011
    %v4013 = vsel %vm161, %v3315, 0.0
    %4014 = vadd.xlane.f32.xlu0 %v4013
    %v4015 = vpop.xlane.xlu0 %4014
    %v4016 = vsel %vm161, %v3316, 0.0
    %4017 = vadd.xlane.f32.xlu0 %v4016
    %v4018 = vpop.xlane.xlu0 %4017
    %v4019 = vsel %vm161, %v3317, 0.0
    %4020 = vadd.xlane.f32.xlu0 %v4019
    %v4021 = vpop.xlane.xlu0 %4020
    %v4022 = vsel %vm161, %v3318, 0.0
    %4023 = vadd.xlane.f32.xlu0 %v4022
    %v4024 = vpop.xlane.xlu0 %4023
    %v4025 = vsel %vm161, %v3319, 0.0
    %4026 = vadd.xlane.f32.xlu0 %v4025
    %v4027 = vpop.xlane.xlu0 %4026
    %v4028 = vsel %vm161, %v3320, 0.0
    %4029 = vadd.xlane.f32.xlu0 %v4028
    %v4030 = vpop.xlane.xlu0 %4029
    %v4031 = vsel %vm161, %v3321, 0.0
    %4032 = vadd.xlane.f32.xlu0 %v4031
    %v4033 = vpop.xlane.xlu0 %4032
    %v4034 = vsel %vm161, %v3322, 0.0
    %4035 = vadd.xlane.f32.xlu0 %v4034
    %v4036 = vpop.xlane.xlu0 %4035
    %v4037 = vsel %vm161, %v3323, 0.0
    %4038 = vadd.xlane.f32.xlu0 %v4037
    %v4039 = vpop.xlane.xlu0 %4038
    %v4040 = vsel %vm161, %v3324, 0.0
    %4041 = vadd.xlane.f32.xlu0 %v4040
    %v4042 = vpop.xlane.xlu0 %4041
    %v4043 = vsel %vm161, %v3325, 0.0
    %4044 = vadd.xlane.f32.xlu0 %v4043
    %v4045 = vpop.xlane.xlu0 %4044
    %v4046 = vsel %vm161, %v3326, 0.0
    %4047 = vadd.xlane.f32.xlu0 %v4046
    %v4048 = vpop.xlane.xlu0 %4047
    %v4049 = vsel %vm161, %v3327, 0.0
    %4050 = vadd.xlane.f32.xlu0 %v4049
    %v4051 = vpop.xlane.xlu0 %4050
    %v4052 = vsel %vm161, %v3328, 0.0
    %4053 = vadd.xlane.f32.xlu0 %v4052
    %v4054 = vpop.xlane.xlu0 %4053
    %v4055 = vsel %vm161, %v3329, 0.0
    %4056 = vadd.xlane.f32.xlu0 %v4055
    %v4057 = vpop.xlane.xlu0 %4056
    %v4058 = vsel %vm161, %v3330, 0.0
    %4059 = vadd.xlane.f32.xlu0 %v4058
    %v4060 = vpop.xlane.xlu0 %4059
    %v4061 = vsel %vm161, %v3331, 0.0
    %4062 = vadd.xlane.f32.xlu0 %v4061
    %v4063 = vpop.xlane.xlu0 %4062
    %v4064 = vsel %vm161, %v3332, 0.0
    %4065 = vadd.xlane.f32.xlu0 %v4064
    %v4066 = vpop.xlane.xlu0 %4065
    %v4067 = vsel %vm161, %v3333, 0.0
    %4068 = vadd.xlane.f32.xlu0 %v4067
    %v4069 = vpop.xlane.xlu0 %4068
    %v4070 = vsel %vm161, %v3334, 0.0
    %4071 = vadd.xlane.f32.xlu0 %v4070
    %v4072 = vpop.xlane.xlu0 %4071
    %v4073 = vsel %vm161, %v3335, 0.0
    %4074 = vadd.xlane.f32.xlu0 %v4073
    %v4075 = vpop.xlane.xlu0 %4074
    %v4076 = vsel %vm161, %v3336, 0.0
    %4077 = vadd.xlane.f32.xlu0 %v4076
    %v4078 = vpop.xlane.xlu0 %4077
    %v4079 = vsel %vm161, %v3337, 0.0
    %4080 = vadd.xlane.f32.xlu0 %v4079
    %v4081 = vpop.xlane.xlu0 %4080
    %v4082 = vsel %vm161, %v3338, 0.0
    %4083 = vadd.xlane.f32.xlu0 %v4082
    %v4084 = vpop.xlane.xlu0 %4083
    %v4085 = vsel %vm161, %v3339, 0.0
    %4086 = vadd.xlane.f32.xlu0 %v4085
    %v4087 = vpop.xlane.xlu0 %4086
    %v4088 = vsel %vm161, %v3340, 0.0
    %4089 = vadd.xlane.f32.xlu0 %v4088
    %v4090 = vpop.xlane.xlu0 %4089
    %v4091 = vsel %vm161, %v3341, 0.0
    %4092 = vadd.xlane.f32.xlu0 %v4091
    %v4093 = vpop.xlane.xlu0 %4092
    %v4094 = vsel %vm161, %v3342, 0.0
    %4095 = vadd.xlane.f32.xlu0 %v4094
    %v4096 = vpop.xlane.xlu0 %4095
    %v4097 = vsel %vm161, %v3343, 0.0
    %4098 = vadd.xlane.f32.xlu0 %v4097
    %v4099 = vpop.xlane.xlu0 %4098
    %v4100 = vsel %vm161, %v3344, 0.0
    %4101 = vadd.xlane.f32.xlu0 %v4100
    %v4102 = vpop.xlane.xlu0 %4101
    %v4103 = vsel %vm161, %v3345, 0.0
    %4104 = vadd.xlane.f32.xlu0 %v4103
    %v4105 = vpop.xlane.xlu0 %4104
    %v4106 = vsel %vm161, %v3346, 0.0
    %4107 = vadd.xlane.f32.xlu0 %v4106
    %v4108 = vpop.xlane.xlu0 %4107
    %v4109 = vsel %vm161, %v3347, 0.0
    %4110 = vadd.xlane.f32.xlu0 %v4109
    %v4111 = vpop.xlane.xlu0 %4110
    %v4112 = vsel %vm161, %v3348, 0.0
    %4113 = vadd.xlane.f32.xlu0 %v4112
    %v4114 = vpop.xlane.xlu0 %4113
    %v4115 = vsel %vm161, %v3349, 0.0
    %4116 = vadd.xlane.f32.xlu0 %v4115
    %v4117 = vpop.xlane.xlu0 %4116
    %v4374 = vlaneseq
    %v4375 = vand.u32 %v4374, 127
    %v4376 = vlaneseq
    %v4377 = vshrl.u32 %v4376, 7
    %v4378 = vsub.s32 %v4375, %v4377
    %v4379 = vrot.slane %v3352, %v4378
    %v4380 = vadd.s32 %v4375, 4294967288
    %v4381 = vlaneseq
    %v4382 = vshrl.u32 %v4381, 7
    %v4383 = vsub.s32 %v4380, %v4382
    %v4384 = vrot.slane %v3355, %v4383
    %vm4385 = vcmask 130112
    %v4386 = vsel %vm4385, %v4384, %v4379
    %v4387 = vlaneseq
    %v4388 = vshrl.u32 %v4387, 7
    %v4389 = vsub.s32 %v4375, %v4388
    %v4390 = vrot.slane %v3358, %v4389
    %v4391 = vlaneseq
    %v4392 = vshrl.u32 %v4391, 7
    %v4393 = vsub.s32 %v4380, %v4392
    %v4394 = vrot.slane %v3361, %v4393
    %v4395 = vsel %vm4385, %v4394, %v4390
    %v4396 = vlaneseq
    %v4397 = vshrl.u32 %v4396, 7
    %v4398 = vsub.s32 %v4375, %v4397
    %v4399 = vrot.slane %v3364, %v4398
    %v4400 = vlaneseq
    %v4401 = vshrl.u32 %v4400, 7
    %v4402 = vsub.s32 %v4380, %v4401
    %v4403 = vrot.slane %v3367, %v4402
    %v4404 = vsel %vm4385, %v4403, %v4399
    %v4405 = vlaneseq
    %v4406 = vshrl.u32 %v4405, 7
    %v4407 = vsub.s32 %v4375, %v4406
    %v4408 = vrot.slane %v3370, %v4407
    %v4409 = vlaneseq
    %v4410 = vshrl.u32 %v4409, 7
    %v4411 = vsub.s32 %v4380, %v4410
    %v4412 = vrot.slane %v3373, %v4411
    %v4413 = vsel %vm4385, %v4412, %v4408
    %v4414 = vlaneseq
    %v4415 = vshrl.u32 %v4414, 7
    %v4416 = vsub.s32 %v4375, %v4415
    %v4417 = vrot.slane %v3376, %v4416
    %v4418 = vlaneseq
    %v4419 = vshrl.u32 %v4418, 7
    %v4420 = vsub.s32 %v4380, %v4419
    %v4421 = vrot.slane %v3379, %v4420
    %v4422 = vsel %vm4385, %v4421, %v4417
    %v4423 = vlaneseq
    %v4424 = vshrl.u32 %v4423, 7
    %v4425 = vsub.s32 %v4375, %v4424
    %v4426 = vrot.slane %v3382, %v4425
    %v4427 = vlaneseq
    %v4428 = vshrl.u32 %v4427, 7
    %v4429 = vsub.s32 %v4380, %v4428
    %v4430 = vrot.slane %v3385, %v4429
    %v4431 = vsel %vm4385, %v4430, %v4426
    %v4432 = vlaneseq
    %v4433 = vshrl.u32 %v4432, 7
    %v4434 = vsub.s32 %v4375, %v4433
    %v4435 = vrot.slane %v3388, %v4434
    %v4436 = vlaneseq
    %v4437 = vshrl.u32 %v4436, 7
    %v4438 = vsub.s32 %v4380, %v4437
    %v4439 = vrot.slane %v3391, %v4438
    %v4440 = vsel %vm4385, %v4439, %v4435
    %v4441 = vlaneseq
    %v4442 = vshrl.u32 %v4441, 7
    %v4443 = vsub.s32 %v4375, %v4442
    %v4444 = vrot.slane %v3394, %v4443
    %v4445 = vlaneseq
    %v4446 = vshrl.u32 %v4445, 7
    %v4447 = vsub.s32 %v4380, %v4446
    %v4448 = vrot.slane %v3397, %v4447
    %v4449 = vsel %vm4385, %v4448, %v4444
    %v4450 = vlaneseq
    %v4451 = vshrl.u32 %v4450, 7
    %v4452 = vsub.s32 %v4375, %v4451
    %v4453 = vrot.slane %v3400, %v4452
    %v4454 = vlaneseq
    %v4455 = vshrl.u32 %v4454, 7
    %v4456 = vsub.s32 %v4380, %v4455
    %v4457 = vrot.slane %v3403, %v4456
    %v4458 = vsel %vm4385, %v4457, %v4453
    %v4459 = vlaneseq
    %v4460 = vshrl.u32 %v4459, 7
    %v4461 = vsub.s32 %v4375, %v4460
    %v4462 = vrot.slane %v3406, %v4461
    %v4463 = vlaneseq
    %v4464 = vshrl.u32 %v4463, 7
    %v4465 = vsub.s32 %v4380, %v4464
    %v4466 = vrot.slane %v3409, %v4465
    %v4467 = vsel %vm4385, %v4466, %v4462
    %v4468 = vlaneseq
    %v4469 = vshrl.u32 %v4468, 7
    %v4470 = vsub.s32 %v4375, %v4469
    %v4471 = vrot.slane %v3412, %v4470
    %v4472 = vlaneseq
    %v4473 = vshrl.u32 %v4472, 7
    %v4474 = vsub.s32 %v4380, %v4473
    %v4475 = vrot.slane %v3415, %v4474
    %v4476 = vsel %vm4385, %v4475, %v4471
    %v4477 = vlaneseq
    %v4478 = vshrl.u32 %v4477, 7
    %v4479 = vsub.s32 %v4375, %v4478
    %v4480 = vrot.slane %v3418, %v4479
    %v4481 = vlaneseq
    %v4482 = vshrl.u32 %v4481, 7
    %v4483 = vsub.s32 %v4380, %v4482
    %v4484 = vrot.slane %v3421, %v4483
    %v4485 = vsel %vm4385, %v4484, %v4480
    %v4486 = vlaneseq
    %v4487 = vshrl.u32 %v4486, 7
    %v4488 = vsub.s32 %v4375, %v4487
    %v4489 = vrot.slane %v3424, %v4488
    %v4490 = vlaneseq
    %v4491 = vshrl.u32 %v4490, 7
    %v4492 = vsub.s32 %v4380, %v4491
    %v4493 = vrot.slane %v3427, %v4492
    %v4494 = vsel %vm4385, %v4493, %v4489
    %v4495 = vlaneseq
    %v4496 = vshrl.u32 %v4495, 7
    %v4497 = vsub.s32 %v4375, %v4496
    %v4498 = vrot.slane %v3430, %v4497
    %v4499 = vlaneseq
    %v4500 = vshrl.u32 %v4499, 7
    %v4501 = vsub.s32 %v4380, %v4500
    %v4502 = vrot.slane %v3433, %v4501
    %v4503 = vsel %vm4385, %v4502, %v4498
    %v4504 = vlaneseq
    %v4505 = vshrl.u32 %v4504, 7
    %v4506 = vsub.s32 %v4375, %v4505
    %v4507 = vrot.slane %v3436, %v4506
    %v4508 = vlaneseq
    %v4509 = vshrl.u32 %v4508, 7
    %v4510 = vsub.s32 %v4380, %v4509
    %v4511 = vrot.slane %v3439, %v4510
    %v4512 = vsel %vm4385, %v4511, %v4507
    %v4513 = vlaneseq
    %v4514 = vshrl.u32 %v4513, 7
    %v4515 = vsub.s32 %v4375, %v4514
    %v4516 = vrot.slane %v3442, %v4515
    %v4517 = vlaneseq
    %v4518 = vshrl.u32 %v4517, 7
    %v4519 = vsub.s32 %v4380, %v4518
    %v4520 = vrot.slane %v3445, %v4519
    %v4521 = vsel %vm4385, %v4520, %v4516
    %v4522 = vlaneseq
    %v4523 = vshrl.u32 %v4522, 7
    %v4524 = vsub.s32 %v4375, %v4523
    %v4525 = vrot.slane %v3448, %v4524
    %v4526 = vlaneseq
    %v4527 = vshrl.u32 %v4526, 7
    %v4528 = vsub.s32 %v4380, %v4527
    %v4529 = vrot.slane %v3451, %v4528
    %v4530 = vsel %vm4385, %v4529, %v4525
    %v4531 = vlaneseq
    %v4532 = vshrl.u32 %v4531, 7
    %v4533 = vsub.s32 %v4375, %v4532
    %v4534 = vrot.slane %v3454, %v4533
    %v4535 = vlaneseq
    %v4536 = vshrl.u32 %v4535, 7
    %v4537 = vsub.s32 %v4380, %v4536
    %v4538 = vrot.slane %v3457, %v4537
    %v4539 = vsel %vm4385, %v4538, %v4534
    %v4540 = vlaneseq
    %v4541 = vshrl.u32 %v4540, 7
    %v4542 = vsub.s32 %v4375, %v4541
    %v4543 = vrot.slane %v3460, %v4542
    %v4544 = vlaneseq
    %v4545 = vshrl.u32 %v4544, 7
    %v4546 = vsub.s32 %v4380, %v4545
    %v4547 = vrot.slane %v3463, %v4546
    %v4548 = vsel %vm4385, %v4547, %v4543
    %v4549 = vlaneseq
    %v4550 = vshrl.u32 %v4549, 7
    %v4551 = vsub.s32 %v4375, %v4550
    %v4552 = vrot.slane %v3466, %v4551
    %v4553 = vlaneseq
    %v4554 = vshrl.u32 %v4553, 7
    %v4555 = vsub.s32 %v4380, %v4554
    %v4556 = vrot.slane %v3469, %v4555
    %v4557 = vsel %vm4385, %v4556, %v4552
    %v4558 = vlaneseq
    %v4559 = vshrl.u32 %v4558, 7
    %v4560 = vsub.s32 %v4375, %v4559
    %v4561 = vrot.slane %v3472, %v4560
    %v4562 = vlaneseq
    %v4563 = vshrl.u32 %v4562, 7
    %v4564 = vsub.s32 %v4380, %v4563
    %v4565 = vrot.slane %v3475, %v4564
    %v4566 = vsel %vm4385, %v4565, %v4561
    %v4567 = vlaneseq
    %v4568 = vshrl.u32 %v4567, 7
    %v4569 = vsub.s32 %v4375, %v4568
    %v4570 = vrot.slane %v3478, %v4569
    %v4571 = vlaneseq
    %v4572 = vshrl.u32 %v4571, 7
    %v4573 = vsub.s32 %v4380, %v4572
    %v4574 = vrot.slane %v3481, %v4573
    %v4575 = vsel %vm4385, %v4574, %v4570
    %v4576 = vlaneseq
    %v4577 = vshrl.u32 %v4576, 7
    %v4578 = vsub.s32 %v4375, %v4577
    %v4579 = vrot.slane %v3484, %v4578
    %v4580 = vlaneseq
    %v4581 = vshrl.u32 %v4580, 7
    %v4582 = vsub.s32 %v4380, %v4581
    %v4583 = vrot.slane %v3487, %v4582
    %v4584 = vsel %vm4385, %v4583, %v4579
    %v4585 = vlaneseq
    %v4586 = vshrl.u32 %v4585, 7
    %v4587 = vsub.s32 %v4375, %v4586
    %v4588 = vrot.slane %v3490, %v4587
    %v4589 = vlaneseq
    %v4590 = vshrl.u32 %v4589, 7
    %v4591 = vsub.s32 %v4380, %v4590
    %v4592 = vrot.slane %v3493, %v4591
    %v4593 = vsel %vm4385, %v4592, %v4588
    %v4594 = vlaneseq
    %v4595 = vshrl.u32 %v4594, 7
    %v4596 = vsub.s32 %v4375, %v4595
    %v4597 = vrot.slane %v3496, %v4596
    %v4598 = vlaneseq
    %v4599 = vshrl.u32 %v4598, 7
    %v4600 = vsub.s32 %v4380, %v4599
    %v4601 = vrot.slane %v3499, %v4600
    %v4602 = vsel %vm4385, %v4601, %v4597
    %v4603 = vlaneseq
    %v4604 = vshrl.u32 %v4603, 7
    %v4605 = vsub.s32 %v4375, %v4604
    %v4606 = vrot.slane %v3502, %v4605
    %v4607 = vlaneseq
    %v4608 = vshrl.u32 %v4607, 7
    %v4609 = vsub.s32 %v4380, %v4608
    %v4610 = vrot.slane %v3505, %v4609
    %v4611 = vsel %vm4385, %v4610, %v4606
    %v4612 = vlaneseq
    %v4613 = vshrl.u32 %v4612, 7
    %v4614 = vsub.s32 %v4375, %v4613
    %v4615 = vrot.slane %v3508, %v4614
    %v4616 = vlaneseq
    %v4617 = vshrl.u32 %v4616, 7
    %v4618 = vsub.s32 %v4380, %v4617
    %v4619 = vrot.slane %v3511, %v4618
    %v4620 = vsel %vm4385, %v4619, %v4615
    %v4621 = vlaneseq
    %v4622 = vshrl.u32 %v4621, 7
    %v4623 = vsub.s32 %v4375, %v4622
    %v4624 = vrot.slane %v3514, %v4623
    %v4625 = vlaneseq
    %v4626 = vshrl.u32 %v4625, 7
    %v4627 = vsub.s32 %v4380, %v4626
    %v4628 = vrot.slane %v3517, %v4627
    %v4629 = vsel %vm4385, %v4628, %v4624
    %v4630 = vlaneseq
    %v4631 = vshrl.u32 %v4630, 7
    %v4632 = vsub.s32 %v4375, %v4631
    %v4633 = vrot.slane %v3520, %v4632
    %v4634 = vlaneseq
    %v4635 = vshrl.u32 %v4634, 7
    %v4636 = vsub.s32 %v4380, %v4635
    %v4637 = vrot.slane %v3523, %v4636
    %v4638 = vsel %vm4385, %v4637, %v4633
    %v4639 = vlaneseq
    %v4640 = vshrl.u32 %v4639, 7
    %v4641 = vsub.s32 %v4375, %v4640
    %v4642 = vrot.slane %v3526, %v4641
    %v4643 = vlaneseq
    %v4644 = vshrl.u32 %v4643, 7
    %v4645 = vsub.s32 %v4380, %v4644
    %v4646 = vrot.slane %v3529, %v4645
    %v4647 = vsel %vm4385, %v4646, %v4642
    %v4648 = vlaneseq
    %v4649 = vshrl.u32 %v4648, 7
    %v4650 = vsub.s32 %v4375, %v4649
    %v4651 = vrot.slane %v3532, %v4650
    %v4652 = vlaneseq
    %v4653 = vshrl.u32 %v4652, 7
    %v4654 = vsub.s32 %v4380, %v4653
    %v4655 = vrot.slane %v3535, %v4654
    %v4656 = vsel %vm4385, %v4655, %v4651
    %v4657 = vlaneseq
    %v4658 = vshrl.u32 %v4657, 7
    %v4659 = vsub.s32 %v4375, %v4658
    %v4660 = vrot.slane %v3538, %v4659
    %v4661 = vlaneseq
    %v4662 = vshrl.u32 %v4661, 7
    %v4663 = vsub.s32 %v4380, %v4662
    %v4664 = vrot.slane %v3541, %v4663
    %v4665 = vsel %vm4385, %v4664, %v4660
    %v4666 = vlaneseq
    %v4667 = vshrl.u32 %v4666, 7
    %v4668 = vsub.s32 %v4375, %v4667
    %v4669 = vrot.slane %v3544, %v4668
    %v4670 = vlaneseq
    %v4671 = vshrl.u32 %v4670, 7
    %v4672 = vsub.s32 %v4380, %v4671
    %v4673 = vrot.slane %v3547, %v4672
    %v4674 = vsel %vm4385, %v4673, %v4669
    %v4675 = vlaneseq
    %v4676 = vshrl.u32 %v4675, 7
    %v4677 = vsub.s32 %v4375, %v4676
    %v4678 = vrot.slane %v3550, %v4677
    %v4679 = vlaneseq
    %v4680 = vshrl.u32 %v4679, 7
    %v4681 = vsub.s32 %v4380, %v4680
    %v4682 = vrot.slane %v3553, %v4681
    %v4683 = vsel %vm4385, %v4682, %v4678
    %v4684 = vlaneseq
    %v4685 = vshrl.u32 %v4684, 7
    %v4686 = vsub.s32 %v4375, %v4685
    %v4687 = vrot.slane %v3556, %v4686
    %v4688 = vlaneseq
    %v4689 = vshrl.u32 %v4688, 7
    %v4690 = vsub.s32 %v4380, %v4689
    %v4691 = vrot.slane %v3559, %v4690
    %v4692 = vsel %vm4385, %v4691, %v4687
    %v4693 = vlaneseq
    %v4694 = vshrl.u32 %v4693, 7
    %v4695 = vsub.s32 %v4375, %v4694
    %v4696 = vrot.slane %v3562, %v4695
    %v4697 = vlaneseq
    %v4698 = vshrl.u32 %v4697, 7
    %v4699 = vsub.s32 %v4380, %v4698
    %v4700 = vrot.slane %v3565, %v4699
    %v4701 = vsel %vm4385, %v4700, %v4696
    %v4702 = vlaneseq
    %v4703 = vshrl.u32 %v4702, 7
    %v4704 = vsub.s32 %v4375, %v4703
    %v4705 = vrot.slane %v3568, %v4704
    %v4706 = vlaneseq
    %v4707 = vshrl.u32 %v4706, 7
    %v4708 = vsub.s32 %v4380, %v4707
    %v4709 = vrot.slane %v3571, %v4708
    %v4710 = vsel %vm4385, %v4709, %v4705
    %v4711 = vlaneseq
    %v4712 = vshrl.u32 %v4711, 7
    %v4713 = vsub.s32 %v4375, %v4712
    %v4714 = vrot.slane %v3574, %v4713
    %v4715 = vlaneseq
    %v4716 = vshrl.u32 %v4715, 7
    %v4717 = vsub.s32 %v4380, %v4716
    %v4718 = vrot.slane %v3577, %v4717
    %v4719 = vsel %vm4385, %v4718, %v4714
    %v4720 = vlaneseq
    %v4721 = vshrl.u32 %v4720, 7
    %v4722 = vsub.s32 %v4375, %v4721
    %v4723 = vrot.slane %v3580, %v4722
    %v4724 = vlaneseq
    %v4725 = vshrl.u32 %v4724, 7
    %v4726 = vsub.s32 %v4380, %v4725
    %v4727 = vrot.slane %v3583, %v4726
    %v4728 = vsel %vm4385, %v4727, %v4723
    %v4729 = vlaneseq
    %v4730 = vshrl.u32 %v4729, 7
    %v4731 = vsub.s32 %v4375, %v4730
    %v4732 = vrot.slane %v3586, %v4731
    %v4733 = vlaneseq
    %v4734 = vshrl.u32 %v4733, 7
    %v4735 = vsub.s32 %v4380, %v4734
    %v4736 = vrot.slane %v3589, %v4735
    %v4737 = vsel %vm4385, %v4736, %v4732
    %v4738 = vlaneseq
    %v4739 = vshrl.u32 %v4738, 7
    %v4740 = vsub.s32 %v4375, %v4739
    %v4741 = vrot.slane %v3592, %v4740
    %v4742 = vlaneseq
    %v4743 = vshrl.u32 %v4742, 7
    %v4744 = vsub.s32 %v4380, %v4743
    %v4745 = vrot.slane %v3595, %v4744
    %v4746 = vsel %vm4385, %v4745, %v4741
    %v4747 = vlaneseq
    %v4748 = vshrl.u32 %v4747, 7
    %v4749 = vsub.s32 %v4375, %v4748
    %v4750 = vrot.slane %v3598, %v4749
    %v4751 = vlaneseq
    %v4752 = vshrl.u32 %v4751, 7
    %v4753 = vsub.s32 %v4380, %v4752
    %v4754 = vrot.slane %v3601, %v4753
    %v4755 = vsel %vm4385, %v4754, %v4750
    %v4756 = vlaneseq
    %v4757 = vshrl.u32 %v4756, 7
    %v4758 = vsub.s32 %v4375, %v4757
    %v4759 = vrot.slane %v3604, %v4758
    %v4760 = vlaneseq
    %v4761 = vshrl.u32 %v4760, 7
    %v4762 = vsub.s32 %v4380, %v4761
    %v4763 = vrot.slane %v3607, %v4762
    %v4764 = vsel %vm4385, %v4763, %v4759
    %v4765 = vlaneseq
    %v4766 = vshrl.u32 %v4765, 7
    %v4767 = vsub.s32 %v4375, %v4766
    %v4768 = vrot.slane %v3610, %v4767
    %v4769 = vlaneseq
    %v4770 = vshrl.u32 %v4769, 7
    %v4771 = vsub.s32 %v4380, %v4770
    %v4772 = vrot.slane %v3613, %v4771
    %v4773 = vsel %vm4385, %v4772, %v4768
    %v4774 = vlaneseq
    %v4775 = vshrl.u32 %v4774, 7
    %v4776 = vsub.s32 %v4375, %v4775
    %v4777 = vrot.slane %v3616, %v4776
    %v4778 = vlaneseq
    %v4779 = vshrl.u32 %v4778, 7
    %v4780 = vsub.s32 %v4380, %v4779
    %v4781 = vrot.slane %v3619, %v4780
    %v4782 = vsel %vm4385, %v4781, %v4777
    %v4783 = vlaneseq
    %v4784 = vshrl.u32 %v4783, 7
    %v4785 = vsub.s32 %v4375, %v4784
    %v4786 = vrot.slane %v3622, %v4785
    %v4787 = vlaneseq
    %v4788 = vshrl.u32 %v4787, 7
    %v4789 = vsub.s32 %v4380, %v4788
    %v4790 = vrot.slane %v3625, %v4789
    %v4791 = vsel %vm4385, %v4790, %v4786
    %v4792 = vlaneseq
    %v4793 = vshrl.u32 %v4792, 7
    %v4794 = vsub.s32 %v4375, %v4793
    %v4795 = vrot.slane %v3628, %v4794
    %v4796 = vlaneseq
    %v4797 = vshrl.u32 %v4796, 7
    %v4798 = vsub.s32 %v4380, %v4797
    %v4799 = vrot.slane %v3631, %v4798
    %v4800 = vsel %vm4385, %v4799, %v4795
    %v4801 = vlaneseq
    %v4802 = vshrl.u32 %v4801, 7
    %v4803 = vsub.s32 %v4375, %v4802
    %v4804 = vrot.slane %v3634, %v4803
    %v4805 = vlaneseq
    %v4806 = vshrl.u32 %v4805, 7
    %v4807 = vsub.s32 %v4380, %v4806
    %v4808 = vrot.slane %v3637, %v4807
    %v4809 = vsel %vm4385, %v4808, %v4804
    %v4810 = vlaneseq
    %v4811 = vshrl.u32 %v4810, 7
    %v4812 = vsub.s32 %v4375, %v4811
    %v4813 = vrot.slane %v3640, %v4812
    %v4814 = vlaneseq
    %v4815 = vshrl.u32 %v4814, 7
    %v4816 = vsub.s32 %v4380, %v4815
    %v4817 = vrot.slane %v3643, %v4816
    %v4818 = vsel %vm4385, %v4817, %v4813
    %v4819 = vlaneseq
    %v4820 = vshrl.u32 %v4819, 7
    %v4821 = vsub.s32 %v4375, %v4820
    %v4822 = vrot.slane %v3646, %v4821
    %v4823 = vlaneseq
    %v4824 = vshrl.u32 %v4823, 7
    %v4825 = vsub.s32 %v4380, %v4824
    %v4826 = vrot.slane %v3649, %v4825
    %v4827 = vsel %vm4385, %v4826, %v4822
    %v4828 = vlaneseq
    %v4829 = vshrl.u32 %v4828, 7
    %v4830 = vsub.s32 %v4375, %v4829
    %v4831 = vrot.slane %v3652, %v4830
    %v4832 = vlaneseq
    %v4833 = vshrl.u32 %v4832, 7
    %v4834 = vsub.s32 %v4380, %v4833
    %v4835 = vrot.slane %v3655, %v4834
    %v4836 = vsel %vm4385, %v4835, %v4831
    %v4837 = vlaneseq
    %v4838 = vshrl.u32 %v4837, 7
    %v4839 = vsub.s32 %v4375, %v4838
    %v4840 = vrot.slane %v3658, %v4839
    %v4841 = vlaneseq
    %v4842 = vshrl.u32 %v4841, 7
    %v4843 = vsub.s32 %v4380, %v4842
    %v4844 = vrot.slane %v3661, %v4843
    %v4845 = vsel %vm4385, %v4844, %v4840
    %v4846 = vlaneseq
    %v4847 = vshrl.u32 %v4846, 7
    %v4848 = vsub.s32 %v4375, %v4847
    %v4849 = vrot.slane %v3664, %v4848
    %v4850 = vlaneseq
    %v4851 = vshrl.u32 %v4850, 7
    %v4852 = vsub.s32 %v4380, %v4851
    %v4853 = vrot.slane %v3667, %v4852
    %v4854 = vsel %vm4385, %v4853, %v4849
    %v4855 = vlaneseq
    %v4856 = vshrl.u32 %v4855, 7
    %v4857 = vsub.s32 %v4375, %v4856
    %v4858 = vrot.slane %v3670, %v4857
    %v4859 = vlaneseq
    %v4860 = vshrl.u32 %v4859, 7
    %v4861 = vsub.s32 %v4380, %v4860
    %v4862 = vrot.slane %v3673, %v4861
    %v4863 = vsel %vm4385, %v4862, %v4858
    %v4864 = vlaneseq
    %v4865 = vshrl.u32 %v4864, 7
    %v4866 = vsub.s32 %v4375, %v4865
    %v4867 = vrot.slane %v3676, %v4866
    %v4868 = vlaneseq
    %v4869 = vshrl.u32 %v4868, 7
    %v4870 = vsub.s32 %v4380, %v4869
    %v4871 = vrot.slane %v3679, %v4870
    %v4872 = vsel %vm4385, %v4871, %v4867
    %v4873 = vlaneseq
    %v4874 = vshrl.u32 %v4873, 7
    %v4875 = vsub.s32 %v4375, %v4874
    %v4876 = vrot.slane %v3682, %v4875
    %v4877 = vlaneseq
    %v4878 = vshrl.u32 %v4877, 7
    %v4879 = vsub.s32 %v4380, %v4878
    %v4880 = vrot.slane %v3685, %v4879
    %v4881 = vsel %vm4385, %v4880, %v4876
    %v4882 = vlaneseq
    %v4883 = vshrl.u32 %v4882, 7
    %v4884 = vsub.s32 %v4375, %v4883
    %v4885 = vrot.slane %v3688, %v4884
    %v4886 = vlaneseq
    %v4887 = vshrl.u32 %v4886, 7
    %v4888 = vsub.s32 %v4380, %v4887
    %v4889 = vrot.slane %v3691, %v4888
    %v4890 = vsel %vm4385, %v4889, %v4885
    %v4891 = vlaneseq
    %v4892 = vshrl.u32 %v4891, 7
    %v4893 = vsub.s32 %v4375, %v4892
    %v4894 = vrot.slane %v3694, %v4893
    %v4895 = vlaneseq
    %v4896 = vshrl.u32 %v4895, 7
    %v4897 = vsub.s32 %v4380, %v4896
    %v4898 = vrot.slane %v3697, %v4897
    %v4899 = vsel %vm4385, %v4898, %v4894
    %v4900 = vlaneseq
    %v4901 = vshrl.u32 %v4900, 7
    %v4902 = vsub.s32 %v4375, %v4901
    %v4903 = vrot.slane %v3700, %v4902
    %v4904 = vlaneseq
    %v4905 = vshrl.u32 %v4904, 7
    %v4906 = vsub.s32 %v4380, %v4905
    %v4907 = vrot.slane %v3703, %v4906
    %v4908 = vsel %vm4385, %v4907, %v4903
    %v4909 = vlaneseq
    %v4910 = vshrl.u32 %v4909, 7
    %v4911 = vsub.s32 %v4375, %v4910
    %v4912 = vrot.slane %v3706, %v4911
    %v4913 = vlaneseq
    %v4914 = vshrl.u32 %v4913, 7
    %v4915 = vsub.s32 %v4380, %v4914
    %v4916 = vrot.slane %v3709, %v4915
    %v4917 = vsel %vm4385, %v4916, %v4912
    %v4918 = vlaneseq
    %v4919 = vshrl.u32 %v4918, 7
    %v4920 = vsub.s32 %v4375, %v4919
    %v4921 = vrot.slane %v3712, %v4920
    %v4922 = vlaneseq
    %v4923 = vshrl.u32 %v4922, 7
    %v4924 = vsub.s32 %v4380, %v4923
    %v4925 = vrot.slane %v3715, %v4924
    %v4926 = vsel %vm4385, %v4925, %v4921
    %v4927 = vlaneseq
    %v4928 = vshrl.u32 %v4927, 7
    %v4929 = vsub.s32 %v4375, %v4928
    %v4930 = vrot.slane %v3718, %v4929
    %v4931 = vlaneseq
    %v4932 = vshrl.u32 %v4931, 7
    %v4933 = vsub.s32 %v4380, %v4932
    %v4934 = vrot.slane %v3721, %v4933
    %v4935 = vsel %vm4385, %v4934, %v4930
    %v4936 = vlaneseq
    %v4937 = vshrl.u32 %v4936, 7
    %v4938 = vsub.s32 %v4375, %v4937
    %v4939 = vrot.slane %v3724, %v4938
    %v4940 = vlaneseq
    %v4941 = vshrl.u32 %v4940, 7
    %v4942 = vsub.s32 %v4380, %v4941
    %v4943 = vrot.slane %v3727, %v4942
    %v4944 = vsel %vm4385, %v4943, %v4939
    %v4945 = vlaneseq
    %v4946 = vshrl.u32 %v4945, 7
    %v4947 = vsub.s32 %v4375, %v4946
    %v4948 = vrot.slane %v3730, %v4947
    %v4949 = vlaneseq
    %v4950 = vshrl.u32 %v4949, 7
    %v4951 = vsub.s32 %v4380, %v4950
    %v4952 = vrot.slane %v3733, %v4951
    %v4953 = vsel %vm4385, %v4952, %v4948
    %v4954 = vlaneseq
    %v4955 = vshrl.u32 %v4954, 7
    %v4956 = vsub.s32 %v4375, %v4955
    %v4957 = vrot.slane %v3736, %v4956
    %v4958 = vlaneseq
    %v4959 = vshrl.u32 %v4958, 7
    %v4960 = vsub.s32 %v4380, %v4959
    %v4961 = vrot.slane %v3739, %v4960
    %v4962 = vsel %vm4385, %v4961, %v4957
    %v4963 = vlaneseq
    %v4964 = vshrl.u32 %v4963, 7
    %v4965 = vsub.s32 %v4375, %v4964
    %v4966 = vrot.slane %v3742, %v4965
    %v4967 = vlaneseq
    %v4968 = vshrl.u32 %v4967, 7
    %v4969 = vsub.s32 %v4380, %v4968
    %v4970 = vrot.slane %v3745, %v4969
    %v4971 = vsel %vm4385, %v4970, %v4966
    %v4972 = vlaneseq
    %v4973 = vshrl.u32 %v4972, 7
    %v4974 = vsub.s32 %v4375, %v4973
    %v4975 = vrot.slane %v3748, %v4974
    %v4976 = vlaneseq
    %v4977 = vshrl.u32 %v4976, 7
    %v4978 = vsub.s32 %v4380, %v4977
    %v4979 = vrot.slane %v3751, %v4978
    %v4980 = vsel %vm4385, %v4979, %v4975
    %v4981 = vlaneseq
    %v4982 = vshrl.u32 %v4981, 7
    %v4983 = vsub.s32 %v4375, %v4982
    %v4984 = vrot.slane %v3754, %v4983
    %v4985 = vlaneseq
    %v4986 = vshrl.u32 %v4985, 7
    %v4987 = vsub.s32 %v4380, %v4986
    %v4988 = vrot.slane %v3757, %v4987
    %v4989 = vsel %vm4385, %v4988, %v4984
    %v4990 = vlaneseq
    %v4991 = vshrl.u32 %v4990, 7
    %v4992 = vsub.s32 %v4375, %v4991
    %v4993 = vrot.slane %v3760, %v4992
    %v4994 = vlaneseq
    %v4995 = vshrl.u32 %v4994, 7
    %v4996 = vsub.s32 %v4380, %v4995
    %v4997 = vrot.slane %v3763, %v4996
    %v4998 = vsel %vm4385, %v4997, %v4993
    %v4999 = vlaneseq
    %v5000 = vshrl.u32 %v4999, 7
    %v5001 = vsub.s32 %v4375, %v5000
    %v5002 = vrot.slane %v3766, %v5001
    %v5003 = vlaneseq
    %v5004 = vshrl.u32 %v5003, 7
    %v5005 = vsub.s32 %v4380, %v5004
    %v5006 = vrot.slane %v3769, %v5005
    %v5007 = vsel %vm4385, %v5006, %v5002
    %v5008 = vlaneseq
    %v5009 = vshrl.u32 %v5008, 7
    %v5010 = vsub.s32 %v4375, %v5009
    %v5011 = vrot.slane %v3772, %v5010
    %v5012 = vlaneseq
    %v5013 = vshrl.u32 %v5012, 7
    %v5014 = vsub.s32 %v4380, %v5013
    %v5015 = vrot.slane %v3775, %v5014
    %v5016 = vsel %vm4385, %v5015, %v5011
    %v5017 = vlaneseq
    %v5018 = vshrl.u32 %v5017, 7
    %v5019 = vsub.s32 %v4375, %v5018
    %v5020 = vrot.slane %v3778, %v5019
    %v5021 = vlaneseq
    %v5022 = vshrl.u32 %v5021, 7
    %v5023 = vsub.s32 %v4380, %v5022
    %v5024 = vrot.slane %v3781, %v5023
    %v5025 = vsel %vm4385, %v5024, %v5020
    %v5026 = vlaneseq
    %v5027 = vshrl.u32 %v5026, 7
    %v5028 = vsub.s32 %v4375, %v5027
    %v5029 = vrot.slane %v3784, %v5028
    %v5030 = vlaneseq
    %v5031 = vshrl.u32 %v5030, 7
    %v5032 = vsub.s32 %v4380, %v5031
    %v5033 = vrot.slane %v3787, %v5032
    %v5034 = vsel %vm4385, %v5033, %v5029
    %v5035 = vlaneseq
    %v5036 = vshrl.u32 %v5035, 7
    %v5037 = vsub.s32 %v4375, %v5036
    %v5038 = vrot.slane %v3790, %v5037
    %v5039 = vlaneseq
    %v5040 = vshrl.u32 %v5039, 7
    %v5041 = vsub.s32 %v4380, %v5040
    %v5042 = vrot.slane %v3793, %v5041
    %v5043 = vsel %vm4385, %v5042, %v5038
    %v5044 = vlaneseq
    %v5045 = vshrl.u32 %v5044, 7
    %v5046 = vsub.s32 %v4375, %v5045
    %v5047 = vrot.slane %v3796, %v5046
    %v5048 = vlaneseq
    %v5049 = vshrl.u32 %v5048, 7
    %v5050 = vsub.s32 %v4380, %v5049
    %v5051 = vrot.slane %v3799, %v5050
    %v5052 = vsel %vm4385, %v5051, %v5047
    %v5053 = vlaneseq
    %v5054 = vshrl.u32 %v5053, 7
    %v5055 = vsub.s32 %v4375, %v5054
    %v5056 = vrot.slane %v3802, %v5055
    %v5057 = vlaneseq
    %v5058 = vshrl.u32 %v5057, 7
    %v5059 = vsub.s32 %v4380, %v5058
    %v5060 = vrot.slane %v3805, %v5059
    %v5061 = vsel %vm4385, %v5060, %v5056
    %v5062 = vlaneseq
    %v5063 = vshrl.u32 %v5062, 7
    %v5064 = vsub.s32 %v4375, %v5063
    %v5065 = vrot.slane %v3808, %v5064
    %v5066 = vlaneseq
    %v5067 = vshrl.u32 %v5066, 7
    %v5068 = vsub.s32 %v4380, %v5067
    %v5069 = vrot.slane %v3811, %v5068
    %v5070 = vsel %vm4385, %v5069, %v5065
    %v5071 = vlaneseq
    %v5072 = vshrl.u32 %v5071, 7
    %v5073 = vsub.s32 %v4375, %v5072
    %v5074 = vrot.slane %v3814, %v5073
    %v5075 = vlaneseq
    %v5076 = vshrl.u32 %v5075, 7
    %v5077 = vsub.s32 %v4380, %v5076
    %v5078 = vrot.slane %v3817, %v5077
    %v5079 = vsel %vm4385, %v5078, %v5074
    %v5080 = vlaneseq
    %v5081 = vshrl.u32 %v5080, 7
    %v5082 = vsub.s32 %v4375, %v5081
    %v5083 = vrot.slane %v3820, %v5082
    %v5084 = vlaneseq
    %v5085 = vshrl.u32 %v5084, 7
    %v5086 = vsub.s32 %v4380, %v5085
    %v5087 = vrot.slane %v3823, %v5086
    %v5088 = vsel %vm4385, %v5087, %v5083
    %v5089 = vlaneseq
    %v5090 = vshrl.u32 %v5089, 7
    %v5091 = vsub.s32 %v4375, %v5090
    %v5092 = vrot.slane %v3826, %v5091
    %v5093 = vlaneseq
    %v5094 = vshrl.u32 %v5093, 7
    %v5095 = vsub.s32 %v4380, %v5094
    %v5096 = vrot.slane %v3829, %v5095
    %v5097 = vsel %vm4385, %v5096, %v5092
    %v5098 = vlaneseq
    %v5099 = vshrl.u32 %v5098, 7
    %v5100 = vsub.s32 %v4375, %v5099
    %v5101 = vrot.slane %v3832, %v5100
    %v5102 = vlaneseq
    %v5103 = vshrl.u32 %v5102, 7
    %v5104 = vsub.s32 %v4380, %v5103
    %v5105 = vrot.slane %v3835, %v5104
    %v5106 = vsel %vm4385, %v5105, %v5101
    %v5107 = vlaneseq
    %v5108 = vshrl.u32 %v5107, 7
    %v5109 = vsub.s32 %v4375, %v5108
    %v5110 = vrot.slane %v3838, %v5109
    %v5111 = vlaneseq
    %v5112 = vshrl.u32 %v5111, 7
    %v5113 = vsub.s32 %v4380, %v5112
    %v5114 = vrot.slane %v3841, %v5113
    %v5115 = vsel %vm4385, %v5114, %v5110
    %v5116 = vlaneseq
    %v5117 = vshrl.u32 %v5116, 7
    %v5118 = vsub.s32 %v4375, %v5117
    %v5119 = vrot.slane %v3844, %v5118
    %v5120 = vlaneseq
    %v5121 = vshrl.u32 %v5120, 7
    %v5122 = vsub.s32 %v4380, %v5121
    %v5123 = vrot.slane %v3847, %v5122
    %v5124 = vsel %vm4385, %v5123, %v5119
    %v5125 = vlaneseq
    %v5126 = vshrl.u32 %v5125, 7
    %v5127 = vsub.s32 %v4375, %v5126
    %v5128 = vrot.slane %v3850, %v5127
    %v5129 = vlaneseq
    %v5130 = vshrl.u32 %v5129, 7
    %v5131 = vsub.s32 %v4380, %v5130
    %v5132 = vrot.slane %v3853, %v5131
    %v5133 = vsel %vm4385, %v5132, %v5128
    %v5134 = vlaneseq
    %v5135 = vshrl.u32 %v5134, 7
    %v5136 = vsub.s32 %v4375, %v5135
    %v5137 = vrot.slane %v3856, %v5136
    %v5138 = vlaneseq
    %v5139 = vshrl.u32 %v5138, 7
    %v5140 = vsub.s32 %v4380, %v5139
    %v5141 = vrot.slane %v3859, %v5140
    %v5142 = vsel %vm4385, %v5141, %v5137
    %v5143 = vlaneseq
    %v5144 = vshrl.u32 %v5143, 7
    %v5145 = vsub.s32 %v4375, %v5144
    %v5146 = vrot.slane %v3862, %v5145
    %v5147 = vlaneseq
    %v5148 = vshrl.u32 %v5147, 7
    %v5149 = vsub.s32 %v4380, %v5148
    %v5150 = vrot.slane %v3865, %v5149
    %v5151 = vsel %vm4385, %v5150, %v5146
    %v5152 = vlaneseq
    %v5153 = vshrl.u32 %v5152, 7
    %v5154 = vsub.s32 %v4375, %v5153
    %v5155 = vrot.slane %v3868, %v5154
    %v5156 = vlaneseq
    %v5157 = vshrl.u32 %v5156, 7
    %v5158 = vsub.s32 %v4380, %v5157
    %v5159 = vrot.slane %v3871, %v5158
    %v5160 = vsel %vm4385, %v5159, %v5155
    %v5161 = vlaneseq
    %v5162 = vshrl.u32 %v5161, 7
    %v5163 = vsub.s32 %v4375, %v5162
    %v5164 = vrot.slane %v3874, %v5163
    %v5165 = vlaneseq
    %v5166 = vshrl.u32 %v5165, 7
    %v5167 = vsub.s32 %v4380, %v5166
    %v5168 = vrot.slane %v3877, %v5167
    %v5169 = vsel %vm4385, %v5168, %v5164
    %v5170 = vlaneseq
    %v5171 = vshrl.u32 %v5170, 7
    %v5172 = vsub.s32 %v4375, %v5171
    %v5173 = vrot.slane %v3880, %v5172
    %v5174 = vlaneseq
    %v5175 = vshrl.u32 %v5174, 7
    %v5176 = vsub.s32 %v4380, %v5175
    %v5177 = vrot.slane %v3883, %v5176
    %v5178 = vsel %vm4385, %v5177, %v5173
    %v5179 = vlaneseq
    %v5180 = vshrl.u32 %v5179, 7
    %v5181 = vsub.s32 %v4375, %v5180
    %v5182 = vrot.slane %v3886, %v5181
    %v5183 = vlaneseq
    %v5184 = vshrl.u32 %v5183, 7
    %v5185 = vsub.s32 %v4380, %v5184
    %v5186 = vrot.slane %v3889, %v5185
    %v5187 = vsel %vm4385, %v5186, %v5182
    %v5188 = vlaneseq
    %v5189 = vshrl.u32 %v5188, 7
    %v5190 = vsub.s32 %v4375, %v5189
    %v5191 = vrot.slane %v3892, %v5190
    %v5192 = vlaneseq
    %v5193 = vshrl.u32 %v5192, 7
    %v5194 = vsub.s32 %v4380, %v5193
    %v5195 = vrot.slane %v3895, %v5194
    %v5196 = vsel %vm4385, %v5195, %v5191
    %v5197 = vlaneseq
    %v5198 = vshrl.u32 %v5197, 7
    %v5199 = vsub.s32 %v4375, %v5198
    %v5200 = vrot.slane %v3898, %v5199
    %v5201 = vlaneseq
    %v5202 = vshrl.u32 %v5201, 7
    %v5203 = vsub.s32 %v4380, %v5202
    %v5204 = vrot.slane %v3901, %v5203
    %v5205 = vsel %vm4385, %v5204, %v5200
    %v5206 = vlaneseq
    %v5207 = vshrl.u32 %v5206, 7
    %v5208 = vsub.s32 %v4375, %v5207
    %v5209 = vrot.slane %v3904, %v5208
    %v5210 = vlaneseq
    %v5211 = vshrl.u32 %v5210, 7
    %v5212 = vsub.s32 %v4380, %v5211
    %v5213 = vrot.slane %v3907, %v5212
    %v5214 = vsel %vm4385, %v5213, %v5209
    %v5215 = vlaneseq
    %v5216 = vshrl.u32 %v5215, 7
    %v5217 = vsub.s32 %v4375, %v5216
    %v5218 = vrot.slane %v3910, %v5217
    %v5219 = vlaneseq
    %v5220 = vshrl.u32 %v5219, 7
    %v5221 = vsub.s32 %v4380, %v5220
    %v5222 = vrot.slane %v3913, %v5221
    %v5223 = vsel %vm4385, %v5222, %v5218
    %v5224 = vlaneseq
    %v5225 = vshrl.u32 %v5224, 7
    %v5226 = vsub.s32 %v4375, %v5225
    %v5227 = vrot.slane %v3916, %v5226
    %v5228 = vlaneseq
    %v5229 = vshrl.u32 %v5228, 7
    %v5230 = vsub.s32 %v4380, %v5229
    %v5231 = vrot.slane %v3919, %v5230
    %v5232 = vsel %vm4385, %v5231, %v5227
    %v5233 = vlaneseq
    %v5234 = vshrl.u32 %v5233, 7
    %v5235 = vsub.s32 %v4375, %v5234
    %v5236 = vrot.slane %v3922, %v5235
    %v5237 = vlaneseq
    %v5238 = vshrl.u32 %v5237, 7
    %v5239 = vsub.s32 %v4380, %v5238
    %v5240 = vrot.slane %v3925, %v5239
    %v5241 = vsel %vm4385, %v5240, %v5236
    %v5242 = vlaneseq
    %v5243 = vshrl.u32 %v5242, 7
    %v5244 = vsub.s32 %v4375, %v5243
    %v5245 = vrot.slane %v3928, %v5244
    %v5246 = vlaneseq
    %v5247 = vshrl.u32 %v5246, 7
    %v5248 = vsub.s32 %v4380, %v5247
    %v5249 = vrot.slane %v3931, %v5248
    %v5250 = vsel %vm4385, %v5249, %v5245
    %v5251 = vlaneseq
    %v5252 = vshrl.u32 %v5251, 7
    %v5253 = vsub.s32 %v4375, %v5252
    %v5254 = vrot.slane %v3934, %v5253
    %v5255 = vlaneseq
    %v5256 = vshrl.u32 %v5255, 7
    %v5257 = vsub.s32 %v4380, %v5256
    %v5258 = vrot.slane %v3937, %v5257
    %v5259 = vsel %vm4385, %v5258, %v5254
    %v5260 = vlaneseq
    %v5261 = vshrl.u32 %v5260, 7
    %v5262 = vsub.s32 %v4375, %v5261
    %v5263 = vrot.slane %v3940, %v5262
    %v5264 = vlaneseq
    %v5265 = vshrl.u32 %v5264, 7
    %v5266 = vsub.s32 %v4380, %v5265
    %v5267 = vrot.slane %v3943, %v5266
    %v5268 = vsel %vm4385, %v5267, %v5263
    %v5269 = vlaneseq
    %v5270 = vshrl.u32 %v5269, 7
    %v5271 = vsub.s32 %v4375, %v5270
    %v5272 = vrot.slane %v3946, %v5271
    %v5273 = vlaneseq
    %v5274 = vshrl.u32 %v5273, 7
    %v5275 = vsub.s32 %v4380, %v5274
    %v5276 = vrot.slane %v3949, %v5275
    %v5277 = vsel %vm4385, %v5276, %v5272
    %v5278 = vlaneseq
    %v5279 = vshrl.u32 %v5278, 7
    %v5280 = vsub.s32 %v4375, %v5279
    %v5281 = vrot.slane %v3952, %v5280
    %v5282 = vlaneseq
    %v5283 = vshrl.u32 %v5282, 7
    %v5284 = vsub.s32 %v4380, %v5283
    %v5285 = vrot.slane %v3955, %v5284
    %v5286 = vsel %vm4385, %v5285, %v5281
    %v5287 = vlaneseq
    %v5288 = vshrl.u32 %v5287, 7
    %v5289 = vsub.s32 %v4375, %v5288
    %v5290 = vrot.slane %v3958, %v5289
    %v5291 = vlaneseq
    %v5292 = vshrl.u32 %v5291, 7
    %v5293 = vsub.s32 %v4380, %v5292
    %v5294 = vrot.slane %v3961, %v5293
    %v5295 = vsel %vm4385, %v5294, %v5290
    %v5296 = vlaneseq
    %v5297 = vshrl.u32 %v5296, 7
    %v5298 = vsub.s32 %v4375, %v5297
    %v5299 = vrot.slane %v3964, %v5298
    %v5300 = vlaneseq
    %v5301 = vshrl.u32 %v5300, 7
    %v5302 = vsub.s32 %v4380, %v5301
    %v5303 = vrot.slane %v3967, %v5302
    %v5304 = vsel %vm4385, %v5303, %v5299
    %v5305 = vlaneseq
    %v5306 = vshrl.u32 %v5305, 7
    %v5307 = vsub.s32 %v4375, %v5306
    %v5308 = vrot.slane %v3970, %v5307
    %v5309 = vlaneseq
    %v5310 = vshrl.u32 %v5309, 7
    %v5311 = vsub.s32 %v4380, %v5310
    %v5312 = vrot.slane %v3973, %v5311
    %v5313 = vsel %vm4385, %v5312, %v5308
    %v5314 = vlaneseq
    %v5315 = vshrl.u32 %v5314, 7
    %v5316 = vsub.s32 %v4375, %v5315
    %v5317 = vrot.slane %v3976, %v5316
    %v5318 = vlaneseq
    %v5319 = vshrl.u32 %v5318, 7
    %v5320 = vsub.s32 %v4380, %v5319
    %v5321 = vrot.slane %v3979, %v5320
    %v5322 = vsel %vm4385, %v5321, %v5317
    %v5323 = vlaneseq
    %v5324 = vshrl.u32 %v5323, 7
    %v5325 = vsub.s32 %v4375, %v5324
    %v5326 = vrot.slane %v3982, %v5325
    %v5327 = vlaneseq
    %v5328 = vshrl.u32 %v5327, 7
    %v5329 = vsub.s32 %v4380, %v5328
    %v5330 = vrot.slane %v3985, %v5329
    %v5331 = vsel %vm4385, %v5330, %v5326
    %v5332 = vlaneseq
    %v5333 = vshrl.u32 %v5332, 7
    %v5334 = vsub.s32 %v4375, %v5333
    %v5335 = vrot.slane %v3988, %v5334
    %v5336 = vlaneseq
    %v5337 = vshrl.u32 %v5336, 7
    %v5338 = vsub.s32 %v4380, %v5337
    %v5339 = vrot.slane %v3991, %v5338
    %v5340 = vsel %vm4385, %v5339, %v5335
    %v5341 = vlaneseq
    %v5342 = vshrl.u32 %v5341, 7
    %v5343 = vsub.s32 %v4375, %v5342
    %v5344 = vrot.slane %v3994, %v5343
    %v5345 = vlaneseq
    %v5346 = vshrl.u32 %v5345, 7
    %v5347 = vsub.s32 %v4380, %v5346
    %v5348 = vrot.slane %v3997, %v5347
    %v5349 = vsel %vm4385, %v5348, %v5344
    %v5350 = vlaneseq
    %v5351 = vshrl.u32 %v5350, 7
    %v5352 = vsub.s32 %v4375, %v5351
    %v5353 = vrot.slane %v4000, %v5352
    %v5354 = vlaneseq
    %v5355 = vshrl.u32 %v5354, 7
    %v5356 = vsub.s32 %v4380, %v5355
    %v5357 = vrot.slane %v4003, %v5356
    %v5358 = vsel %vm4385, %v5357, %v5353
    %v5359 = vlaneseq
    %v5360 = vshrl.u32 %v5359, 7
    %v5361 = vsub.s32 %v4375, %v5360
    %v5362 = vrot.slane %v4006, %v5361
    %v5363 = vlaneseq
    %v5364 = vshrl.u32 %v5363, 7
    %v5365 = vsub.s32 %v4380, %v5364
    %v5366 = vrot.slane %v4009, %v5365
    %v5367 = vsel %vm4385, %v5366, %v5362
    %v5368 = vlaneseq
    %v5369 = vshrl.u32 %v5368, 7
    %v5370 = vsub.s32 %v4375, %v5369
    %v5371 = vrot.slane %v4012, %v5370
    %v5372 = vlaneseq
    %v5373 = vshrl.u32 %v5372, 7
    %v5374 = vsub.s32 %v4380, %v5373
    %v5375 = vrot.slane %v4015, %v5374
    %v5376 = vsel %vm4385, %v5375, %v5371
    %v5377 = vlaneseq
    %v5378 = vshrl.u32 %v5377, 7
    %v5379 = vsub.s32 %v4375, %v5378
    %v5380 = vrot.slane %v4018, %v5379
    %v5381 = vlaneseq
    %v5382 = vshrl.u32 %v5381, 7
    %v5383 = vsub.s32 %v4380, %v5382
    %v5384 = vrot.slane %v4021, %v5383
    %v5385 = vsel %vm4385, %v5384, %v5380
    %v5386 = vlaneseq
    %v5387 = vshrl.u32 %v5386, 7
    %v5388 = vsub.s32 %v4375, %v5387
    %v5389 = vrot.slane %v4024, %v5388
    %v5390 = vlaneseq
    %v5391 = vshrl.u32 %v5390, 7
    %v5392 = vsub.s32 %v4380, %v5391
    %v5393 = vrot.slane %v4027, %v5392
    %v5394 = vsel %vm4385, %v5393, %v5389
    %v5395 = vlaneseq
    %v5396 = vshrl.u32 %v5395, 7
    %v5397 = vsub.s32 %v4375, %v5396
    %v5398 = vrot.slane %v4030, %v5397
    %v5399 = vlaneseq
    %v5400 = vshrl.u32 %v5399, 7
    %v5401 = vsub.s32 %v4380, %v5400
    %v5402 = vrot.slane %v4033, %v5401
    %v5403 = vsel %vm4385, %v5402, %v5398
    %v5404 = vlaneseq
    %v5405 = vshrl.u32 %v5404, 7
    %v5406 = vsub.s32 %v4375, %v5405
    %v5407 = vrot.slane %v4036, %v5406
    %v5408 = vlaneseq
    %v5409 = vshrl.u32 %v5408, 7
    %v5410 = vsub.s32 %v4380, %v5409
    %v5411 = vrot.slane %v4039, %v5410
    %v5412 = vsel %vm4385, %v5411, %v5407
    %v5413 = vlaneseq
    %v5414 = vshrl.u32 %v5413, 7
    %v5415 = vsub.s32 %v4375, %v5414
    %v5416 = vrot.slane %v4042, %v5415
    %v5417 = vlaneseq
    %v5418 = vshrl.u32 %v5417, 7
    %v5419 = vsub.s32 %v4380, %v5418
    %v5420 = vrot.slane %v4045, %v5419
    %v5421 = vsel %vm4385, %v5420, %v5416
    %v5422 = vlaneseq
    %v5423 = vshrl.u32 %v5422, 7
    %v5424 = vsub.s32 %v4375, %v5423
    %v5425 = vrot.slane %v4048, %v5424
    %v5426 = vlaneseq
    %v5427 = vshrl.u32 %v5426, 7
    %v5428 = vsub.s32 %v4380, %v5427
    %v5429 = vrot.slane %v4051, %v5428
    %v5430 = vsel %vm4385, %v5429, %v5425
    %v5431 = vlaneseq
    %v5432 = vshrl.u32 %v5431, 7
    %v5433 = vsub.s32 %v4375, %v5432
    %v5434 = vrot.slane %v4054, %v5433
    %v5435 = vlaneseq
    %v5436 = vshrl.u32 %v5435, 7
    %v5437 = vsub.s32 %v4380, %v5436
    %v5438 = vrot.slane %v4057, %v5437
    %v5439 = vsel %vm4385, %v5438, %v5434
    %v5440 = vlaneseq
    %v5441 = vshrl.u32 %v5440, 7
    %v5442 = vsub.s32 %v4375, %v5441
    %v5443 = vrot.slane %v4060, %v5442
    %v5444 = vlaneseq
    %v5445 = vshrl.u32 %v5444, 7
    %v5446 = vsub.s32 %v4380, %v5445
    %v5447 = vrot.slane %v4063, %v5446
    %v5448 = vsel %vm4385, %v5447, %v5443
    %v5449 = vlaneseq
    %v5450 = vshrl.u32 %v5449, 7
    %v5451 = vsub.s32 %v4375, %v5450
    %v5452 = vrot.slane %v4066, %v5451
    %v5453 = vlaneseq
    %v5454 = vshrl.u32 %v5453, 7
    %v5455 = vsub.s32 %v4380, %v5454
    %v5456 = vrot.slane %v4069, %v5455
    %v5457 = vsel %vm4385, %v5456, %v5452
    %v5458 = vlaneseq
    %v5459 = vshrl.u32 %v5458, 7
    %v5460 = vsub.s32 %v4375, %v5459
    %v5461 = vrot.slane %v4072, %v5460
    %v5462 = vlaneseq
    %v5463 = vshrl.u32 %v5462, 7
    %v5464 = vsub.s32 %v4380, %v5463
    %v5465 = vrot.slane %v4075, %v5464
    %v5466 = vsel %vm4385, %v5465, %v5461
    %v5467 = vlaneseq
    %v5468 = vshrl.u32 %v5467, 7
    %v5469 = vsub.s32 %v4375, %v5468
    %v5470 = vrot.slane %v4078, %v5469
    %v5471 = vlaneseq
    %v5472 = vshrl.u32 %v5471, 7
    %v5473 = vsub.s32 %v4380, %v5472
    %v5474 = vrot.slane %v4081, %v5473
    %v5475 = vsel %vm4385, %v5474, %v5470
    %v5476 = vlaneseq
    %v5477 = vshrl.u32 %v5476, 7
    %v5478 = vsub.s32 %v4375, %v5477
    %v5479 = vrot.slane %v4084, %v5478
    %v5480 = vlaneseq
    %v5481 = vshrl.u32 %v5480, 7
    %v5482 = vsub.s32 %v4380, %v5481
    %v5483 = vrot.slane %v4087, %v5482
    %v5484 = vsel %vm4385, %v5483, %v5479
    %v5485 = vlaneseq
    %v5486 = vshrl.u32 %v5485, 7
    %v5487 = vsub.s32 %v4375, %v5486
    %v5488 = vrot.slane %v4090, %v5487
    %v5489 = vlaneseq
    %v5490 = vshrl.u32 %v5489, 7
    %v5491 = vsub.s32 %v4380, %v5490
    %v5492 = vrot.slane %v4093, %v5491
    %v5493 = vsel %vm4385, %v5492, %v5488
    %v5494 = vlaneseq
    %v5495 = vshrl.u32 %v5494, 7
    %v5496 = vsub.s32 %v4375, %v5495
    %v5497 = vrot.slane %v4096, %v5496
    %v5498 = vlaneseq
    %v5499 = vshrl.u32 %v5498, 7
    %v5500 = vsub.s32 %v4380, %v5499
    %v5501 = vrot.slane %v4099, %v5500
    %v5502 = vsel %vm4385, %v5501, %v5497
    %v5503 = vlaneseq
    %v5504 = vshrl.u32 %v5503, 7
    %v5505 = vsub.s32 %v4375, %v5504
    %v5506 = vrot.slane %v4102, %v5505
    %v5507 = vlaneseq
    %v5508 = vshrl.u32 %v5507, 7
    %v5509 = vsub.s32 %v4380, %v5508
    %v5510 = vrot.slane %v4105, %v5509
    %v5511 = vsel %vm4385, %v5510, %v5506
    %v5512 = vlaneseq
    %v5513 = vshrl.u32 %v5512, 7
    %v5514 = vsub.s32 %v4375, %v5513
    %v5515 = vrot.slane %v4108, %v5514
    %v5516 = vlaneseq
    %v5517 = vshrl.u32 %v5516, 7
    %v5518 = vsub.s32 %v4380, %v5517
    %v5519 = vrot.slane %v4111, %v5518
    %v5520 = vsel %vm4385, %v5519, %v5515
    %v5521 = vlaneseq
    %v5522 = vshrl.u32 %v5521, 7
    %v5523 = vsub.s32 %v4375, %v5522
    %v5524 = vrot.slane %v4114, %v5523
    %v5525 = vlaneseq
    %v5526 = vshrl.u32 %v5525, 7
    %v5527 = vsub.s32 %v4380, %v5526
    %v5528 = vrot.slane %v4117, %v5527
    %v5529 = vsel %vm4385, %v5528, %v5524
    %vm5530 = vcmask 1041409
    %v5531 = vsel %vm5530, %v4395, %v4386
    %vm5532 = vcmask 1042434
    %v5533 = vsel %vm5532, %v4404, %v5531
    %vm5534 = vcmask 1043459
    %v5535 = vsel %vm5534, %v4413, %v5533
    %vm5536 = vcmask 1044484
    %v5537 = vsel %vm5536, %v4422, %v5535
    %vm5538 = vcmask 1045509
    %v5539 = vsel %vm5538, %v4431, %v5537
    %vm5540 = vcmask 1046534
    %v5541 = vsel %vm5540, %v4440, %v5539
    %vm5542 = vcmask 1047559
    %v5543 = vsel %vm5542, %v4449, %v5541
    %v5544 = vsel %vm5530, %v4467, %v4458
    %v5545 = vsel %vm5532, %v4476, %v5544
    %v5546 = vsel %vm5534, %v4485, %v5545
    %v5547 = vsel %vm5536, %v4494, %v5546
    %v5548 = vsel %vm5538, %v4503, %v5547
    %v5549 = vsel %vm5540, %v4512, %v5548
    %v5550 = vsel %vm5542, %v4521, %v5549
    %v5551 = vsel %vm5530, %v4539, %v4530
    %v5552 = vsel %vm5532, %v4548, %v5551
    %v5553 = vsel %vm5534, %v4557, %v5552
    %v5554 = vsel %vm5536, %v4566, %v5553
    %v5555 = vsel %vm5538, %v4575, %v5554
    %v5556 = vsel %vm5540, %v4584, %v5555
    %v5557 = vsel %vm5542, %v4593, %v5556
    %v5558 = vsel %vm5530, %v4611, %v4602
    %v5559 = vsel %vm5532, %v4620, %v5558
    %v5560 = vsel %vm5534, %v4629, %v5559
    %v5561 = vsel %vm5536, %v4638, %v5560
    %v5562 = vsel %vm5538, %v4647, %v5561
    %v5563 = vsel %vm5540, %v4656, %v5562
    %v5564 = vsel %vm5542, %v4665, %v5563
    %v5565 = vsel %vm5530, %v4683, %v4674
    %v5566 = vsel %vm5532, %v4692, %v5565
    %v5567 = vsel %vm5534, %v4701, %v5566
    %v5568 = vsel %vm5536, %v4710, %v5567
    %v5569 = vsel %vm5538, %v4719, %v5568
    %v5570 = vsel %vm5540, %v4728, %v5569
    %v5571 = vsel %vm5542, %v4737, %v5570
    %v5572 = vsel %vm5530, %v4755, %v4746
    %v5573 = vsel %vm5532, %v4764, %v5572
    %v5574 = vsel %vm5534, %v4773, %v5573
    %v5575 = vsel %vm5536, %v4782, %v5574
    %v5576 = vsel %vm5538, %v4791, %v5575
    %v5577 = vsel %vm5540, %v4800, %v5576
    %v5578 = vsel %vm5542, %v4809, %v5577
    %v5579 = vsel %vm5530, %v4827, %v4818
    %v5580 = vsel %vm5532, %v4836, %v5579
    %v5581 = vsel %vm5534, %v4845, %v5580
    %v5582 = vsel %vm5536, %v4854, %v5581
    %v5583 = vsel %vm5538, %v4863, %v5582
    %v5584 = vsel %vm5540, %v4872, %v5583
    %v5585 = vsel %vm5542, %v4881, %v5584
    %v5586 = vsel %vm5530, %v4899, %v4890
    %v5587 = vsel %vm5532, %v4908, %v5586
    %v5588 = vsel %vm5534, %v4917, %v5587
    %v5589 = vsel %vm5536, %v4926, %v5588
    %v5590 = vsel %vm5538, %v4935, %v5589
    %v5591 = vsel %vm5540, %v4944, %v5590
    %v5592 = vsel %vm5542, %v4953, %v5591
    %v5593 = vsel %vm5530, %v4971, %v4962
    %v5594 = vsel %vm5532, %v4980, %v5593
    %v5595 = vsel %vm5534, %v4989, %v5594
    %v5596 = vsel %vm5536, %v4998, %v5595
    %v5597 = vsel %vm5538, %v5007, %v5596
    %v5598 = vsel %vm5540, %v5016, %v5597
    %v5599 = vsel %vm5542, %v5025, %v5598
    %v5600 = vsel %vm5530, %v5043, %v5034
    %v5601 = vsel %vm5532, %v5052, %v5600
    %v5602 = vsel %vm5534, %v5061, %v5601
    %v5603 = vsel %vm5536, %v5070, %v5602
    %v5604 = vsel %vm5538, %v5079, %v5603
    %v5605 = vsel %vm5540, %v5088, %v5604
    %v5606 = vsel %vm5542, %v5097, %v5605
    %v5607 = vsel %vm5530, %v5115, %v5106
    %v5608 = vsel %vm5532, %v5124, %v5607
    %v5609 = vsel %vm5534, %v5133, %v5608
    %v5610 = vsel %vm5536, %v5142, %v5609
    %v5611 = vsel %vm5538, %v5151, %v5610
    %v5612 = vsel %vm5540, %v5160, %v5611
    %v5613 = vsel %vm5542, %v5169, %v5612
    %v5614 = vsel %vm5530, %v5187, %v5178
    %v5615 = vsel %vm5532, %v5196, %v5614
    %v5616 = vsel %vm5534, %v5205, %v5615
    %v5617 = vsel %vm5536, %v5214, %v5616
    %v5618 = vsel %vm5538, %v5223, %v5617
    %v5619 = vsel %vm5540, %v5232, %v5618
    %v5620 = vsel %vm5542, %v5241, %v5619
    %v5621 = vsel %vm5530, %v5259, %v5250
    %v5622 = vsel %vm5532, %v5268, %v5621
    %v5623 = vsel %vm5534, %v5277, %v5622
    %v5624 = vsel %vm5536, %v5286, %v5623
    %v5625 = vsel %vm5538, %v5295, %v5624
    %v5626 = vsel %vm5540, %v5304, %v5625
    %v5627 = vsel %vm5542, %v5313, %v5626
    %v5628 = vsel %vm5530, %v5331, %v5322
    %v5629 = vsel %vm5532, %v5340, %v5628
    %v5630 = vsel %vm5534, %v5349, %v5629
    %v5631 = vsel %vm5536, %v5358, %v5630
    %v5632 = vsel %vm5538, %v5367, %v5631
    %v5633 = vsel %vm5540, %v5376, %v5632
    %v5634 = vsel %vm5542, %v5385, %v5633
    %v5635 = vsel %vm5530, %v5403, %v5394
    %v5636 = vsel %vm5532, %v5412, %v5635
    %v5637 = vsel %vm5534, %v5421, %v5636
    %v5638 = vsel %vm5536, %v5430, %v5637
    %v5639 = vsel %vm5538, %v5439, %v5638
    %v5640 = vsel %vm5540, %v5448, %v5639
    %v5641 = vsel %vm5542, %v5457, %v5640
    %v5642 = vsel %vm5530, %v5475, %v5466
    %v5643 = vsel %vm5532, %v5484, %v5642
    %v5644 = vsel %vm5534, %v5493, %v5643
    %v5645 = vsel %vm5536, %v5502, %v5644
    %v5646 = vsel %vm5538, %v5511, %v5645
    %v5647 = vsel %vm5540, %v5520, %v5646
    %v5648 = vsel %vm5542, %v5529, %v5647
    %5665 = vxpose.xlu0.b32.start [1/16] %v5543, 128
    %5666 = vxpose.xlu0.b32.cont [2/16] %v5550, 128
    %5667 = vxpose.xlu0.b32.cont [3/16] %v5557, 128
    %5668 = vxpose.xlu0.b32.cont [4/16] %v5564, 128
    %5669 = vxpose.xlu0.b32.cont [5/16] %v5571, 128
    %5670 = vxpose.xlu0.b32.cont [6/16] %v5578, 128
    %5671 = vxpose.xlu0.b32.cont [7/16] %v5585, 128
    %5672 = vxpose.xlu0.b32.cont [8/16] %v5592, 128
    %5673 = vxpose.xlu0.b32.cont [9/16] %v5599, 128
    %5674 = vxpose.xlu0.b32.cont [10/16] %v5606, 128
    %5675 = vxpose.xlu0.b32.cont [11/16] %v5613, 128
    %5676 = vxpose.xlu0.b32.cont [12/16] %v5620, 128
    %5677 = vxpose.xlu0.b32.cont [13/16] %v5627, 128
    %5678 = vxpose.xlu0.b32.cont [14/16] %v5634, 128
    %5679 = vxpose.xlu0.b32.cont [15/16] %v5641, 128
    %5680 = vxpose.xlu0.b32.end [16/16] %v5648, 128
    %v5681 = vpop.trf.xlu0
    %v5682 = vpop.trf.xlu0
    %v5683 = vpop.trf.xlu0
    %v5684 = vpop.trf.xlu0
    %v5685 = vpop.trf.xlu0
    %v5686 = vpop.trf.xlu0
    %v5687 = vpop.trf.xlu0
    %v5688 = vpop.trf.xlu0
    %v5689 = vpop.trf.xlu0
    %v5690 = vpop.trf.xlu0
    %v5691 = vpop.trf.xlu0
    %v5692 = vpop.trf.xlu0
    %v5693 = vpop.trf.xlu0
    %v5694 = vpop.trf.xlu0
    %v5695 = vpop.trf.xlu0
    %v5696 = vpop.trf.xlu0
    %v5697 = vld [vmem:[#allocation7] sm:$0xff]
    %v5698 = vld [vmem:[#allocation7 + $0x8] sm:$0xff]
    %vm5699 = vcmp.eq.s32.totalorder %v5697, 0
    %vm5700 = vcmp.eq.s32.totalorder %v5698, 0
    %v5701 = vsel %vm5699, -1e+10, %v5681
    %v5702 = vsel %vm5700, -1e+10, %v5682
    %5703 = vmax.xlane.f32.xlu0 %v5701
    %v5704 = vpop.xlane.xlu0 %5703
    %5705 = vmax.xlane.f32.xlu0 %v5702
    %v5706 = vpop.xlane.xlu0 %5705
    %v5707 = vsub.f32 %v5701, %v5704
    %v5708 = vsub.f32 %v5702, %v5706
    %v5709 = vmul.f32 %v5707, 1.442695
    %v5710 = vpow.pop %v5709
    %v5711 = vmul.f32 %v5708, 1.442695
    %v5712 = vpow.pop %v5711
    %5713 = vadd.xlane.f32.xlu0 %v5710
    %v5714 = vpop.xlane.xlu0 %5713
    %5715 = vadd.xlane.f32.xlu0 %v5712
    %v5716 = vpop.xlane.xlu0 %5715
    %v5717 = vrcp.pop %v5714
    %v5718 = vrcp.pop %v5716
    %v5719 = vmul.f32 %v5710, %v5717
    %v5720 = vmul.f32 %v5712, %v5718
    %5721 = vst [vmem:[#allocation14] sm:$0xff] %v5719
    %5722 = vst [vmem:[#allocation14 + $0x8] sm:$0xff] %v5720
    // Predicated region
    $region58: #{tpu_custom_call.1} parent=1 // pred_check
      _
    $region59: #{tpu_custom_call.1} parent=1 // pred_check_branch
      %5724 = sbr.rel (0) target = $region61
    $region60: #{tpu_custom_call.1} parent=1 // pred_region
      %s5726 = ssub.s32 256, 256
      %5727 = vsyncadd [#allocation4], %s5726
      %s5728 = sshll.u32 [#allocation14], 4
      %s5729 = int_to_ptr.vmem [resolvable:$true] %s5728
      %5734 = dma.vmem_to_hbm [thread:$0]  %s5729, 256, %s7, [#allocation4], 128, 128, 8
    $region61: #{tpu_custom_call.1} parent=1 // pred_fallthru
      _
    // Predicated region
    $region62: #{tpu_custom_call.1} parent=1 // pred_check
      _
    $region63: #{tpu_custom_call.1} parent=1 // pred_check_branch
      %5736 = sbr.rel (0) target = $region65
    $region64: #{tpu_custom_call.1} parent=1 // pred_region
      %5737 = dma.done [#allocation4], 256
    $region65: #{tpu_custom_call.1} parent=1 // pred_fallthru
      _
    %5738 = vsyncpa [#allocation3], 1
    %5739 = vsyncpa [#allocation6], 1
    %5740 = vsyncpa [#allocation9], 1
    %5741 = vsyncpa [#allocation12], 1
    %5742 = vsyncpa [#allocation4], 1

</llo_original>
